<compile_context>
chip_gen: v7x
topology: tpu7x:2x2x1
jax: 0.10.0
libtpu: 0.0.40
codegen_flags: <defaults>
</compile_context>

<pallas_src>
import functools

import jax
import jax.numpy as jnp
import numpy as np
from jax import lax
from jax.experimental import pallas as pl
from jax.experimental.pallas import tpu as pltpu


def _round_up(x, m):
    return ((x + m - 1) // m) * m


def _make_decoder_kernel(T, Bp, Hp, Op, L):
    Gp = 3 * Hp

    def kernel(*refs):
        # inputs: x_flat, h0, then per-layer (wih_pad, whh_pad, b_comb, b_hn), then wo, bo
        x_ref, h0_ref = refs[0], refs[1]
        idx = 2
        layer_refs = []
        for _ in range(L):
            layer_refs.append(refs[idx:idx + 4])
            idx += 4
        wo_ref, bo_ref = refs[idx], refs[idx + 1]
        out_ref = refs[idx + 2]
        seq_ref, gix_ref = refs[idx + 3], refs[idx + 4]

        for l in range(L):
            wih_ref, whh_ref, bic_ref, bhn_ref = layer_refs[l]
            is_last = (l == L - 1)

            # Input projection for the whole sequence at once (time-independent),
            # with b_ih + (r,z part of b_hh) folded in once per layer.
            if l == 0:
                # x_flat is (T*Bp, 1); wih_pad is (1, Gp) -> broadcast multiply.
                gix_ref[...] = x_ref[...] * wih_ref[...] + bic_ref[...]
            else:
                # previous layer's hidden sequence (T*Bp, Hp) @ (Hp, Gp)
                gix_ref[...] = (
                    jnp.dot(seq_ref[...], wih_ref[...],
                            preferred_element_type=jnp.float32)
                    + bic_ref[...])

            # Broadcasts hoisted out of the unrolled time loop.
            bhn = jnp.broadcast_to(bhn_ref[...], (Bp, Hp))
            if is_last:
                bo_b = jnp.broadcast_to(bo_ref[...], (Bp, Op))
            h0 = h0_ref[l]                                  # (Bp, Hp)

            # Sequential GRU recurrence; h lives in vregs as the loop carry.
            def step(t, h, whh_ref=whh_ref, bhn=bhn, is_last=is_last):
                base = pl.multiple_of(t * Bp, Bp)           # 8-sublane aligned
                g = gix_ref[pl.ds(base, Bp), :]             # (Bp, Gp), biases folded
                # TODO(synk): stage w_hh in the MXU weight registers once per layer
                # (pltpu.matmul_push_rhs / matmul_acc_lhs / matmul_pop) instead of
                # re-pushing the RHS every timestep.
                gh = jnp.dot(h, whh_ref[...],
                             preferred_element_type=jnp.float32)   # (Bp, Gp)
                # gate slabs are 128-lane aligned -> free vreg selection
                r = jax.nn.sigmoid(g[:, 0:Hp] + gh[:, 0:Hp])
                z = jax.nn.sigmoid(g[:, Hp:2 * Hp] + gh[:, Hp:2 * Hp])
                n = jnp.tanh(g[:, 2 * Hp:3 * Hp] + r * (gh[:, 2 * Hp:3 * Hp] + bhn))
                h_new = (1.0 - z) * n + z * h
                if is_last:
                    # Fused lane-dense output head: one aligned (Bp, Op) store/step.
                    # Independent of the next step's recurrence -> overlaps on MXU.
                    out_ref[pl.ds(base, Bp), :] = (
                        jnp.dot(h_new, wo_ref[...],
                                preferred_element_type=jnp.float32) + bo_b)
                else:
                    seq_ref[pl.ds(base, Bp), :] = h_new     # single aligned store/step
                return h_new

            lax.fori_loop(0, T, step, h0, unroll=True)

    return kernel


@functools.partial(jax.jit, static_argnames=("hidden_size", "output_size", "num_layer"))
def decoder_rnn_forward(x, hn, params, *, hidden_size, output_size, num_layer):
    """Pallas implementation of Decoder_RNN.forward(x, hn) -> out.

    x:  (T, B, 1) float32
    hn: (L, B, H) float32
    returns out: (T, B, O) float32
    """
    T, B, _ = x.shape
    L, _, H = hn.shape
    assert H == hidden_size and L == num_layer
    O = output_size

    Bp = _round_up(B, 8)       # sublane padding
    Hp = _round_up(H, 128)     # lane padding per gate / hidden
    Op = _round_up(O, 128)     # lane-dense output
    Gp = 3 * Hp
    f32 = jnp.float32

    # ---- pad inputs: batch -> Bp sublanes, hidden -> Hp lanes (zeros) ----
    x_pad = jnp.zeros((T, Bp, 1), f32).at[:, :B, :].set(x.astype(f32))
    h0_pad = jnp.zeros((L, Bp, Hp), f32).at[:, :B, :H].set(hn.astype(f32))

    inputs = [x_pad.reshape(T * Bp, 1), h0_pad]

    # ---- pad weights: one 128-lane slab per gate, transposed to (K, N) ----
    for l in range(L):
        wih, whh, bih, bhh = params["layers"][l]
        in_l = 1 if l == 0 else H
        Kp = 1 if l == 0 else Hp
        wih_t = wih.T.astype(f32)       # (in_l, 3H)
        whh_t = whh.T.astype(f32)       # (H,   3H)
        bih = bih.astype(f32)
        bhh = bhh.astype(f32)

        wih_pad = jnp.zeros((Kp, Gp), f32)
        whh_pad = jnp.zeros((Hp, Gp), f32)
        for g in range(3):
            wih_pad = wih_pad.at[:in_l, g * Hp:g * Hp + H].set(
                wih_t[:, g * H:(g + 1) * H])
            whh_pad = whh_pad.at[:H, g * Hp:g * Hp + H].set(
                whh_t[:, g * H:(g + 1) * H])

        # combined input-side bias: b_ih (all gates) + b_hh (r, z gates only)
        bic_pad = jnp.zeros((1, Gp), f32)
        bic_pad = bic_pad.at[0, 0 * Hp:0 * Hp + H].set(bih[0:H] + bhh[0:H])
        bic_pad = bic_pad.at[0, 1 * Hp:1 * Hp + H].set(bih[H:2 * H] + bhh[H:2 * H])
        bic_pad = bic_pad.at[0, 2 * Hp:2 * Hp + H].set(bih[2 * H:3 * H])
        # n-gate recurrent bias stays on gh (PyTorch: n = tanh(gi_n + r*(gh_n + b_hn)))
        bhn_pad = jnp.zeros((1, Hp), f32).at[0, :H].set(bhh[2 * H:3 * H])

        inputs += [wih_pad, whh_pad, bic_pad, bhn_pad]

    wo_pad = jnp.zeros((Hp, Op), f32).at[:H, :O].set(params["wo"].T.astype(f32))
    bo_pad = jnp.zeros((1, Op), f32).at[0, :O].set(params["bo"].astype(f32))
    inputs += [wo_pad, bo_pad]

    kernel = _make_decoder_kernel(T, Bp, Hp, Op, L)

    flops = (2 * T * Bp * Gp                        # layer-0 input projection
             + (L - 1) * 2 * T * Bp * Hp * Gp       # layer>0 input projections
             + L * T * 2 * Bp * Hp * Gp             # recurrence
             + 2 * T * Bp * Hp * Op)                # fused linear head
    transcendentals = L * T * Bp * 3 * Hp
    bytes_accessed = 4 * (T * Bp * 1 + L * Bp * Hp + T * Bp * Op
                          + sum(int(np.prod(a.shape)) for a in inputs[2:]))

    vmem = pl.BlockSpec(memory_space=pltpu.MemorySpace.VMEM)
    # TODO(synk): for large T*B, tile the projections over a T grid axis
    # (and split batch across TensorCores on v7x) instead of the fully-resident layout.
    out_flat = pl.pallas_call(
        kernel,
        out_shape=jax.ShapeDtypeStruct((T * Bp, Op), f32),
        in_specs=[vmem] * len(inputs),
        out_specs=vmem,
        scratch_shapes=[
            pltpu.VMEM((T * Bp, Hp), f32),   # inter-layer hidden sequence (unused if L == 1)
            pltpu.VMEM((T * Bp, Gp), f32),   # per-layer input-projected gates (+folded bias)
        ],
        compiler_params=pltpu.CompilerParams(vmem_limit_bytes=32 * 1024 * 1024),
        cost_estimate=pl.CostEstimate(
            flops=flops, transcendentals=transcendentals,
            bytes_accessed=bytes_accessed),
    )(*inputs)

    return out_flat.reshape(T, Bp, Op)[:, :B, :O]


def init_params(key, hidden_size, output_size, num_layer):
    """Deterministic init matching PyTorch shapes: uniform(-1/sqrt(H), 1/sqrt(H))."""
    H, O, L = hidden_size, output_size, num_layer
    bound = 1.0 / np.sqrt(H)
    layers = []
    for l in range(L):
        in_l = 1 if l == 0 else H
        key, k1, k2, k3, k4 = jax.random.split(key, 5)
        layers.append((
            jax.random.uniform(k1, (3 * H, in_l), jnp.float32, -bound, bound),
            jax.random.uniform(k2, (3 * H, H), jnp.float32, -bound, bound),
            jax.random.uniform(k3, (3 * H,), jnp.float32, -bound, bound),
            jax.random.uniform(k4, (3 * H,), jnp.float32, -bound, bound),
        ))
    key, k5, k6 = jax.random.split(key, 3)
    wo = jax.random.uniform(k5, (O, H), jnp.float32, -bound, bound)
    bo = jax.random.uniform(k6, (O,), jnp.float32, -bound, bound)
    return {"layers": layers, "wo": wo, "bo": bo}


def reference_forward(x, hn, params):
    """Pure-JAX reference matching torch.nn.GRU semantics (gate order r, z, n)."""
    T, B, _ = x.shape
    L, _, H = hn.shape
    seq = x
    for l in range(L):
        wih, whh, bih, bhh = params["layers"][l]
        h = hn[l]
        outs = []
        for t in range(T):
            gi = seq[t] @ wih.T + bih
            gh = h @ whh.T + bhh
            r = jax.nn.sigmoid(gi[:, :H] + gh[:, :H])
            z = jax.nn.sigmoid(gi[:, H:2 * H] + gh[:, H:2 * H])
            n = jnp.tanh(gi[:, 2 * H:] + r * gh[:, 2 * H:])
            h = (1.0 - z) * n + z * h
            outs.append(h)
        seq = jnp.stack(outs)
    return seq @ params["wo"].T + params["bo"]


if __name__ == "__main__":
    T, B, H, O, L = 8, 2, 32, 4, 2   # seq_len, batch, hidden_size, output_size, num_layer

    key = jax.random.PRNGKey(0)
    kp, kx, kh = jax.random.split(key, 3)
    params = init_params(kp, H, O, L)
    x = jax.random.normal(kx, (T, B, 1), jnp.float32)
    hn = jax.random.normal(kh, (L, B, H), jnp.float32)

    out = decoder_rnn_forward(x, hn, params,
                              hidden_size=H, output_size=O, num_layer=L)
    out = jax.block_until_ready(out)

    ref = jax.block_until_ready(reference_forward(x, hn, params))
    np.testing.assert_allclose(np.asarray(out), np.asarray(ref), atol=1e-3, rtol=1e-3)

    assert out.shape == (T, B, O)
    print("KERNEL_OK")
</pallas_src>

<mosaic_0001>
module attributes {stable_mosaic.version = 11 : i64} {
  func.func @kernel(%arg0: memref<64x1xf32, #tpu.memory_space<vmem>>, %arg1: memref<2x8x128xf32, #tpu.memory_space<vmem>>, %arg2: memref<1x384xf32, #tpu.memory_space<vmem>>, %arg3: memref<128x384xf32, #tpu.memory_space<vmem>>, %arg4: memref<1x384xf32, #tpu.memory_space<vmem>>, %arg5: memref<1x128xf32, #tpu.memory_space<vmem>>, %arg6: memref<128x384xf32, #tpu.memory_space<vmem>>, %arg7: memref<128x384xf32, #tpu.memory_space<vmem>>, %arg8: memref<1x384xf32, #tpu.memory_space<vmem>>, %arg9: memref<1x128xf32, #tpu.memory_space<vmem>>, %arg10: memref<128x128xf32, #tpu.memory_space<vmem>>, %arg11: memref<1x128xf32, #tpu.memory_space<vmem>>, %arg12: memref<64x128xf32, #tpu.memory_space<vmem>>, %arg13: memref<64x128xf32, #tpu.memory_space<vmem>>, %arg14: memref<64x384xf32, #tpu.memory_space<vmem>>) attributes {dimension_semantics = [], scalar_prefetch = 0 : i64, scratch_operands = 2 : i64, tpu.core_type = #tpu.core_type<tc>} {
    %c0 = arith.constant 0 : index
    %c0_0 = arith.constant 0 : index
    %0 = vector.load %arg0[%c0, %c0_0] : memref<64x1xf32, #tpu.memory_space<vmem>>, vector<64x1xf32>
    %c0_1 = arith.constant 0 : index
    %c0_2 = arith.constant 0 : index
    %1 = vector.load %arg2[%c0_1, %c0_2] : memref<1x384xf32, #tpu.memory_space<vmem>>, vector<1x384xf32>
    %2 = vector.broadcast %0 : vector<64x1xf32> to vector<64x384xf32>
    %3 = vector.broadcast %1 : vector<1x384xf32> to vector<64x384xf32>
    %4 = arith.mulf %2, %3 : vector<64x384xf32>
    %c0_3 = arith.constant 0 : index
    %c0_4 = arith.constant 0 : index
    %5 = vector.load %arg4[%c0_3, %c0_4] : memref<1x384xf32, #tpu.memory_space<vmem>>, vector<1x384xf32>
    %6 = vector.broadcast %5 : vector<1x384xf32> to vector<64x384xf32>
    %7 = arith.addf %4, %6 : vector<64x384xf32>
    %c0_5 = arith.constant 0 : index
    %c0_6 = arith.constant 0 : index
    %8 = vector.load %arg14[%c0_5, %c0_6] : memref<64x384xf32, #tpu.memory_space<vmem>>, vector<64x384xf32>
    tpu.vector_store %arg14[%c0_5, %c0_6], %7 {strides = array<i32>} : memref<64x384xf32, #tpu.memory_space<vmem>>, vector<64x384xf32>,
    %c0_7 = arith.constant 0 : index
    %c0_8 = arith.constant 0 : index
    %9 = vector.load %arg5[%c0_7, %c0_8] : memref<1x128xf32, #tpu.memory_space<vmem>>, vector<1x128xf32>
    %10 = vector.shape_cast %9 : vector<1x128xf32> to vector<1x128xf32>
    %11 = vector.broadcast %10 : vector<1x128xf32> to vector<8x128xf32>
    %c0_9 = arith.constant 0 : index
    %c0_10 = arith.constant 0 : index
    %c0_11 = arith.constant 0 : index
    %12 = vector.load %arg1[%c0_9, %c0_10, %c0_11] : memref<2x8x128xf32, #tpu.memory_space<vmem>>, vector<1x8x128xf32>
    %13 = vector.shape_cast %12 : vector<1x8x128xf32> to vector<8x128xf32>
    %c0_i32 = arith.constant 0 : i32
    %c8_i32 = arith.constant 8 : i32
    %14 = arith.muli %c0_i32, %c8_i32 : i32
    %15 = tpu.assume_multiple %14, 8 : i32
    %16 = arith.index_cast %15 : i32 to index
    %c0_12 = arith.constant 0 : index
    %17 = vector.load %arg14[%16, %c0_12] : memref<64x384xf32, #tpu.memory_space<vmem>>, vector<8x384xf32>
    %c0_13 = arith.constant 0 : index
    %c0_14 = arith.constant 0 : index
    %18 = vector.load %arg3[%c0_13, %c0_14] : memref<128x384xf32, #tpu.memory_space<vmem>>, vector<128x384xf32>
    %cst = arith.constant dense<0.000000e+00> : vector<8x384xf32>
    %19 = tpu.matmul %13, %18, %cst {dimension_numbers = #tpu.dot_dimension_numbers<[1], [0], [0], [1], [0, 0, 1, 1], [], []>} : vector<8x128xf32>, vector<128x384xf32>, vector<8x384xf32> -> vector<8x384xf32>
    %20 = vector.extract_strided_slice %17 {offsets = [0, 0], sizes = [8, 128], strides = [1, 1]} : vector<8x384xf32> to vector<8x128xf32>
    %21 = vector.extract_strided_slice %19 {offsets = [0, 0], sizes = [8, 128], strides = [1, 1]} : vector<8x384xf32> to vector<8x128xf32>
    %22 = arith.addf %20, %21 : vector<8x128xf32>
    %23 = arith.negf %22 : vector<8x128xf32>
    %24 = math.exp %23 : vector<8x128xf32>
    %cst_15 = arith.constant 1.000000e+00 : f32
    %25 = vector.broadcast %cst_15 : f32 to vector<8x128xf32>
    %26 = arith.addf %25, %24 : vector<8x128xf32>
    %27 = arith.divf %25, %26 : vector<8x128xf32>
    %28 = vector.extract_strided_slice %17 {offsets = [0, 128], sizes = [8, 128], strides = [1, 1]} : vector<8x384xf32> to vector<8x128xf32>
    %29 = vector.extract_strided_slice %19 {offsets = [0, 128], sizes = [8, 128], strides = [1, 1]} : vector<8x384xf32> to vector<8x128xf32>
    %30 = arith.addf %28, %29 : vector<8x128xf32>
    %31 = arith.negf %30 : vector<8x128xf32>
    %32 = math.exp %31 : vector<8x128xf32>
    %cst_16 = arith.constant 1.000000e+00 : f32
    %33 = vector.broadcast %cst_16 : f32 to vector<8x128xf32>
    %34 = arith.addf %33, %32 : vector<8x128xf32>
    %35 = arith.divf %33, %34 : vector<8x128xf32>
    %36 = vector.extract_strided_slice %17 {offsets = [0, 256], sizes = [8, 128], strides = [1, 1]} : vector<8x384xf32> to vector<8x128xf32>
    %37 = vector.extract_strided_slice %19 {offsets = [0, 256], sizes = [8, 128], strides = [1, 1]} : vector<8x384xf32> to vector<8x128xf32>
    %38 = arith.addf %37, %11 : vector<8x128xf32>
    %39 = arith.mulf %27, %38 : vector<8x128xf32>
    %40 = arith.addf %36, %39 : vector<8x128xf32>
    %41 = math.tanh %40 : vector<8x128xf32>
    %cst_17 = arith.constant 1.000000e+00 : f32
    %42 = vector.broadcast %cst_17 : f32 to vector<8x128xf32>
    %43 = arith.subf %42, %35 : vector<8x128xf32>
    %44 = arith.mulf %43, %41 : vector<8x128xf32>
    %45 = arith.mulf %35, %13 : vector<8x128xf32>
    %46 = arith.addf %44, %45 : vector<8x128xf32>
    %47 = arith.index_cast %15 : i32 to index
    %c0_18 = arith.constant 0 : index
    %48 = vector.load %arg13[%47, %c0_18] : memref<64x128xf32, #tpu.memory_space<vmem>>, vector<8x128xf32>
    tpu.vector_store %arg13[%47, %c0_18], %46 {strides = array<i32>} : memref<64x128xf32, #tpu.memory_space<vmem>>, vector<8x128xf32>,
    %c1_i32 = arith.constant 1 : i32
    %c8_i32_19 = arith.constant 8 : i32
    %49 = arith.muli %c1_i32, %c8_i32_19 : i32
    %50 = tpu.assume_multiple %49, 8 : i32
    %51 = arith.index_cast %50 : i32 to index
    %c0_20 = arith.constant 0 : index
    %52 = vector.load %arg14[%51, %c0_20] : memref<64x384xf32, #tpu.memory_space<vmem>>, vector<8x384xf32>
    %c0_21 = arith.constant 0 : index
    %c0_22 = arith.constant 0 : index
    %53 = vector.load %arg3[%c0_21, %c0_22] : memref<128x384xf32, #tpu.memory_space<vmem>>, vector<128x384xf32>
    %cst_23 = arith.constant dense<0.000000e+00> : vector<8x384xf32>
    %54 = tpu.matmul %46, %53, %cst_23 {dimension_numbers = #tpu.dot_dimension_numbers<[1], [0], [0], [1], [0, 0, 1, 1], [], []>} : vector<8x128xf32>, vector<128x384xf32>, vector<8x384xf32> -> vector<8x384xf32>
    %55 = vector.extract_strided_slice %52 {offsets = [0, 0], sizes = [8, 128], strides = [1, 1]} : vector<8x384xf32> to vector<8x128xf32>
    %56 = vector.extract_strided_slice %54 {offsets = [0, 0], sizes = [8, 128], strides = [1, 1]} : vector<8x384xf32> to vector<8x128xf32>
    %57 = arith.addf %55, %56 : vector<8x128xf32>
    %58 = arith.negf %57 : vector<8x128xf32>
    %59 = math.exp %58 : vector<8x128xf32>
    %cst_24 = arith.constant 1.000000e+00 : f32
    %60 = vector.broadcast %cst_24 : f32 to vector<8x128xf32>
    %61 = arith.addf %60, %59 : vector<8x128xf32>
    %62 = arith.divf %60, %61 : vector<8x128xf32>
    %63 = vector.extract_strided_slice %52 {offsets = [0, 128], sizes = [8, 128], strides = [1, 1]} : vector<8x384xf32> to vector<8x128xf32>
    %64 = vector.extract_strided_slice %54 {offsets = [0, 128], sizes = [8, 128], strides = [1, 1]} : vector<8x384xf32> to vector<8x128xf32>
    %65 = arith.addf %63, %64 : vector<8x128xf32>
    %66 = arith.negf %65 : vector<8x128xf32>
    %67 = math.exp %66 : vector<8x128xf32>
    %cst_25 = arith.constant 1.000000e+00 : f32
    %68 = vector.broadcast %cst_25 : f32 to vector<8x128xf32>
    %69 = arith.addf %68, %67 : vector<8x128xf32>
    %70 = arith.divf %68, %69 : vector<8x128xf32>
    %71 = vector.extract_strided_slice %52 {offsets = [0, 256], sizes = [8, 128], strides = [1, 1]} : vector<8x384xf32> to vector<8x128xf32>
    %72 = vector.extract_strided_slice %54 {offsets = [0, 256], sizes = [8, 128], strides = [1, 1]} : vector<8x384xf32> to vector<8x128xf32>
    %73 = arith.addf %72, %11 : vector<8x128xf32>
    %74 = arith.mulf %62, %73 : vector<8x128xf32>
    %75 = arith.addf %71, %74 : vector<8x128xf32>
    %76 = math.tanh %75 : vector<8x128xf32>
    %cst_26 = arith.constant 1.000000e+00 : f32
    %77 = vector.broadcast %cst_26 : f32 to vector<8x128xf32>
    %78 = arith.subf %77, %70 : vector<8x128xf32>
    %79 = arith.mulf %78, %76 : vector<8x128xf32>
    %80 = arith.mulf %70, %46 : vector<8x128xf32>
    %81 = arith.addf %79, %80 : vector<8x128xf32>
    %82 = arith.index_cast %50 : i32 to index
    %c0_27 = arith.constant 0 : index
    %83 = vector.load %arg13[%82, %c0_27] : memref<64x128xf32, #tpu.memory_space<vmem>>, vector<8x128xf32>
    tpu.vector_store %arg13[%82, %c0_27], %81 {strides = array<i32>} : memref<64x128xf32, #tpu.memory_space<vmem>>, vector<8x128xf32>,
    %c2_i32 = arith.constant 2 : i32
    %c8_i32_28 = arith.constant 8 : i32
    %84 = arith.muli %c2_i32, %c8_i32_28 : i32
    %85 = tpu.assume_multiple %84, 8 : i32
    %86 = arith.index_cast %85 : i32 to index
    %c0_29 = arith.constant 0 : index
    %87 = vector.load %arg14[%86, %c0_29] : memref<64x384xf32, #tpu.memory_space<vmem>>, vector<8x384xf32>
    %c0_30 = arith.constant 0 : index
    %c0_31 = arith.constant 0 : index
    %88 = vector.load %arg3[%c0_30, %c0_31] : memref<128x384xf32, #tpu.memory_space<vmem>>, vector<128x384xf32>
    %cst_32 = arith.constant dense<0.000000e+00> : vector<8x384xf32>
    %89 = tpu.matmul %81, %88, %cst_32 {dimension_numbers = #tpu.dot_dimension_numbers<[1], [0], [0], [1], [0, 0, 1, 1], [], []>} : vector<8x128xf32>, vector<128x384xf32>, vector<8x384xf32> -> vector<8x384xf32>
    %90 = vector.extract_strided_slice %87 {offsets = [0, 0], sizes = [8, 128], strides = [1, 1]} : vector<8x384xf32> to vector<8x128xf32>
    %91 = vector.extract_strided_slice %89 {offsets = [0, 0], sizes = [8, 128], strides = [1, 1]} : vector<8x384xf32> to vector<8x128xf32>
    %92 = arith.addf %90, %91 : vector<8x128xf32>
    %93 = arith.negf %92 : vector<8x128xf32>
    %94 = math.exp %93 : vector<8x128xf32>
    %cst_33 = arith.constant 1.000000e+00 : f32
    %95 = vector.broadcast %cst_33 : f32 to vector<8x128xf32>
    %96 = arith.addf %95, %94 : vector<8x128xf32>
    %97 = arith.divf %95, %96 : vector<8x128xf32>
    %98 = vector.extract_strided_slice %87 {offsets = [0, 128], sizes = [8, 128], strides = [1, 1]} : vector<8x384xf32> to vector<8x128xf32>
    %99 = vector.extract_strided_slice %89 {offsets = [0, 128], sizes = [8, 128], strides = [1, 1]} : vector<8x384xf32> to vector<8x128xf32>
    %100 = arith.addf %98, %99 : vector<8x128xf32>
    %101 = arith.negf %100 : vector<8x128xf32>
    %102 = math.exp %101 : vector<8x128xf32>
    %cst_34 = arith.constant 1.000000e+00 : f32
    %103 = vector.broadcast %cst_34 : f32 to vector<8x128xf32>
    %104 = arith.addf %103, %102 : vector<8x128xf32>
    %105 = arith.divf %103, %104 : vector<8x128xf32>
    %106 = vector.extract_strided_slice %87 {offsets = [0, 256], sizes = [8, 128], strides = [1, 1]} : vector<8x384xf32> to vector<8x128xf32>
    %107 = vector.extract_strided_slice %89 {offsets = [0, 256], sizes = [8, 128], strides = [1, 1]} : vector<8x384xf32> to vector<8x128xf32>
    %108 = arith.addf %107, %11 : vector<8x128xf32>
    %109 = arith.mulf %97, %108 : vector<8x128xf32>
    %110 = arith.addf %106, %109 : vector<8x128xf32>
    %111 = math.tanh %110 : vector<8x128xf32>
    %cst_35 = arith.constant 1.000000e+00 : f32
    %112 = vector.broadcast %cst_35 : f32 to vector<8x128xf32>
    %113 = arith.subf %112, %105 : vector<8x128xf32>
    %114 = arith.mulf %113, %111 : vector<8x128xf32>
    %115 = arith.mulf %105, %81 : vector<8x128xf32>
    %116 = arith.addf %114, %115 : vector<8x128xf32>
    %117 = arith.index_cast %85 : i32 to index
    %c0_36 = arith.constant 0 : index
    %118 = vector.load %arg13[%117, %c0_36] : memref<64x128xf32, #tpu.memory_space<vmem>>, vector<8x128xf32>
    tpu.vector_store %arg13[%117, %c0_36], %116 {strides = array<i32>} : memref<64x128xf32, #tpu.memory_space<vmem>>, vector<8x128xf32>,
    %c3_i32 = arith.constant 3 : i32
    %c8_i32_37 = arith.constant 8 : i32
    %119 = arith.muli %c3_i32, %c8_i32_37 : i32
    %120 = tpu.assume_multiple %119, 8 : i32
    %121 = arith.index_cast %120 : i32 to index
    %c0_38 = arith.constant 0 : index
    %122 = vector.load %arg14[%121, %c0_38] : memref<64x384xf32, #tpu.memory_space<vmem>>, vector<8x384xf32>
    %c0_39 = arith.constant 0 : index
    %c0_40 = arith.constant 0 : index
    %123 = vector.load %arg3[%c0_39, %c0_40] : memref<128x384xf32, #tpu.memory_space<vmem>>, vector<128x384xf32>
    %cst_41 = arith.constant dense<0.000000e+00> : vector<8x384xf32>
    %124 = tpu.matmul %116, %123, %cst_41 {dimension_numbers = #tpu.dot_dimension_numbers<[1], [0], [0], [1], [0, 0, 1, 1], [], []>} : vector<8x128xf32>, vector<128x384xf32>, vector<8x384xf32> -> vector<8x384xf32>
    %125 = vector.extract_strided_slice %122 {offsets = [0, 0], sizes = [8, 128], strides = [1, 1]} : vector<8x384xf32> to vector<8x128xf32>
    %126 = vector.extract_strided_slice %124 {offsets = [0, 0], sizes = [8, 128], strides = [1, 1]} : vector<8x384xf32> to vector<8x128xf32>
    %127 = arith.addf %125, %126 : vector<8x128xf32>
    %128 = arith.negf %127 : vector<8x128xf32>
    %129 = math.exp %128 : vector<8x128xf32>
    %cst_42 = arith.constant 1.000000e+00 : f32
    %130 = vector.broadcast %cst_42 : f32 to vector<8x128xf32>
    %131 = arith.addf %130, %129 : vector<8x128xf32>
    %132 = arith.divf %130, %131 : vector<8x128xf32>
    %133 = vector.extract_strided_slice %122 {offsets = [0, 128], sizes = [8, 128], strides = [1, 1]} : vector<8x384xf32> to vector<8x128xf32>
    %134 = vector.extract_strided_slice %124 {offsets = [0, 128], sizes = [8, 128], strides = [1, 1]} : vector<8x384xf32> to vector<8x128xf32>
    %135 = arith.addf %133, %134 : vector<8x128xf32>
    %136 = arith.negf %135 : vector<8x128xf32>
    %137 = math.exp %136 : vector<8x128xf32>
    %cst_43 = arith.constant 1.000000e+00 : f32
    %138 = vector.broadcast %cst_43 : f32 to vector<8x128xf32>
    %139 = arith.addf %138, %137 : vector<8x128xf32>
    %140 = arith.divf %138, %139 : vector<8x128xf32>
    %141 = vector.extract_strided_slice %122 {offsets = [0, 256], sizes = [8, 128], strides = [1, 1]} : vector<8x384xf32> to vector<8x128xf32>
    %142 = vector.extract_strided_slice %124 {offsets = [0, 256], sizes = [8, 128], strides = [1, 1]} : vector<8x384xf32> to vector<8x128xf32>
    %143 = arith.addf %142, %11 : vector<8x128xf32>
    %144 = arith.mulf %132, %143 : vector<8x128xf32>
    %145 = arith.addf %141, %144 : vector<8x128xf32>
    %146 = math.tanh %145 : vector<8x128xf32>
    %cst_44 = arith.constant 1.000000e+00 : f32
    %147 = vector.broadcast %cst_44 : f32 to vector<8x128xf32>
    %148 = arith.subf %147, %140 : vector<8x128xf32>
    %149 = arith.mulf %148, %146 : vector<8x128xf32>
    %150 = arith.mulf %140, %116 : vector<8x128xf32>
    %151 = arith.addf %149, %150 : vector<8x128xf32>
    %152 = arith.index_cast %120 : i32 to index
    %c0_45 = arith.constant 0 : index
    %153 = vector.load %arg13[%152, %c0_45] : memref<64x128xf32, #tpu.memory_space<vmem>>, vector<8x128xf32>
    tpu.vector_store %arg13[%152, %c0_45], %151 {strides = array<i32>} : memref<64x128xf32, #tpu.memory_space<vmem>>, vector<8x128xf32>,
    %c4_i32 = arith.constant 4 : i32
    %c8_i32_46 = arith.constant 8 : i32
    %154 = arith.muli %c4_i32, %c8_i32_46 : i32
    %155 = tpu.assume_multiple %154, 8 : i32
    %156 = arith.index_cast %155 : i32 to index
    %c0_47 = arith.constant 0 : index
    %157 = vector.load %arg14[%156, %c0_47] : memref<64x384xf32, #tpu.memory_space<vmem>>, vector<8x384xf32>
    %c0_48 = arith.constant 0 : index
    %c0_49 = arith.constant 0 : index
    %158 = vector.load %arg3[%c0_48, %c0_49] : memref<128x384xf32, #tpu.memory_space<vmem>>, vector<128x384xf32>
    %cst_50 = arith.constant dense<0.000000e+00> : vector<8x384xf32>
    %159 = tpu.matmul %151, %158, %cst_50 {dimension_numbers = #tpu.dot_dimension_numbers<[1], [0], [0], [1], [0, 0, 1, 1], [], []>} : vector<8x128xf32>, vector<128x384xf32>, vector<8x384xf32> -> vector<8x384xf32>
    %160 = vector.extract_strided_slice %157 {offsets = [0, 0], sizes = [8, 128], strides = [1, 1]} : vector<8x384xf32> to vector<8x128xf32>
    %161 = vector.extract_strided_slice %159 {offsets = [0, 0], sizes = [8, 128], strides = [1, 1]} : vector<8x384xf32> to vector<8x128xf32>
    %162 = arith.addf %160, %161 : vector<8x128xf32>
    %163 = arith.negf %162 : vector<8x128xf32>
    %164 = math.exp %163 : vector<8x128xf32>
    %cst_51 = arith.constant 1.000000e+00 : f32
    %165 = vector.broadcast %cst_51 : f32 to vector<8x128xf32>
    %166 = arith.addf %165, %164 : vector<8x128xf32>
    %167 = arith.divf %165, %166 : vector<8x128xf32>
    %168 = vector.extract_strided_slice %157 {offsets = [0, 128], sizes = [8, 128], strides = [1, 1]} : vector<8x384xf32> to vector<8x128xf32>
    %169 = vector.extract_strided_slice %159 {offsets = [0, 128], sizes = [8, 128], strides = [1, 1]} : vector<8x384xf32> to vector<8x128xf32>
    %170 = arith.addf %168, %169 : vector<8x128xf32>
    %171 = arith.negf %170 : vector<8x128xf32>
    %172 = math.exp %171 : vector<8x128xf32>
    %cst_52 = arith.constant 1.000000e+00 : f32
    %173 = vector.broadcast %cst_52 : f32 to vector<8x128xf32>
    %174 = arith.addf %173, %172 : vector<8x128xf32>
    %175 = arith.divf %173, %174 : vector<8x128xf32>
    %176 = vector.extract_strided_slice %157 {offsets = [0, 256], sizes = [8, 128], strides = [1, 1]} : vector<8x384xf32> to vector<8x128xf32>
    %177 = vector.extract_strided_slice %159 {offsets = [0, 256], sizes = [8, 128], strides = [1, 1]} : vector<8x384xf32> to vector<8x128xf32>
    %178 = arith.addf %177, %11 : vector<8x128xf32>
    %179 = arith.mulf %167, %178 : vector<8x128xf32>
    %180 = arith.addf %176, %179 : vector<8x128xf32>
    %181 = math.tanh %180 : vector<8x128xf32>
    %cst_53 = arith.constant 1.000000e+00 : f32
    %182 = vector.broadcast %cst_53 : f32 to vector<8x128xf32>
    %183 = arith.subf %182, %175 : vector<8x128xf32>
    %184 = arith.mulf %183, %181 : vector<8x128xf32>
    %185 = arith.mulf %175, %151 : vector<8x128xf32>
    %186 = arith.addf %184, %185 : vector<8x128xf32>
    %187 = arith.index_cast %155 : i32 to index
    %c0_54 = arith.constant 0 : index
    %188 = vector.load %arg13[%187, %c0_54] : memref<64x128xf32, #tpu.memory_space<vmem>>, vector<8x128xf32>
    tpu.vector_store %arg13[%187, %c0_54], %186 {strides = array<i32>} : memref<64x128xf32, #tpu.memory_space<vmem>>, vector<8x128xf32>,
    %c5_i32 = arith.constant 5 : i32
    %c8_i32_55 = arith.constant 8 : i32
    %189 = arith.muli %c5_i32, %c8_i32_55 : i32
    %190 = tpu.assume_multiple %189, 8 : i32
    %191 = arith.index_cast %190 : i32 to index
    %c0_56 = arith.constant 0 : index
    %192 = vector.load %arg14[%191, %c0_56] : memref<64x384xf32, #tpu.memory_space<vmem>>, vector<8x384xf32>
    %c0_57 = arith.constant 0 : index
    %c0_58 = arith.constant 0 : index
    %193 = vector.load %arg3[%c0_57, %c0_58] : memref<128x384xf32, #tpu.memory_space<vmem>>, vector<128x384xf32>
    %cst_59 = arith.constant dense<0.000000e+00> : vector<8x384xf32>
    %194 = tpu.matmul %186, %193, %cst_59 {dimension_numbers = #tpu.dot_dimension_numbers<[1], [0], [0], [1], [0, 0, 1, 1], [], []>} : vector<8x128xf32>, vector<128x384xf32>, vector<8x384xf32> -> vector<8x384xf32>
    %195 = vector.extract_strided_slice %192 {offsets = [0, 0], sizes = [8, 128], strides = [1, 1]} : vector<8x384xf32> to vector<8x128xf32>
    %196 = vector.extract_strided_slice %194 {offsets = [0, 0], sizes = [8, 128], strides = [1, 1]} : vector<8x384xf32> to vector<8x128xf32>
    %197 = arith.addf %195, %196 : vector<8x128xf32>
    %198 = arith.negf %197 : vector<8x128xf32>
    %199 = math.exp %198 : vector<8x128xf32>
    %cst_60 = arith.constant 1.000000e+00 : f32
    %200 = vector.broadcast %cst_60 : f32 to vector<8x128xf32>
    %201 = arith.addf %200, %199 : vector<8x128xf32>
    %202 = arith.divf %200, %201 : vector<8x128xf32>
    %203 = vector.extract_strided_slice %192 {offsets = [0, 128], sizes = [8, 128], strides = [1, 1]} : vector<8x384xf32> to vector<8x128xf32>
    %204 = vector.extract_strided_slice %194 {offsets = [0, 128], sizes = [8, 128], strides = [1, 1]} : vector<8x384xf32> to vector<8x128xf32>
    %205 = arith.addf %203, %204 : vector<8x128xf32>
    %206 = arith.negf %205 : vector<8x128xf32>
    %207 = math.exp %206 : vector<8x128xf32>
    %cst_61 = arith.constant 1.000000e+00 : f32
    %208 = vector.broadcast %cst_61 : f32 to vector<8x128xf32>
    %209 = arith.addf %208, %207 : vector<8x128xf32>
    %210 = arith.divf %208, %209 : vector<8x128xf32>
    %211 = vector.extract_strided_slice %192 {offsets = [0, 256], sizes = [8, 128], strides = [1, 1]} : vector<8x384xf32> to vector<8x128xf32>
    %212 = vector.extract_strided_slice %194 {offsets = [0, 256], sizes = [8, 128], strides = [1, 1]} : vector<8x384xf32> to vector<8x128xf32>
    %213 = arith.addf %212, %11 : vector<8x128xf32>
    %214 = arith.mulf %202, %213 : vector<8x128xf32>
    %215 = arith.addf %211, %214 : vector<8x128xf32>
    %216 = math.tanh %215 : vector<8x128xf32>
    %cst_62 = arith.constant 1.000000e+00 : f32
    %217 = vector.broadcast %cst_62 : f32 to vector<8x128xf32>
    %218 = arith.subf %217, %210 : vector<8x128xf32>
    %219 = arith.mulf %218, %216 : vector<8x128xf32>
    %220 = arith.mulf %210, %186 : vector<8x128xf32>
    %221 = arith.addf %219, %220 : vector<8x128xf32>
    %222 = arith.index_cast %190 : i32 to index
    %c0_63 = arith.constant 0 : index
    %223 = vector.load %arg13[%222, %c0_63] : memref<64x128xf32, #tpu.memory_space<vmem>>, vector<8x128xf32>
    tpu.vector_store %arg13[%222, %c0_63], %221 {strides = array<i32>} : memref<64x128xf32, #tpu.memory_space<vmem>>, vector<8x128xf32>,
    %c6_i32 = arith.constant 6 : i32
    %c8_i32_64 = arith.constant 8 : i32
    %224 = arith.muli %c6_i32, %c8_i32_64 : i32
    %225 = tpu.assume_multiple %224, 8 : i32
    %226 = arith.index_cast %225 : i32 to index
    %c0_65 = arith.constant 0 : index
    %227 = vector.load %arg14[%226, %c0_65] : memref<64x384xf32, #tpu.memory_space<vmem>>, vector<8x384xf32>
    %c0_66 = arith.constant 0 : index
    %c0_67 = arith.constant 0 : index
    %228 = vector.load %arg3[%c0_66, %c0_67] : memref<128x384xf32, #tpu.memory_space<vmem>>, vector<128x384xf32>
    %cst_68 = arith.constant dense<0.000000e+00> : vector<8x384xf32>
    %229 = tpu.matmul %221, %228, %cst_68 {dimension_numbers = #tpu.dot_dimension_numbers<[1], [0], [0], [1], [0, 0, 1, 1], [], []>} : vector<8x128xf32>, vector<128x384xf32>, vector<8x384xf32> -> vector<8x384xf32>
    %230 = vector.extract_strided_slice %227 {offsets = [0, 0], sizes = [8, 128], strides = [1, 1]} : vector<8x384xf32> to vector<8x128xf32>
    %231 = vector.extract_strided_slice %229 {offsets = [0, 0], sizes = [8, 128], strides = [1, 1]} : vector<8x384xf32> to vector<8x128xf32>
    %232 = arith.addf %230, %231 : vector<8x128xf32>
    %233 = arith.negf %232 : vector<8x128xf32>
    %234 = math.exp %233 : vector<8x128xf32>
    %cst_69 = arith.constant 1.000000e+00 : f32
    %235 = vector.broadcast %cst_69 : f32 to vector<8x128xf32>
    %236 = arith.addf %235, %234 : vector<8x128xf32>
    %237 = arith.divf %235, %236 : vector<8x128xf32>
    %238 = vector.extract_strided_slice %227 {offsets = [0, 128], sizes = [8, 128], strides = [1, 1]} : vector<8x384xf32> to vector<8x128xf32>
    %239 = vector.extract_strided_slice %229 {offsets = [0, 128], sizes = [8, 128], strides = [1, 1]} : vector<8x384xf32> to vector<8x128xf32>
    %240 = arith.addf %238, %239 : vector<8x128xf32>
    %241 = arith.negf %240 : vector<8x128xf32>
    %242 = math.exp %241 : vector<8x128xf32>
    %cst_70 = arith.constant 1.000000e+00 : f32
    %243 = vector.broadcast %cst_70 : f32 to vector<8x128xf32>
    %244 = arith.addf %243, %242 : vector<8x128xf32>
    %245 = arith.divf %243, %244 : vector<8x128xf32>
    %246 = vector.extract_strided_slice %227 {offsets = [0, 256], sizes = [8, 128], strides = [1, 1]} : vector<8x384xf32> to vector<8x128xf32>
    %247 = vector.extract_strided_slice %229 {offsets = [0, 256], sizes = [8, 128], strides = [1, 1]} : vector<8x384xf32> to vector<8x128xf32>
    %248 = arith.addf %247, %11 : vector<8x128xf32>
    %249 = arith.mulf %237, %248 : vector<8x128xf32>
    %250 = arith.addf %246, %249 : vector<8x128xf32>
    %251 = math.tanh %250 : vector<8x128xf32>
    %cst_71 = arith.constant 1.000000e+00 : f32
    %252 = vector.broadcast %cst_71 : f32 to vector<8x128xf32>
    %253 = arith.subf %252, %245 : vector<8x128xf32>
    %254 = arith.mulf %253, %251 : vector<8x128xf32>
    %255 = arith.mulf %245, %221 : vector<8x128xf32>
    %256 = arith.addf %254, %255 : vector<8x128xf32>
    %257 = arith.index_cast %225 : i32 to index
    %c0_72 = arith.constant 0 : index
    %258 = vector.load %arg13[%257, %c0_72] : memref<64x128xf32, #tpu.memory_space<vmem>>, vector<8x128xf32>
    tpu.vector_store %arg13[%257, %c0_72], %256 {strides = array<i32>} : memref<64x128xf32, #tpu.memory_space<vmem>>, vector<8x128xf32>,
    %c7_i32 = arith.constant 7 : i32
    %c8_i32_73 = arith.constant 8 : i32
    %259 = arith.muli %c7_i32, %c8_i32_73 : i32
    %260 = tpu.assume_multiple %259, 8 : i32
    %261 = arith.index_cast %260 : i32 to index
    %c0_74 = arith.constant 0 : index
    %262 = vector.load %arg14[%261, %c0_74] : memref<64x384xf32, #tpu.memory_space<vmem>>, vector<8x384xf32>
    %c0_75 = arith.constant 0 : index
    %c0_76 = arith.constant 0 : index
    %263 = vector.load %arg3[%c0_75, %c0_76] : memref<128x384xf32, #tpu.memory_space<vmem>>, vector<128x384xf32>
    %cst_77 = arith.constant dense<0.000000e+00> : vector<8x384xf32>
    %264 = tpu.matmul %256, %263, %cst_77 {dimension_numbers = #tpu.dot_dimension_numbers<[1], [0], [0], [1], [0, 0, 1, 1], [], []>} : vector<8x128xf32>, vector<128x384xf32>, vector<8x384xf32> -> vector<8x384xf32>
    %265 = vector.extract_strided_slice %262 {offsets = [0, 0], sizes = [8, 128], strides = [1, 1]} : vector<8x384xf32> to vector<8x128xf32>
    %266 = vector.extract_strided_slice %264 {offsets = [0, 0], sizes = [8, 128], strides = [1, 1]} : vector<8x384xf32> to vector<8x128xf32>
    %267 = arith.addf %265, %266 : vector<8x128xf32>
    %268 = arith.negf %267 : vector<8x128xf32>
    %269 = math.exp %268 : vector<8x128xf32>
    %cst_78 = arith.constant 1.000000e+00 : f32
    %270 = vector.broadcast %cst_78 : f32 to vector<8x128xf32>
    %271 = arith.addf %270, %269 : vector<8x128xf32>
    %272 = arith.divf %270, %271 : vector<8x128xf32>
    %273 = vector.extract_strided_slice %262 {offsets = [0, 128], sizes = [8, 128], strides = [1, 1]} : vector<8x384xf32> to vector<8x128xf32>
    %274 = vector.extract_strided_slice %264 {offsets = [0, 128], sizes = [8, 128], strides = [1, 1]} : vector<8x384xf32> to vector<8x128xf32>
    %275 = arith.addf %273, %274 : vector<8x128xf32>
    %276 = arith.negf %275 : vector<8x128xf32>
    %277 = math.exp %276 : vector<8x128xf32>
    %cst_79 = arith.constant 1.000000e+00 : f32
    %278 = vector.broadcast %cst_79 : f32 to vector<8x128xf32>
    %279 = arith.addf %278, %277 : vector<8x128xf32>
    %280 = arith.divf %278, %279 : vector<8x128xf32>
    %281 = vector.extract_strided_slice %262 {offsets = [0, 256], sizes = [8, 128], strides = [1, 1]} : vector<8x384xf32> to vector<8x128xf32>
    %282 = vector.extract_strided_slice %264 {offsets = [0, 256], sizes = [8, 128], strides = [1, 1]} : vector<8x384xf32> to vector<8x128xf32>
    %283 = arith.addf %282, %11 : vector<8x128xf32>
    %284 = arith.mulf %272, %283 : vector<8x128xf32>
    %285 = arith.addf %281, %284 : vector<8x128xf32>
    %286 = math.tanh %285 : vector<8x128xf32>
    %cst_80 = arith.constant 1.000000e+00 : f32
    %287 = vector.broadcast %cst_80 : f32 to vector<8x128xf32>
    %288 = arith.subf %287, %280 : vector<8x128xf32>
    %289 = arith.mulf %288, %286 : vector<8x128xf32>
    %290 = arith.mulf %280, %256 : vector<8x128xf32>
    %291 = arith.addf %289, %290 : vector<8x128xf32>
    %292 = arith.index_cast %260 : i32 to index
    %c0_81 = arith.constant 0 : index
    %293 = vector.load %arg13[%292, %c0_81] : memref<64x128xf32, #tpu.memory_space<vmem>>, vector<8x128xf32>
    tpu.vector_store %arg13[%292, %c0_81], %291 {strides = array<i32>} : memref<64x128xf32, #tpu.memory_space<vmem>>, vector<8x128xf32>,
    %c8_i32_82 = arith.constant 8 : i32
    %c0_83 = arith.constant 0 : index
    %c0_84 = arith.constant 0 : index
    %294 = vector.load %arg13[%c0_83, %c0_84] : memref<64x128xf32, #tpu.memory_space<vmem>>, vector<64x128xf32>
    %c0_85 = arith.constant 0 : index
    %c0_86 = arith.constant 0 : index
    %295 = vector.load %arg6[%c0_85, %c0_86] : memref<128x384xf32, #tpu.memory_space<vmem>>, vector<128x384xf32>
    %cst_87 = arith.constant dense<0.000000e+00> : vector<64x384xf32>
    %296 = tpu.matmul %294, %295, %cst_87 {dimension_numbers = #tpu.dot_dimension_numbers<[1], [0], [0], [1], [0, 0, 1, 1], [], []>} : vector<64x128xf32>, vector<128x384xf32>, vector<64x384xf32> -> vector<64x384xf32>
    %c0_88 = arith.constant 0 : index
    %c0_89 = arith.constant 0 : index
    %297 = vector.load %arg8[%c0_88, %c0_89] : memref<1x384xf32, #tpu.memory_space<vmem>>, vector<1x384xf32>
    %298 = vector.broadcast %297 : vector<1x384xf32> to vector<64x384xf32>
    %299 = arith.addf %296, %298 : vector<64x384xf32>
    %c0_90 = arith.constant 0 : index
    %c0_91 = arith.constant 0 : index
    %300 = vector.load %arg14[%c0_90, %c0_91] : memref<64x384xf32, #tpu.memory_space<vmem>>, vector<64x384xf32>
    tpu.vector_store %arg14[%c0_90, %c0_91], %299 {strides = array<i32>} : memref<64x384xf32, #tpu.memory_space<vmem>>, vector<64x384xf32>,
    %c0_92 = arith.constant 0 : index
    %c0_93 = arith.constant 0 : index
    %301 = vector.load %arg9[%c0_92, %c0_93] : memref<1x128xf32, #tpu.memory_space<vmem>>, vector<1x128xf32>
    %302 = vector.shape_cast %301 : vector<1x128xf32> to vector<1x128xf32>
    %303 = vector.broadcast %302 : vector<1x128xf32> to vector<8x128xf32>
    %c0_94 = arith.constant 0 : index
    %c0_95 = arith.constant 0 : index
    %304 = vector.load %arg11[%c0_94, %c0_95] : memref<1x128xf32, #tpu.memory_space<vmem>>, vector<1x128xf32>
    %305 = vector.shape_cast %304 : vector<1x128xf32> to vector<1x128xf32>
    %306 = vector.broadcast %305 : vector<1x128xf32> to vector<8x128xf32>
    %c1 = arith.constant 1 : index
    %c0_96 = arith.constant 0 : index
    %c0_97 = arith.constant 0 : index
    %307 = vector.load %arg1[%c1, %c0_96, %c0_97] : memref<2x8x128xf32, #tpu.memory_space<vmem>>, vector<1x8x128xf32>
    %308 = vector.shape_cast %307 : vector<1x8x128xf32> to vector<8x128xf32>
    %c0_i32_98 = arith.constant 0 : i32
    %c8_i32_99 = arith.constant 8 : i32
    %309 = arith.muli %c0_i32_98, %c8_i32_99 : i32
    %310 = tpu.assume_multiple %309, 8 : i32
    %311 = arith.index_cast %310 : i32 to index
    %c0_100 = arith.constant 0 : index
    %312 = vector.load %arg14[%311, %c0_100] : memref<64x384xf32, #tpu.memory_space<vmem>>, vector<8x384xf32>
    %c0_101 = arith.constant 0 : index
    %c0_102 = arith.constant 0 : index
    %313 = vector.load %arg7[%c0_101, %c0_102] : memref<128x384xf32, #tpu.memory_space<vmem>>, vector<128x384xf32>
    %cst_103 = arith.constant dense<0.000000e+00> : vector<8x384xf32>
    %314 = tpu.matmul %308, %313, %cst_103 {dimension_numbers = #tpu.dot_dimension_numbers<[1], [0], [0], [1], [0, 0, 1, 1], [], []>} : vector<8x128xf32>, vector<128x384xf32>, vector<8x384xf32> -> vector<8x384xf32>
    %315 = vector.extract_strided_slice %312 {offsets = [0, 0], sizes = [8, 128], strides = [1, 1]} : vector<8x384xf32> to vector<8x128xf32>
    %316 = vector.extract_strided_slice %314 {offsets = [0, 0], sizes = [8, 128], strides = [1, 1]} : vector<8x384xf32> to vector<8x128xf32>
    %317 = arith.addf %315, %316 : vector<8x128xf32>
    %318 = arith.negf %317 : vector<8x128xf32>
    %319 = math.exp %318 : vector<8x128xf32>
    %cst_104 = arith.constant 1.000000e+00 : f32
    %320 = vector.broadcast %cst_104 : f32 to vector<8x128xf32>
    %321 = arith.addf %320, %319 : vector<8x128xf32>
    %322 = arith.divf %320, %321 : vector<8x128xf32>
    %323 = vector.extract_strided_slice %312 {offsets = [0, 128], sizes = [8, 128], strides = [1, 1]} : vector<8x384xf32> to vector<8x128xf32>
    %324 = vector.extract_strided_slice %314 {offsets = [0, 128], sizes = [8, 128], strides = [1, 1]} : vector<8x384xf32> to vector<8x128xf32>
    %325 = arith.addf %323, %324 : vector<8x128xf32>
    %326 = arith.negf %325 : vector<8x128xf32>
    %327 = math.exp %326 : vector<8x128xf32>
    %cst_105 = arith.constant 1.000000e+00 : f32
    %328 = vector.broadcast %cst_105 : f32 to vector<8x128xf32>
    %329 = arith.addf %328, %327 : vector<8x128xf32>
    %330 = arith.divf %328, %329 : vector<8x128xf32>
    %331 = vector.extract_strided_slice %312 {offsets = [0, 256], sizes = [8, 128], strides = [1, 1]} : vector<8x384xf32> to vector<8x128xf32>
    %332 = vector.extract_strided_slice %314 {offsets = [0, 256], sizes = [8, 128], strides = [1, 1]} : vector<8x384xf32> to vector<8x128xf32>
    %333 = arith.addf %332, %303 : vector<8x128xf32>
    %334 = arith.mulf %322, %333 : vector<8x128xf32>
    %335 = arith.addf %331, %334 : vector<8x128xf32>
    %336 = math.tanh %335 : vector<8x128xf32>
    %cst_106 = arith.constant 1.000000e+00 : f32
    %337 = vector.broadcast %cst_106 : f32 to vector<8x128xf32>
    %338 = arith.subf %337, %330 : vector<8x128xf32>
    %339 = arith.mulf %338, %336 : vector<8x128xf32>
    %340 = arith.mulf %330, %308 : vector<8x128xf32>
    %341 = arith.addf %339, %340 : vector<8x128xf32>
    %c0_107 = arith.constant 0 : index
    %c0_108 = arith.constant 0 : index
    %342 = vector.load %arg10[%c0_107, %c0_108] : memref<128x128xf32, #tpu.memory_space<vmem>>, vector<128x128xf32>
    %cst_109 = arith.constant dense<0.000000e+00> : vector<8x128xf32>
    %343 = tpu.matmul %341, %342, %cst_109 {dimension_numbers = #tpu.dot_dimension_numbers<[1], [0], [0], [1], [0, 0, 1, 1], [], []>} : vector<8x128xf32>, vector<128x128xf32>, vector<8x128xf32> -> vector<8x128xf32>
    %344 = arith.addf %343, %306 : vector<8x128xf32>
    %345 = arith.index_cast %310 : i32 to index
    %c0_110 = arith.constant 0 : index
    %346 = vector.load %arg12[%345, %c0_110] : memref<64x128xf32, #tpu.memory_space<vmem>>, vector<8x128xf32>
    tpu.vector_store %arg12[%345, %c0_110], %344 {strides = array<i32>} : memref<64x128xf32, #tpu.memory_space<vmem>>, vector<8x128xf32>,
    %c1_i32_111 = arith.constant 1 : i32
    %c8_i32_112 = arith.constant 8 : i32
    %347 = arith.muli %c1_i32_111, %c8_i32_112 : i32
    %348 = tpu.assume_multiple %347, 8 : i32
    %349 = arith.index_cast %348 : i32 to index
    %c0_113 = arith.constant 0 : index
    %350 = vector.load %arg14[%349, %c0_113] : memref<64x384xf32, #tpu.memory_space<vmem>>, vector<8x384xf32>
    %c0_114 = arith.constant 0 : index
    %c0_115 = arith.constant 0 : index
    %351 = vector.load %arg7[%c0_114, %c0_115] : memref<128x384xf32, #tpu.memory_space<vmem>>, vector<128x384xf32>
    %cst_116 = arith.constant dense<0.000000e+00> : vector<8x384xf32>
    %352 = tpu.matmul %341, %351, %cst_116 {dimension_numbers = #tpu.dot_dimension_numbers<[1], [0], [0], [1], [0, 0, 1, 1], [], []>} : vector<8x128xf32>, vector<128x384xf32>, vector<8x384xf32> -> vector<8x384xf32>
    %353 = vector.extract_strided_slice %350 {offsets = [0, 0], sizes = [8, 128], strides = [1, 1]} : vector<8x384xf32> to vector<8x128xf32>
    %354 = vector.extract_strided_slice %352 {offsets = [0, 0], sizes = [8, 128], strides = [1, 1]} : vector<8x384xf32> to vector<8x128xf32>
    %355 = arith.addf %353, %354 : vector<8x128xf32>
    %356 = arith.negf %355 : vector<8x128xf32>
    %357 = math.exp %356 : vector<8x128xf32>
    %cst_117 = arith.constant 1.000000e+00 : f32
    %358 = vector.broadcast %cst_117 : f32 to vector<8x128xf32>
    %359 = arith.addf %358, %357 : vector<8x128xf32>
    %360 = arith.divf %358, %359 : vector<8x128xf32>
    %361 = vector.extract_strided_slice %350 {offsets = [0, 128], sizes = [8, 128], strides = [1, 1]} : vector<8x384xf32> to vector<8x128xf32>
    %362 = vector.extract_strided_slice %352 {offsets = [0, 128], sizes = [8, 128], strides = [1, 1]} : vector<8x384xf32> to vector<8x128xf32>
    %363 = arith.addf %361, %362 : vector<8x128xf32>
    %364 = arith.negf %363 : vector<8x128xf32>
    %365 = math.exp %364 : vector<8x128xf32>
    %cst_118 = arith.constant 1.000000e+00 : f32
    %366 = vector.broadcast %cst_118 : f32 to vector<8x128xf32>
    %367 = arith.addf %366, %365 : vector<8x128xf32>
    %368 = arith.divf %366, %367 : vector<8x128xf32>
    %369 = vector.extract_strided_slice %350 {offsets = [0, 256], sizes = [8, 128], strides = [1, 1]} : vector<8x384xf32> to vector<8x128xf32>
    %370 = vector.extract_strided_slice %352 {offsets = [0, 256], sizes = [8, 128], strides = [1, 1]} : vector<8x384xf32> to vector<8x128xf32>
    %371 = arith.addf %370, %303 : vector<8x128xf32>
    %372 = arith.mulf %360, %371 : vector<8x128xf32>
    %373 = arith.addf %369, %372 : vector<8x128xf32>
    %374 = math.tanh %373 : vector<8x128xf32>
    %cst_119 = arith.constant 1.000000e+00 : f32
    %375 = vector.broadcast %cst_119 : f32 to vector<8x128xf32>
    %376 = arith.subf %375, %368 : vector<8x128xf32>
    %377 = arith.mulf %376, %374 : vector<8x128xf32>
    %378 = arith.mulf %368, %341 : vector<8x128xf32>
    %379 = arith.addf %377, %378 : vector<8x128xf32>
    %c0_120 = arith.constant 0 : index
    %c0_121 = arith.constant 0 : index
    %380 = vector.load %arg10[%c0_120, %c0_121] : memref<128x128xf32, #tpu.memory_space<vmem>>, vector<128x128xf32>
    %cst_122 = arith.constant dense<0.000000e+00> : vector<8x128xf32>
    %381 = tpu.matmul %379, %380, %cst_122 {dimension_numbers = #tpu.dot_dimension_numbers<[1], [0], [0], [1], [0, 0, 1, 1], [], []>} : vector<8x128xf32>, vector<128x128xf32>, vector<8x128xf32> -> vector<8x128xf32>
    %382 = arith.addf %381, %306 : vector<8x128xf32>
    %383 = arith.index_cast %348 : i32 to index
    %c0_123 = arith.constant 0 : index
    %384 = vector.load %arg12[%383, %c0_123] : memref<64x128xf32, #tpu.memory_space<vmem>>, vector<8x128xf32>
    tpu.vector_store %arg12[%383, %c0_123], %382 {strides = array<i32>} : memref<64x128xf32, #tpu.memory_space<vmem>>, vector<8x128xf32>,
    %c2_i32_124 = arith.constant 2 : i32
    %c8_i32_125 = arith.constant 8 : i32
    %385 = arith.muli %c2_i32_124, %c8_i32_125 : i32
    %386 = tpu.assume_multiple %385, 8 : i32
    %387 = arith.index_cast %386 : i32 to index
    %c0_126 = arith.constant 0 : index
    %388 = vector.load %arg14[%387, %c0_126] : memref<64x384xf32, #tpu.memory_space<vmem>>, vector<8x384xf32>
    %c0_127 = arith.constant 0 : index
    %c0_128 = arith.constant 0 : index
    %389 = vector.load %arg7[%c0_127, %c0_128] : memref<128x384xf32, #tpu.memory_space<vmem>>, vector<128x384xf32>
    %cst_129 = arith.constant dense<0.000000e+00> : vector<8x384xf32>
    %390 = tpu.matmul %379, %389, %cst_129 {dimension_numbers = #tpu.dot_dimension_numbers<[1], [0], [0], [1], [0, 0, 1, 1], [], []>} : vector<8x128xf32>, vector<128x384xf32>, vector<8x384xf32> -> vector<8x384xf32>
    %391 = vector.extract_strided_slice %388 {offsets = [0, 0], sizes = [8, 128], strides = [1, 1]} : vector<8x384xf32> to vector<8x128xf32>
    %392 = vector.extract_strided_slice %390 {offsets = [0, 0], sizes = [8, 128], strides = [1, 1]} : vector<8x384xf32> to vector<8x128xf32>
    %393 = arith.addf %391, %392 : vector<8x128xf32>
    %394 = arith.negf %393 : vector<8x128xf32>
    %395 = math.exp %394 : vector<8x128xf32>
    %cst_130 = arith.constant 1.000000e+00 : f32
    %396 = vector.broadcast %cst_130 : f32 to vector<8x128xf32>
    %397 = arith.addf %396, %395 : vector<8x128xf32>
    %398 = arith.divf %396, %397 : vector<8x128xf32>
    %399 = vector.extract_strided_slice %388 {offsets = [0, 128], sizes = [8, 128], strides = [1, 1]} : vector<8x384xf32> to vector<8x128xf32>
    %400 = vector.extract_strided_slice %390 {offsets = [0, 128], sizes = [8, 128], strides = [1, 1]} : vector<8x384xf32> to vector<8x128xf32>
    %401 = arith.addf %399, %400 : vector<8x128xf32>
    %402 = arith.negf %401 : vector<8x128xf32>
    %403 = math.exp %402 : vector<8x128xf32>
    %cst_131 = arith.constant 1.000000e+00 : f32
    %404 = vector.broadcast %cst_131 : f32 to vector<8x128xf32>
    %405 = arith.addf %404, %403 : vector<8x128xf32>
    %406 = arith.divf %404, %405 : vector<8x128xf32>
    %407 = vector.extract_strided_slice %388 {offsets = [0, 256], sizes = [8, 128], strides = [1, 1]} : vector<8x384xf32> to vector<8x128xf32>
    %408 = vector.extract_strided_slice %390 {offsets = [0, 256], sizes = [8, 128], strides = [1, 1]} : vector<8x384xf32> to vector<8x128xf32>
    %409 = arith.addf %408, %303 : vector<8x128xf32>
    %410 = arith.mulf %398, %409 : vector<8x128xf32>
    %411 = arith.addf %407, %410 : vector<8x128xf32>
    %412 = math.tanh %411 : vector<8x128xf32>
    %cst_132 = arith.constant 1.000000e+00 : f32
    %413 = vector.broadcast %cst_132 : f32 to vector<8x128xf32>
    %414 = arith.subf %413, %406 : vector<8x128xf32>
    %415 = arith.mulf %414, %412 : vector<8x128xf32>
    %416 = arith.mulf %406, %379 : vector<8x128xf32>
    %417 = arith.addf %415, %416 : vector<8x128xf32>
    %c0_133 = arith.constant 0 : index
    %c0_134 = arith.constant 0 : index
    %418 = vector.load %arg10[%c0_133, %c0_134] : memref<128x128xf32, #tpu.memory_space<vmem>>, vector<128x128xf32>
    %cst_135 = arith.constant dense<0.000000e+00> : vector<8x128xf32>
    %419 = tpu.matmul %417, %418, %cst_135 {dimension_numbers = #tpu.dot_dimension_numbers<[1], [0], [0], [1], [0, 0, 1, 1], [], []>} : vector<8x128xf32>, vector<128x128xf32>, vector<8x128xf32> -> vector<8x128xf32>
    %420 = arith.addf %419, %306 : vector<8x128xf32>
    %421 = arith.index_cast %386 : i32 to index
    %c0_136 = arith.constant 0 : index
    %422 = vector.load %arg12[%421, %c0_136] : memref<64x128xf32, #tpu.memory_space<vmem>>, vector<8x128xf32>
    tpu.vector_store %arg12[%421, %c0_136], %420 {strides = array<i32>} : memref<64x128xf32, #tpu.memory_space<vmem>>, vector<8x128xf32>,
    %c3_i32_137 = arith.constant 3 : i32
    %c8_i32_138 = arith.constant 8 : i32
    %423 = arith.muli %c3_i32_137, %c8_i32_138 : i32
    %424 = tpu.assume_multiple %423, 8 : i32
    %425 = arith.index_cast %424 : i32 to index
    %c0_139 = arith.constant 0 : index
    %426 = vector.load %arg14[%425, %c0_139] : memref<64x384xf32, #tpu.memory_space<vmem>>, vector<8x384xf32>
    %c0_140 = arith.constant 0 : index
    %c0_141 = arith.constant 0 : index
    %427 = vector.load %arg7[%c0_140, %c0_141] : memref<128x384xf32, #tpu.memory_space<vmem>>, vector<128x384xf32>
    %cst_142 = arith.constant dense<0.000000e+00> : vector<8x384xf32>
    %428 = tpu.matmul %417, %427, %cst_142 {dimension_numbers = #tpu.dot_dimension_numbers<[1], [0], [0], [1], [0, 0, 1, 1], [], []>} : vector<8x128xf32>, vector<128x384xf32>, vector<8x384xf32> -> vector<8x384xf32>
    %429 = vector.extract_strided_slice %426 {offsets = [0, 0], sizes = [8, 128], strides = [1, 1]} : vector<8x384xf32> to vector<8x128xf32>
    %430 = vector.extract_strided_slice %428 {offsets = [0, 0], sizes = [8, 128], strides = [1, 1]} : vector<8x384xf32> to vector<8x128xf32>
    %431 = arith.addf %429, %430 : vector<8x128xf32>
    %432 = arith.negf %431 : vector<8x128xf32>
    %433 = math.exp %432 : vector<8x128xf32>
    %cst_143 = arith.constant 1.000000e+00 : f32
    %434 = vector.broadcast %cst_143 : f32 to vector<8x128xf32>
    %435 = arith.addf %434, %433 : vector<8x128xf32>
    %436 = arith.divf %434, %435 : vector<8x128xf32>
    %437 = vector.extract_strided_slice %426 {offsets = [0, 128], sizes = [8, 128], strides = [1, 1]} : vector<8x384xf32> to vector<8x128xf32>
    %438 = vector.extract_strided_slice %428 {offsets = [0, 128], sizes = [8, 128], strides = [1, 1]} : vector<8x384xf32> to vector<8x128xf32>
    %439 = arith.addf %437, %438 : vector<8x128xf32>
    %440 = arith.negf %439 : vector<8x128xf32>
    %441 = math.exp %440 : vector<8x128xf32>
    %cst_144 = arith.constant 1.000000e+00 : f32
    %442 = vector.broadcast %cst_144 : f32 to vector<8x128xf32>
    %443 = arith.addf %442, %441 : vector<8x128xf32>
    %444 = arith.divf %442, %443 : vector<8x128xf32>
    %445 = vector.extract_strided_slice %426 {offsets = [0, 256], sizes = [8, 128], strides = [1, 1]} : vector<8x384xf32> to vector<8x128xf32>
    %446 = vector.extract_strided_slice %428 {offsets = [0, 256], sizes = [8, 128], strides = [1, 1]} : vector<8x384xf32> to vector<8x128xf32>
    %447 = arith.addf %446, %303 : vector<8x128xf32>
    %448 = arith.mulf %436, %447 : vector<8x128xf32>
    %449 = arith.addf %445, %448 : vector<8x128xf32>
    %450 = math.tanh %449 : vector<8x128xf32>
    %cst_145 = arith.constant 1.000000e+00 : f32
    %451 = vector.broadcast %cst_145 : f32 to vector<8x128xf32>
    %452 = arith.subf %451, %444 : vector<8x128xf32>
    %453 = arith.mulf %452, %450 : vector<8x128xf32>
    %454 = arith.mulf %444, %417 : vector<8x128xf32>
    %455 = arith.addf %453, %454 : vector<8x128xf32>
    %c0_146 = arith.constant 0 : index
    %c0_147 = arith.constant 0 : index
    %456 = vector.load %arg10[%c0_146, %c0_147] : memref<128x128xf32, #tpu.memory_space<vmem>>, vector<128x128xf32>
    %cst_148 = arith.constant dense<0.000000e+00> : vector<8x128xf32>
    %457 = tpu.matmul %455, %456, %cst_148 {dimension_numbers = #tpu.dot_dimension_numbers<[1], [0], [0], [1], [0, 0, 1, 1], [], []>} : vector<8x128xf32>, vector<128x128xf32>, vector<8x128xf32> -> vector<8x128xf32>
    %458 = arith.addf %457, %306 : vector<8x128xf32>
    %459 = arith.index_cast %424 : i32 to index
    %c0_149 = arith.constant 0 : index
    %460 = vector.load %arg12[%459, %c0_149] : memref<64x128xf32, #tpu.memory_space<vmem>>, vector<8x128xf32>
    tpu.vector_store %arg12[%459, %c0_149], %458 {strides = array<i32>} : memref<64x128xf32, #tpu.memory_space<vmem>>, vector<8x128xf32>,
    %c4_i32_150 = arith.constant 4 : i32
    %c8_i32_151 = arith.constant 8 : i32
    %461 = arith.muli %c4_i32_150, %c8_i32_151 : i32
    %462 = tpu.assume_multiple %461, 8 : i32
    %463 = arith.index_cast %462 : i32 to index
    %c0_152 = arith.constant 0 : index
    %464 = vector.load %arg14[%463, %c0_152] : memref<64x384xf32, #tpu.memory_space<vmem>>, vector<8x384xf32>
    %c0_153 = arith.constant 0 : index
    %c0_154 = arith.constant 0 : index
    %465 = vector.load %arg7[%c0_153, %c0_154] : memref<128x384xf32, #tpu.memory_space<vmem>>, vector<128x384xf32>
    %cst_155 = arith.constant dense<0.000000e+00> : vector<8x384xf32>
    %466 = tpu.matmul %455, %465, %cst_155 {dimension_numbers = #tpu.dot_dimension_numbers<[1], [0], [0], [1], [0, 0, 1, 1], [], []>} : vector<8x128xf32>, vector<128x384xf32>, vector<8x384xf32> -> vector<8x384xf32>
    %467 = vector.extract_strided_slice %464 {offsets = [0, 0], sizes = [8, 128], strides = [1, 1]} : vector<8x384xf32> to vector<8x128xf32>
    %468 = vector.extract_strided_slice %466 {offsets = [0, 0], sizes = [8, 128], strides = [1, 1]} : vector<8x384xf32> to vector<8x128xf32>
    %469 = arith.addf %467, %468 : vector<8x128xf32>
    %470 = arith.negf %469 : vector<8x128xf32>
    %471 = math.exp %470 : vector<8x128xf32>
    %cst_156 = arith.constant 1.000000e+00 : f32
    %472 = vector.broadcast %cst_156 : f32 to vector<8x128xf32>
    %473 = arith.addf %472, %471 : vector<8x128xf32>
    %474 = arith.divf %472, %473 : vector<8x128xf32>
    %475 = vector.extract_strided_slice %464 {offsets = [0, 128], sizes = [8, 128], strides = [1, 1]} : vector<8x384xf32> to vector<8x128xf32>
    %476 = vector.extract_strided_slice %466 {offsets = [0, 128], sizes = [8, 128], strides = [1, 1]} : vector<8x384xf32> to vector<8x128xf32>
    %477 = arith.addf %475, %476 : vector<8x128xf32>
    %478 = arith.negf %477 : vector<8x128xf32>
    %479 = math.exp %478 : vector<8x128xf32>
    %cst_157 = arith.constant 1.000000e+00 : f32
    %480 = vector.broadcast %cst_157 : f32 to vector<8x128xf32>
    %481 = arith.addf %480, %479 : vector<8x128xf32>
    %482 = arith.divf %480, %481 : vector<8x128xf32>
    %483 = vector.extract_strided_slice %464 {offsets = [0, 256], sizes = [8, 128], strides = [1, 1]} : vector<8x384xf32> to vector<8x128xf32>
    %484 = vector.extract_strided_slice %466 {offsets = [0, 256], sizes = [8, 128], strides = [1, 1]} : vector<8x384xf32> to vector<8x128xf32>
    %485 = arith.addf %484, %303 : vector<8x128xf32>
    %486 = arith.mulf %474, %485 : vector<8x128xf32>
    %487 = arith.addf %483, %486 : vector<8x128xf32>
    %488 = math.tanh %487 : vector<8x128xf32>
    %cst_158 = arith.constant 1.000000e+00 : f32
    %489 = vector.broadcast %cst_158 : f32 to vector<8x128xf32>
    %490 = arith.subf %489, %482 : vector<8x128xf32>
    %491 = arith.mulf %490, %488 : vector<8x128xf32>
    %492 = arith.mulf %482, %455 : vector<8x128xf32>
    %493 = arith.addf %491, %492 : vector<8x128xf32>
    %c0_159 = arith.constant 0 : index
    %c0_160 = arith.constant 0 : index
    %494 = vector.load %arg10[%c0_159, %c0_160] : memref<128x128xf32, #tpu.memory_space<vmem>>, vector<128x128xf32>
    %cst_161 = arith.constant dense<0.000000e+00> : vector<8x128xf32>
    %495 = tpu.matmul %493, %494, %cst_161 {dimension_numbers = #tpu.dot_dimension_numbers<[1], [0], [0], [1], [0, 0, 1, 1], [], []>} : vector<8x128xf32>, vector<128x128xf32>, vector<8x128xf32> -> vector<8x128xf32>
    %496 = arith.addf %495, %306 : vector<8x128xf32>
    %497 = arith.index_cast %462 : i32 to index
    %c0_162 = arith.constant 0 : index
    %498 = vector.load %arg12[%497, %c0_162] : memref<64x128xf32, #tpu.memory_space<vmem>>, vector<8x128xf32>
    tpu.vector_store %arg12[%497, %c0_162], %496 {strides = array<i32>} : memref<64x128xf32, #tpu.memory_space<vmem>>, vector<8x128xf32>,
    %c5_i32_163 = arith.constant 5 : i32
    %c8_i32_164 = arith.constant 8 : i32
    %499 = arith.muli %c5_i32_163, %c8_i32_164 : i32
    %500 = tpu.assume_multiple %499, 8 : i32
    %501 = arith.index_cast %500 : i32 to index
    %c0_165 = arith.constant 0 : index
    %502 = vector.load %arg14[%501, %c0_165] : memref<64x384xf32, #tpu.memory_space<vmem>>, vector<8x384xf32>
    %c0_166 = arith.constant 0 : index
    %c0_167 = arith.constant 0 : index
    %503 = vector.load %arg7[%c0_166, %c0_167] : memref<128x384xf32, #tpu.memory_space<vmem>>, vector<128x384xf32>
    %cst_168 = arith.constant dense<0.000000e+00> : vector<8x384xf32>
    %504 = tpu.matmul %493, %503, %cst_168 {dimension_numbers = #tpu.dot_dimension_numbers<[1], [0], [0], [1], [0, 0, 1, 1], [], []>} : vector<8x128xf32>, vector<128x384xf32>, vector<8x384xf32> -> vector<8x384xf32>
    %505 = vector.extract_strided_slice %502 {offsets = [0, 0], sizes = [8, 128], strides = [1, 1]} : vector<8x384xf32> to vector<8x128xf32>
    %506 = vector.extract_strided_slice %504 {offsets = [0, 0], sizes = [8, 128], strides = [1, 1]} : vector<8x384xf32> to vector<8x128xf32>
    %507 = arith.addf %505, %506 : vector<8x128xf32>
    %508 = arith.negf %507 : vector<8x128xf32>
    %509 = math.exp %508 : vector<8x128xf32>
    %cst_169 = arith.constant 1.000000e+00 : f32
    %510 = vector.broadcast %cst_169 : f32 to vector<8x128xf32>
    %511 = arith.addf %510, %509 : vector<8x128xf32>
    %512 = arith.divf %510, %511 : vector<8x128xf32>
    %513 = vector.extract_strided_slice %502 {offsets = [0, 128], sizes = [8, 128], strides = [1, 1]} : vector<8x384xf32> to vector<8x128xf32>
    %514 = vector.extract_strided_slice %504 {offsets = [0, 128], sizes = [8, 128], strides = [1, 1]} : vector<8x384xf32> to vector<8x128xf32>
    %515 = arith.addf %513, %514 : vector<8x128xf32>
    %516 = arith.negf %515 : vector<8x128xf32>
    %517 = math.exp %516 : vector<8x128xf32>
    %cst_170 = arith.constant 1.000000e+00 : f32
    %518 = vector.broadcast %cst_170 : f32 to vector<8x128xf32>
    %519 = arith.addf %518, %517 : vector<8x128xf32>
    %520 = arith.divf %518, %519 : vector<8x128xf32>
    %521 = vector.extract_strided_slice %502 {offsets = [0, 256], sizes = [8, 128], strides = [1, 1]} : vector<8x384xf32> to vector<8x128xf32>
    %522 = vector.extract_strided_slice %504 {offsets = [0, 256], sizes = [8, 128], strides = [1, 1]} : vector<8x384xf32> to vector<8x128xf32>
    %523 = arith.addf %522, %303 : vector<8x128xf32>
    %524 = arith.mulf %512, %523 : vector<8x128xf32>
    %525 = arith.addf %521, %524 : vector<8x128xf32>
    %526 = math.tanh %525 : vector<8x128xf32>
    %cst_171 = arith.constant 1.000000e+00 : f32
    %527 = vector.broadcast %cst_171 : f32 to vector<8x128xf32>
    %528 = arith.subf %527, %520 : vector<8x128xf32>
    %529 = arith.mulf %528, %526 : vector<8x128xf32>
    %530 = arith.mulf %520, %493 : vector<8x128xf32>
    %531 = arith.addf %529, %530 : vector<8x128xf32>
    %c0_172 = arith.constant 0 : index
    %c0_173 = arith.constant 0 : index
    %532 = vector.load %arg10[%c0_172, %c0_173] : memref<128x128xf32, #tpu.memory_space<vmem>>, vector<128x128xf32>
    %cst_174 = arith.constant dense<0.000000e+00> : vector<8x128xf32>
    %533 = tpu.matmul %531, %532, %cst_174 {dimension_numbers = #tpu.dot_dimension_numbers<[1], [0], [0], [1], [0, 0, 1, 1], [], []>} : vector<8x128xf32>, vector<128x128xf32>, vector<8x128xf32> -> vector<8x128xf32>
    %534 = arith.addf %533, %306 : vector<8x128xf32>
    %535 = arith.index_cast %500 : i32 to index
    %c0_175 = arith.constant 0 : index
    %536 = vector.load %arg12[%535, %c0_175] : memref<64x128xf32, #tpu.memory_space<vmem>>, vector<8x128xf32>
    tpu.vector_store %arg12[%535, %c0_175], %534 {strides = array<i32>} : memref<64x128xf32, #tpu.memory_space<vmem>>, vector<8x128xf32>,
    %c6_i32_176 = arith.constant 6 : i32
    %c8_i32_177 = arith.constant 8 : i32
    %537 = arith.muli %c6_i32_176, %c8_i32_177 : i32
    %538 = tpu.assume_multiple %537, 8 : i32
    %539 = arith.index_cast %538 : i32 to index
    %c0_178 = arith.constant 0 : index
    %540 = vector.load %arg14[%539, %c0_178] : memref<64x384xf32, #tpu.memory_space<vmem>>, vector<8x384xf32>
    %c0_179 = arith.constant 0 : index
    %c0_180 = arith.constant 0 : index
    %541 = vector.load %arg7[%c0_179, %c0_180] : memref<128x384xf32, #tpu.memory_space<vmem>>, vector<128x384xf32>
    %cst_181 = arith.constant dense<0.000000e+00> : vector<8x384xf32>
    %542 = tpu.matmul %531, %541, %cst_181 {dimension_numbers = #tpu.dot_dimension_numbers<[1], [0], [0], [1], [0, 0, 1, 1], [], []>} : vector<8x128xf32>, vector<128x384xf32>, vector<8x384xf32> -> vector<8x384xf32>
    %543 = vector.extract_strided_slice %540 {offsets = [0, 0], sizes = [8, 128], strides = [1, 1]} : vector<8x384xf32> to vector<8x128xf32>
    %544 = vector.extract_strided_slice %542 {offsets = [0, 0], sizes = [8, 128], strides = [1, 1]} : vector<8x384xf32> to vector<8x128xf32>
    %545 = arith.addf %543, %544 : vector<8x128xf32>
    %546 = arith.negf %545 : vector<8x128xf32>
    %547 = math.exp %546 : vector<8x128xf32>
    %cst_182 = arith.constant 1.000000e+00 : f32
    %548 = vector.broadcast %cst_182 : f32 to vector<8x128xf32>
    %549 = arith.addf %548, %547 : vector<8x128xf32>
    %550 = arith.divf %548, %549 : vector<8x128xf32>
    %551 = vector.extract_strided_slice %540 {offsets = [0, 128], sizes = [8, 128], strides = [1, 1]} : vector<8x384xf32> to vector<8x128xf32>
    %552 = vector.extract_strided_slice %542 {offsets = [0, 128], sizes = [8, 128], strides = [1, 1]} : vector<8x384xf32> to vector<8x128xf32>
    %553 = arith.addf %551, %552 : vector<8x128xf32>
    %554 = arith.negf %553 : vector<8x128xf32>
    %555 = math.exp %554 : vector<8x128xf32>
    %cst_183 = arith.constant 1.000000e+00 : f32
    %556 = vector.broadcast %cst_183 : f32 to vector<8x128xf32>
    %557 = arith.addf %556, %555 : vector<8x128xf32>
    %558 = arith.divf %556, %557 : vector<8x128xf32>
    %559 = vector.extract_strided_slice %540 {offsets = [0, 256], sizes = [8, 128], strides = [1, 1]} : vector<8x384xf32> to vector<8x128xf32>
    %560 = vector.extract_strided_slice %542 {offsets = [0, 256], sizes = [8, 128], strides = [1, 1]} : vector<8x384xf32> to vector<8x128xf32>
    %561 = arith.addf %560, %303 : vector<8x128xf32>
    %562 = arith.mulf %550, %561 : vector<8x128xf32>
    %563 = arith.addf %559, %562 : vector<8x128xf32>
    %564 = math.tanh %563 : vector<8x128xf32>
    %cst_184 = arith.constant 1.000000e+00 : f32
    %565 = vector.broadcast %cst_184 : f32 to vector<8x128xf32>
    %566 = arith.subf %565, %558 : vector<8x128xf32>
    %567 = arith.mulf %566, %564 : vector<8x128xf32>
    %568 = arith.mulf %558, %531 : vector<8x128xf32>
    %569 = arith.addf %567, %568 : vector<8x128xf32>
    %c0_185 = arith.constant 0 : index
    %c0_186 = arith.constant 0 : index
    %570 = vector.load %arg10[%c0_185, %c0_186] : memref<128x128xf32, #tpu.memory_space<vmem>>, vector<128x128xf32>
    %cst_187 = arith.constant dense<0.000000e+00> : vector<8x128xf32>
    %571 = tpu.matmul %569, %570, %cst_187 {dimension_numbers = #tpu.dot_dimension_numbers<[1], [0], [0], [1], [0, 0, 1, 1], [], []>} : vector<8x128xf32>, vector<128x128xf32>, vector<8x128xf32> -> vector<8x128xf32>
    %572 = arith.addf %571, %306 : vector<8x128xf32>
    %573 = arith.index_cast %538 : i32 to index
    %c0_188 = arith.constant 0 : index
    %574 = vector.load %arg12[%573, %c0_188] : memref<64x128xf32, #tpu.memory_space<vmem>>, vector<8x128xf32>
    tpu.vector_store %arg12[%573, %c0_188], %572 {strides = array<i32>} : memref<64x128xf32, #tpu.memory_space<vmem>>, vector<8x128xf32>,
    %c7_i32_189 = arith.constant 7 : i32
    %c8_i32_190 = arith.constant 8 : i32
    %575 = arith.muli %c7_i32_189, %c8_i32_190 : i32
    %576 = tpu.assume_multiple %575, 8 : i32
    %577 = arith.index_cast %576 : i32 to index
    %c0_191 = arith.constant 0 : index
    %578 = vector.load %arg14[%577, %c0_191] : memref<64x384xf32, #tpu.memory_space<vmem>>, vector<8x384xf32>
    %c0_192 = arith.constant 0 : index
    %c0_193 = arith.constant 0 : index
    %579 = vector.load %arg7[%c0_192, %c0_193] : memref<128x384xf32, #tpu.memory_space<vmem>>, vector<128x384xf32>
    %cst_194 = arith.constant dense<0.000000e+00> : vector<8x384xf32>
    %580 = tpu.matmul %569, %579, %cst_194 {dimension_numbers = #tpu.dot_dimension_numbers<[1], [0], [0], [1], [0, 0, 1, 1], [], []>} : vector<8x128xf32>, vector<128x384xf32>, vector<8x384xf32> -> vector<8x384xf32>
    %581 = vector.extract_strided_slice %578 {offsets = [0, 0], sizes = [8, 128], strides = [1, 1]} : vector<8x384xf32> to vector<8x128xf32>
    %582 = vector.extract_strided_slice %580 {offsets = [0, 0], sizes = [8, 128], strides = [1, 1]} : vector<8x384xf32> to vector<8x128xf32>
    %583 = arith.addf %581, %582 : vector<8x128xf32>
    %584 = arith.negf %583 : vector<8x128xf32>
    %585 = math.exp %584 : vector<8x128xf32>
    %cst_195 = arith.constant 1.000000e+00 : f32
    %586 = vector.broadcast %cst_195 : f32 to vector<8x128xf32>
    %587 = arith.addf %586, %585 : vector<8x128xf32>
    %588 = arith.divf %586, %587 : vector<8x128xf32>
    %589 = vector.extract_strided_slice %578 {offsets = [0, 128], sizes = [8, 128], strides = [1, 1]} : vector<8x384xf32> to vector<8x128xf32>
    %590 = vector.extract_strided_slice %580 {offsets = [0, 128], sizes = [8, 128], strides = [1, 1]} : vector<8x384xf32> to vector<8x128xf32>
    %591 = arith.addf %589, %590 : vector<8x128xf32>
    %592 = arith.negf %591 : vector<8x128xf32>
    %593 = math.exp %592 : vector<8x128xf32>
    %cst_196 = arith.constant 1.000000e+00 : f32
    %594 = vector.broadcast %cst_196 : f32 to vector<8x128xf32>
    %595 = arith.addf %594, %593 : vector<8x128xf32>
    %596 = arith.divf %594, %595 : vector<8x128xf32>
    %597 = vector.extract_strided_slice %578 {offsets = [0, 256], sizes = [8, 128], strides = [1, 1]} : vector<8x384xf32> to vector<8x128xf32>
    %598 = vector.extract_strided_slice %580 {offsets = [0, 256], sizes = [8, 128], strides = [1, 1]} : vector<8x384xf32> to vector<8x128xf32>
    %599 = arith.addf %598, %303 : vector<8x128xf32>
    %600 = arith.mulf %588, %599 : vector<8x128xf32>
    %601 = arith.addf %597, %600 : vector<8x128xf32>
    %602 = math.tanh %601 : vector<8x128xf32>
    %cst_197 = arith.constant 1.000000e+00 : f32
    %603 = vector.broadcast %cst_197 : f32 to vector<8x128xf32>
    %604 = arith.subf %603, %596 : vector<8x128xf32>
    %605 = arith.mulf %604, %602 : vector<8x128xf32>
    %606 = arith.mulf %596, %569 : vector<8x128xf32>
    %607 = arith.addf %605, %606 : vector<8x128xf32>
    %c0_198 = arith.constant 0 : index
    %c0_199 = arith.constant 0 : index
    %608 = vector.load %arg10[%c0_198, %c0_199] : memref<128x128xf32, #tpu.memory_space<vmem>>, vector<128x128xf32>
    %cst_200 = arith.constant dense<0.000000e+00> : vector<8x128xf32>
    %609 = tpu.matmul %607, %608, %cst_200 {dimension_numbers = #tpu.dot_dimension_numbers<[1], [0], [0], [1], [0, 0, 1, 1], [], []>} : vector<8x128xf32>, vector<128x128xf32>, vector<8x128xf32> -> vector<8x128xf32>
    %610 = arith.addf %609, %306 : vector<8x128xf32>
    %611 = arith.index_cast %576 : i32 to index
    %c0_201 = arith.constant 0 : index
    %612 = vector.load %arg12[%611, %c0_201] : memref<64x128xf32, #tpu.memory_space<vmem>>, vector<8x128xf32>
    tpu.vector_store %arg12[%611, %c0_201], %610 {strides = array<i32>} : memref<64x128xf32, #tpu.memory_space<vmem>>, vector<8x128xf32>,
    %c8_i32_202 = arith.constant 8 : i32
    return
  }
}

</mosaic_0001>

<llo_original>
// kernel: decoder_rnn_forward.1
$region0: #{decoder_rnn_forward.1}
  #allocation0 [shape = 'u32[]', space=smem, size = 0x4, offset = 0x4, fixed_abs, tag = 'smem constant byte address 0x4 - core index']
  #allocation1 [shape = 'u32[144,128]{1,0:T(1,128)}', space=vmem, size = 0x12000, scoped, tag = 'internal scratch']
  #allocation2 [shape = 'f32[64,128]{1,0:T(8,128)}', space=vmem, size = 0x8000, scoped, tag = 'scratch operand']
  #allocation3 [shape = 'f32[64,384]{1,0:T(8,128)}', space=vmem, size = 0x18000, scoped, tag = 'scratch operand']
  %s0 = inlined_call_operand.vmem [shape: f32[64,1], index: 0, kind: input, shape index: {}]
  %s1 = inlined_call_operand.vmem [shape: f32[2,8,128], index: 1, kind: input, shape index: {}]
  %s2 = inlined_call_operand.vmem [shape: f32[1,384], index: 2, kind: input, shape index: {}]
  %s3 = inlined_call_operand.vmem [shape: f32[128,384], index: 3, kind: input, shape index: {}]
  %s4 = inlined_call_operand.vmem [shape: f32[1,384], index: 4, kind: input, shape index: {}]
  %s5 = inlined_call_operand.vmem [shape: f32[1,128], index: 5, kind: input, shape index: {}]
  %s6 = inlined_call_operand.vmem [shape: f32[128,384], index: 6, kind: input, shape index: {}]
  %s7 = inlined_call_operand.vmem [shape: f32[128,384], index: 7, kind: input, shape index: {}]
  %s8 = inlined_call_operand.vmem [shape: f32[1,384], index: 8, kind: input, shape index: {}]
  %s9 = inlined_call_operand.vmem [shape: f32[1,128], index: 9, kind: input, shape index: {}]
  %s10 = inlined_call_operand.vmem [shape: f32[128,128], index: 10, kind: input, shape index: {}]
  %s11 = inlined_call_operand.vmem [shape: f32[1,128], index: 11, kind: input, shape index: {}]
  %s12 = inlined_call_operand.vmem [shape: f32[64,128], index: 12, kind: output, shape index: {}]
  %s13 = sld [smem:[#allocation0]]
  $region58: #{decoder_rnn_forward.1} parent=0
    _
  %s15 = ssub.s32 1, %s13
  %s16 = scalar_select 0, %s15, %s13
  // Predicated region
  $region2: #{decoder_rnn_forward.1} parent=0 // pred_check
    _
  $region3: #{decoder_rnn_forward.1} parent=0 // pred_check_branch
    %18 = sbr.rel (0) target = $region5
  $region4: #{decoder_rnn_forward.1} parent=0 // pred_region
    _
  $region5: #{decoder_rnn_forward.1} parent=0 // pred_fallthru
    _
  // Predicated region
  $region6: #{decoder_rnn_forward.1} parent=0 // pred_check
    _
  $region7: #{decoder_rnn_forward.1} parent=0 // pred_check_branch
    %20 = sbr.rel (0) target = $region9
  $region8: #{decoder_rnn_forward.1} parent=0 // pred_region
    _
  $region9: #{decoder_rnn_forward.1} parent=0 // pred_fallthru
    _
  // Predicated region
  $region10: #{decoder_rnn_forward.1} parent=0 // pred_check
    _
  $region11: #{decoder_rnn_forward.1} parent=0 // pred_check_branch
    %22 = sbr.rel (0) target = $region13
  $region12: #{decoder_rnn_forward.1} parent=0 // pred_region
    _
  $region13: #{decoder_rnn_forward.1} parent=0 // pred_fallthru
    _
  // Predicated region
  $region14: #{decoder_rnn_forward.1} parent=0 // pred_check
    _
  $region15: #{decoder_rnn_forward.1} parent=0 // pred_check_branch
    %24 = sbr.rel (0) target = $region17
  $region16: #{decoder_rnn_forward.1} parent=0 // pred_region
    _
  $region17: #{decoder_rnn_forward.1} parent=0 // pred_fallthru
    _
  // Predicated region
  $region18: #{decoder_rnn_forward.1} parent=0 // pred_check
    _
  $region19: #{decoder_rnn_forward.1} parent=0 // pred_check_branch
    %26 = sbr.rel (0) target = $region21
  $region20: #{decoder_rnn_forward.1} parent=0 // pred_region
    _
  $region21: #{decoder_rnn_forward.1} parent=0 // pred_fallthru
    _
  // Predicated region
  $region22: #{decoder_rnn_forward.1} parent=0 // pred_check
    _
  $region23: #{decoder_rnn_forward.1} parent=0 // pred_check_branch
    %28 = sbr.rel (0) target = $region25
  $region24: #{decoder_rnn_forward.1} parent=0 // pred_region
    _
  $region25: #{decoder_rnn_forward.1} parent=0 // pred_fallthru
    _
  // Predicated region
  $region26: #{decoder_rnn_forward.1} parent=0 // pred_check
    _
  $region27: #{decoder_rnn_forward.1} parent=0 // pred_check_branch
    %30 = sbr.rel (0) target = $region29
  $region28: #{decoder_rnn_forward.1} parent=0 // pred_region
    _
  $region29: #{decoder_rnn_forward.1} parent=0 // pred_fallthru
    _
  // Predicated region
  $region30: #{decoder_rnn_forward.1} parent=0 // pred_check
    _
  $region31: #{decoder_rnn_forward.1} parent=0 // pred_check_branch
    %32 = sbr.rel (0) target = $region33
  $region32: #{decoder_rnn_forward.1} parent=0 // pred_region
    _
  $region33: #{decoder_rnn_forward.1} parent=0 // pred_fallthru
    _
  // Predicated region
  $region34: #{decoder_rnn_forward.1} parent=0 // pred_check
    _
  $region35: #{decoder_rnn_forward.1} parent=0 // pred_check_branch
    %34 = sbr.rel (0) target = $region37
  $region36: #{decoder_rnn_forward.1} parent=0 // pred_region
    _
  $region37: #{decoder_rnn_forward.1} parent=0 // pred_fallthru
    _
  // Predicated region
  $region38: #{decoder_rnn_forward.1} parent=0 // pred_check
    _
  $region39: #{decoder_rnn_forward.1} parent=0 // pred_check_branch
    %36 = sbr.rel (0) target = $region41
  $region40: #{decoder_rnn_forward.1} parent=0 // pred_region
    _
  $region41: #{decoder_rnn_forward.1} parent=0 // pred_fallthru
    _
  // Predicated region
  $region42: #{decoder_rnn_forward.1} parent=0 // pred_check
    _
  $region43: #{decoder_rnn_forward.1} parent=0 // pred_check_branch
    %38 = sbr.rel (0) target = $region45
  $region44: #{decoder_rnn_forward.1} parent=0 // pred_region
    _
  $region45: #{decoder_rnn_forward.1} parent=0 // pred_fallthru
    _
  // Predicated region
  $region46: #{decoder_rnn_forward.1} parent=0 // pred_check
    _
  $region47: #{decoder_rnn_forward.1} parent=0 // pred_check_branch
    %40 = sbr.rel (0) target = $region49
  $region48: #{decoder_rnn_forward.1} parent=0 // pred_region
    _
  $region49: #{decoder_rnn_forward.1} parent=0 // pred_fallthru
    _
  %v41 = vld [vmem:[%s0] sm:$0xff]
  %v42 = vld [vmem:[%s0 + $0x8] sm:$0xff]
  %v43 = vld [vmem:[%s0 + $0x10] sm:$0xff]
  %v44 = vld [vmem:[%s0 + $0x18] sm:$0xff]
  %v45 = vld [vmem:[%s0 + $0x20] sm:$0xff]
  %v46 = vld [vmem:[%s0 + $0x28] sm:$0xff]
  %v47 = vld [vmem:[%s0 + $0x30] sm:$0xff]
  %v48 = vld [vmem:[%s0 + $0x38] sm:$0xff]
  %v49 = vld [vmem:[%s2] sm:$0x7]
  %51 = vset.pattern.permute.xlu0 0
  %52 = vperm.xlu0 %51, %v41
  %v53 = vpop.permute.xlu0 %52
  %56 = vset.pattern.permute.xlu0 0
  %57 = vperm.xlu0 %56, %v42
  %v58 = vpop.permute.xlu0 %57
  %61 = vset.pattern.permute.xlu0 0
  %62 = vperm.xlu0 %61, %v43
  %v63 = vpop.permute.xlu0 %62
  %66 = vset.pattern.permute.xlu0 0
  %67 = vperm.xlu0 %66, %v44
  %v68 = vpop.permute.xlu0 %67
  %71 = vset.pattern.permute.xlu0 0
  %72 = vperm.xlu0 %71, %v45
  %v73 = vpop.permute.xlu0 %72
  %76 = vset.pattern.permute.xlu0 0
  %77 = vperm.xlu0 %76, %v46
  %v78 = vpop.permute.xlu0 %77
  %81 = vset.pattern.permute.xlu0 0
  %82 = vperm.xlu0 %81, %v47
  %v83 = vpop.permute.xlu0 %82
  %86 = vset.pattern.permute.xlu0 0
  %87 = vperm.xlu0 %86, %v48
  %v88 = vpop.permute.xlu0 %87
  %v91 = vlaneseq
  %v92 = vshrl.u32 %v91, 7
  %v93 = vsub.s32 0, %v92
  %v94 = vrot.slane %v49, %v93
  %v95 = vlaneseq
  %v96 = vshrl.u32 %v95, 7
  %v97 = vsub.s32 1, %v96
  %v98 = vrot.slane %v49, %v97
  %v99 = vlaneseq
  %v100 = vshrl.u32 %v99, 7
  %v101 = vsub.s32 2, %v100
  %v102 = vrot.slane %v49, %v101
  %v106 = vmul.f32 %v53, %v94
  %v107 = vmul.f32 %v53, %v98
  %v108 = vmul.f32 %v53, %v102
  %v109 = vmul.f32 %v58, %v94
  %v110 = vmul.f32 %v58, %v98
  %v111 = vmul.f32 %v58, %v102
  %v112 = vmul.f32 %v63, %v94
  %v113 = vmul.f32 %v63, %v98
  %v114 = vmul.f32 %v63, %v102
  %v115 = vmul.f32 %v68, %v94
  %v116 = vmul.f32 %v68, %v98
  %v117 = vmul.f32 %v68, %v102
  %v118 = vmul.f32 %v73, %v94
  %v119 = vmul.f32 %v73, %v98
  %v120 = vmul.f32 %v73, %v102
  %v121 = vmul.f32 %v78, %v94
  %v122 = vmul.f32 %v78, %v98
  %v123 = vmul.f32 %v78, %v102
  %v124 = vmul.f32 %v83, %v94
  %v125 = vmul.f32 %v83, %v98
  %v126 = vmul.f32 %v83, %v102
  %v127 = vmul.f32 %v88, %v94
  %v128 = vmul.f32 %v88, %v98
  %v129 = vmul.f32 %v88, %v102
  %v130 = vld [vmem:[%s4] sm:$0x7]
  %v132 = vlaneseq
  %v133 = vshrl.u32 %v132, 7
  %v134 = vsub.s32 0, %v133
  %v135 = vrot.slane %v130, %v134
  %v136 = vlaneseq
  %v137 = vshrl.u32 %v136, 7
  %v138 = vsub.s32 1, %v137
  %v139 = vrot.slane %v130, %v138
  %v140 = vlaneseq
  %v141 = vshrl.u32 %v140, 7
  %v142 = vsub.s32 2, %v141
  %v143 = vrot.slane %v130, %v142
  %v147 = vadd.f32 %v106, %v135
  %v148 = vadd.f32 %v107, %v139
  %v149 = vadd.f32 %v108, %v143
  %v150 = vadd.f32 %v109, %v135
  %v151 = vadd.f32 %v110, %v139
  %v152 = vadd.f32 %v111, %v143
  %v153 = vadd.f32 %v112, %v135
  %v154 = vadd.f32 %v113, %v139
  %v155 = vadd.f32 %v114, %v143
  %v156 = vadd.f32 %v115, %v135
  %v157 = vadd.f32 %v116, %v139
  %v158 = vadd.f32 %v117, %v143
  %v159 = vadd.f32 %v118, %v135
  %v160 = vadd.f32 %v119, %v139
  %v161 = vadd.f32 %v120, %v143
  %v162 = vadd.f32 %v121, %v135
  %v163 = vadd.f32 %v122, %v139
  %v164 = vadd.f32 %v123, %v143
  %v165 = vadd.f32 %v124, %v135
  %v166 = vadd.f32 %v125, %v139
  %v167 = vadd.f32 %v126, %v143
  %v168 = vadd.f32 %v127, %v135
  %v169 = vadd.f32 %v128, %v139
  %v170 = vadd.f32 %v129, %v143
  %171 = vst [vmem:[#allocation3] sm:$0xff] %v147
  %172 = vst [vmem:[#allocation3 + $0x8] sm:$0xff] %v148
  %173 = vst [vmem:[#allocation3 + $0x10] sm:$0xff] %v149
  %174 = vst [vmem:[#allocation3 + $0x18] sm:$0xff] %v150
  %175 = vst [vmem:[#allocation3 + $0x20] sm:$0xff] %v151
  %176 = vst [vmem:[#allocation3 + $0x28] sm:$0xff] %v152
  %177 = vst [vmem:[#allocation3 + $0x30] sm:$0xff] %v153
  %178 = vst [vmem:[#allocation3 + $0x38] sm:$0xff] %v154
  %179 = vst [vmem:[#allocation3 + $0x40] sm:$0xff] %v155
  %180 = vst [vmem:[#allocation3 + $0x48] sm:$0xff] %v156
  %181 = vst [vmem:[#allocation3 + $0x50] sm:$0xff] %v157
  %182 = vst [vmem:[#allocation3 + $0x58] sm:$0xff] %v158
  %183 = vst [vmem:[#allocation3 + $0x60] sm:$0xff] %v159
  %184 = vst [vmem:[#allocation3 + $0x68] sm:$0xff] %v160
  %185 = vst [vmem:[#allocation3 + $0x70] sm:$0xff] %v161
  %186 = vst [vmem:[#allocation3 + $0x78] sm:$0xff] %v162
  %187 = vst [vmem:[#allocation3 + $0x80] sm:$0xff] %v163
  %188 = vst [vmem:[#allocation3 + $0x88] sm:$0xff] %v164
  %189 = vst [vmem:[#allocation3 + $0x90] sm:$0xff] %v165
  %190 = vst [vmem:[#allocation3 + $0x98] sm:$0xff] %v166
  %191 = vst [vmem:[#allocation3 + $0xa0] sm:$0xff] %v167
  %192 = vst [vmem:[#allocation3 + $0xa8] sm:$0xff] %v168
  %193 = vst [vmem:[#allocation3 + $0xb0] sm:$0xff] %v169
  %194 = vst [vmem:[#allocation3 + $0xb8] sm:$0xff] %v170
  %v195 = vld [vmem:[%s5] sm:$0x1]
  %v197 = vlaneseq
  %v198 = vshrl.u32 %v197, 7
  %v199 = vsub.s32 0, %v198
  %v200 = vrot.slane %v195, %v199
  %v202 = vld [vmem:[%s1] sm:$0xff]
  %s203 = smul.u32 0, 3
  %s204 = smul.addr %s203, 8
  %s205 = scalar_lea.vmem [#allocation3], %s204
  %v206 = vld [vmem:[%s205] sm:$0xff]
  %v207 = vld [vmem:[%s205 + $0x8] sm:$0xff]
  %v208 = vld [vmem:[%s205 + $0x10] sm:$0xff]
  %v209 = vld [vmem:[%s3] sm:$0xff]
  %v210 = vld [vmem:[%s3 + $0x8] sm:$0xff]
  %v211 = vld [vmem:[%s3 + $0x10] sm:$0xff]
  %v212 = vld [vmem:[%s3 + $0x18] sm:$0xff]
  %v213 = vld [vmem:[%s3 + $0x20] sm:$0xff]
  %v214 = vld [vmem:[%s3 + $0x28] sm:$0xff]
  %v215 = vld [vmem:[%s3 + $0x30] sm:$0xff]
  %v216 = vld [vmem:[%s3 + $0x38] sm:$0xff]
  %v217 = vld [vmem:[%s3 + $0x40] sm:$0xff]
  %v218 = vld [vmem:[%s3 + $0x48] sm:$0xff]
  %v219 = vld [vmem:[%s3 + $0x50] sm:$0xff]
  %v220 = vld [vmem:[%s3 + $0x58] sm:$0xff]
  %v221 = vld [vmem:[%s3 + $0x60] sm:$0xff]
  %v222 = vld [vmem:[%s3 + $0x68] sm:$0xff]
  %v223 = vld [vmem:[%s3 + $0x70] sm:$0xff]
  %v224 = vld [vmem:[%s3 + $0x78] sm:$0xff]
  %v225 = vld [vmem:[%s3 + $0x80] sm:$0xff]
  %v226 = vld [vmem:[%s3 + $0x88] sm:$0xff]
  %v227 = vld [vmem:[%s3 + $0x90] sm:$0xff]
  %v228 = vld [vmem:[%s3 + $0x98] sm:$0xff]
  %v229 = vld [vmem:[%s3 + $0xa0] sm:$0xff]
  %v230 = vld [vmem:[%s3 + $0xa8] sm:$0xff]
  %v231 = vld [vmem:[%s3 + $0xb0] sm:$0xff]
  %v232 = vld [vmem:[%s3 + $0xb8] sm:$0xff]
  %v233 = vld [vmem:[%s3 + $0xc0] sm:$0xff]
  %v234 = vld [vmem:[%s3 + $0xc8] sm:$0xff]
  %v235 = vld [vmem:[%s3 + $0xd0] sm:$0xff]
  %v236 = vld [vmem:[%s3 + $0xd8] sm:$0xff]
  %v237 = vld [vmem:[%s3 + $0xe0] sm:$0xff]
  %v238 = vld [vmem:[%s3 + $0xe8] sm:$0xff]
  %v239 = vld [vmem:[%s3 + $0xf0] sm:$0xff]
  %v240 = vld [vmem:[%s3 + $0xf8] sm:$0xff]
  %v241 = vld [vmem:[%s3 + $0x100] sm:$0xff]
  %v242 = vld [vmem:[%s3 + $0x108] sm:$0xff]
  %v243 = vld [vmem:[%s3 + $0x110] sm:$0xff]
  %v244 = vld [vmem:[%s3 + $0x118] sm:$0xff]
  %v245 = vld [vmem:[%s3 + $0x120] sm:$0xff]
  %v246 = vld [vmem:[%s3 + $0x128] sm:$0xff]
  %v247 = vld [vmem:[%s3 + $0x130] sm:$0xff]
  %v248 = vld [vmem:[%s3 + $0x138] sm:$0xff]
  %v249 = vld [vmem:[%s3 + $0x140] sm:$0xff]
  %v250 = vld [vmem:[%s3 + $0x148] sm:$0xff]
  %v251 = vld [vmem:[%s3 + $0x150] sm:$0xff]
  %v252 = vld [vmem:[%s3 + $0x158] sm:$0xff]
  %v253 = vld [vmem:[%s3 + $0x160] sm:$0xff]
  %v254 = vld [vmem:[%s3 + $0x168] sm:$0xff]
  %v255 = vld [vmem:[%s3 + $0x170] sm:$0xff]
  %v256 = vld [vmem:[%s3 + $0x178] sm:$0xff]
  %257 = vmatprep.subr.mxu0 %v210
  %258 = vmatpush1.msra.mxu0 %v209
  %259 = vmatprep.subr.mxu0 %v213
  %260 = vmatpush1.msra.mxu0 %v212
  %261 = vmatprep.subr.mxu0 %v216
  %262 = vmatpush1.msra.mxu0 %v215
  %263 = vmatprep.subr.mxu0 %v219
  %264 = vmatpush1.msra.mxu0 %v218
  %265 = vmatprep.subr.mxu0 %v222
  %266 = vmatpush1.msra.mxu0 %v221
  %267 = vmatprep.subr.mxu0 %v225
  %268 = vmatpush1.msra.mxu0 %v224
  %269 = vmatprep.subr.mxu0 %v228
  %270 = vmatpush1.msra.mxu0 %v227
  %271 = vmatprep.subr.mxu0 %v231
  %272 = vmatpush1.msra.mxu0 %v230
  %273 = vmatprep.subr.mxu0 %v234
  %274 = vmatpush1.msra.mxu0 %v233
  %275 = vmatprep.subr.mxu0 %v237
  %276 = vmatpush1.msra.mxu0 %v236
  %277 = vmatprep.subr.mxu0 %v240
  %278 = vmatpush1.msra.mxu0 %v239
  %279 = vmatprep.subr.mxu0 %v243
  %280 = vmatpush1.msra.mxu0 %v242
  %281 = vmatprep.subr.mxu0 %v246
  %282 = vmatpush1.msra.mxu0 %v245
  %283 = vmatprep.subr.mxu0 %v249
  %284 = vmatpush1.msra.mxu0 %v248
  %285 = vmatprep.subr.mxu0 %v252
  %286 = vmatpush1.msra.mxu0 %v251
  %287 = vmatprep.subr.mxu0 %v255
  %288 = vmatpush1.msra.mxu0 %v254
  %289 = vmatprep.subr.mxu0 0.0
  %290 = vmatpush1.msra.mxu0 0.0
  %291 = vmatprep.subr.mxu0 0.0
  %292 = vmatpush1.msra.mxu0 0.0
  %293 = vmatprep.subr.mxu0 0.0
  %294 = vmatpush1.msra.mxu0 0.0
  %295 = vmatprep.subr.mxu0 0.0
  %296 = vmatpush1.msra.mxu0 0.0
  %297 = vmatprep.subr.mxu0 0.0
  %298 = vmatpush1.msra.mxu0 0.0
  %299 = vmatprep.subr.mxu0 0.0
  %300 = vmatpush1.msra.mxu0 0.0
  %301 = vmatprep.subr.mxu0 0.0
  %302 = vmatpush1.msra.mxu0 0.0
  %303 = vmatprep.subr.mxu0 0.0
  %304 = vmatpush1.msra.mxu0 0.0
  %305 = vmatprep.subr.mxu0 0.0
  %306 = vmatpush1.msra.mxu0 0.0
  %307 = vmatprep.subr.mxu0 0.0
  %308 = vmatpush1.msra.mxu0 0.0
  %309 = vmatprep.subr.mxu0 0.0
  %310 = vmatpush1.msra.mxu0 0.0
  %311 = vmatprep.subr.mxu0 0.0
  %312 = vmatpush1.msra.mxu0 0.0
  %313 = vmatprep.subr.mxu0 0.0
  %314 = vmatpush1.msra.mxu0 0.0
  %315 = vmatprep.subr.mxu0 0.0
  %316 = vmatpush1.msra.mxu0 0.0
  %317 = vmatprep.subr.mxu0 0.0
  %318 = vmatpush1.msra.mxu0 0.0
  %319 = vmatprep.subr.mxu0 0.0
  %320 = vmatpush1.msra.mxu0 0.0
  %321 = vmatprep.mubr.f32.mxu0 0.0
  %322 = vmatmul.mubr.f32.gmra.mrb[0].mxu0 %v202
  %v323 = vpop.f32.mrb[0].mxu0
  %v324 = vadd.f32 0.0, %v323
  %v325 = vpop.f32.mrb[0].mxu0
  %v326 = vadd.f32 0.0, %v325
  %327 = vdwg.mxu0
  %328 = vmatprep.subr.mxu0 0.0
  %329 = vmatpush1.msra.mxu0 %v211
  %330 = vmatprep.subr.mxu0 0.0
  %331 = vmatpush1.msra.mxu0 %v214
  %332 = vmatprep.subr.mxu0 0.0
  %333 = vmatpush1.msra.mxu0 %v217
  %334 = vmatprep.subr.mxu0 0.0
  %335 = vmatpush1.msra.mxu0 %v220
  %336 = vmatprep.subr.mxu0 0.0
  %337 = vmatpush1.msra.mxu0 %v223
  %338 = vmatprep.subr.mxu0 0.0
  %339 = vmatpush1.msra.mxu0 %v226
  %340 = vmatprep.subr.mxu0 0.0
  %341 = vmatpush1.msra.mxu0 %v229
  %342 = vmatprep.subr.mxu0 0.0
  %343 = vmatpush1.msra.mxu0 %v232
  %344 = vmatprep.subr.mxu0 0.0
  %345 = vmatpush1.msra.mxu0 %v235
  %346 = vmatprep.subr.mxu0 0.0
  %347 = vmatpush1.msra.mxu0 %v238
  %348 = vmatprep.subr.mxu0 0.0
  %349 = vmatpush1.msra.mxu0 %v241
  %350 = vmatprep.subr.mxu0 0.0
  %351 = vmatpush1.msra.mxu0 %v244
  %352 = vmatprep.subr.mxu0 0.0
  %353 = vmatpush1.msra.mxu0 %v247
  %354 = vmatprep.subr.mxu0 0.0
  %355 = vmatpush1.msra.mxu0 %v250
  %356 = vmatprep.subr.mxu0 0.0
  %357 = vmatpush1.msra.mxu0 %v253
  %358 = vmatprep.subr.mxu0 0.0
  %359 = vmatpush1.msra.mxu0 %v256
  %360 = vmatprep.subr.mxu0 0.0
  %361 = vmatpush1.msra.mxu0 0.0
  %362 = vmatprep.subr.mxu0 0.0
  %363 = vmatpush1.msra.mxu0 0.0
  %364 = vmatprep.subr.mxu0 0.0
  %365 = vmatpush1.msra.mxu0 0.0
  %366 = vmatprep.subr.mxu0 0.0
  %367 = vmatpush1.msra.mxu0 0.0
  %368 = vmatprep.subr.mxu0 0.0
  %369 = vmatpush1.msra.mxu0 0.0
  %370 = vmatprep.subr.mxu0 0.0
  %371 = vmatpush1.msra.mxu0 0.0
  %372 = vmatprep.subr.mxu0 0.0
  %373 = vmatpush1.msra.mxu0 0.0
  %374 = vmatprep.subr.mxu0 0.0
  %375 = vmatpush1.msra.mxu0 0.0
  %376 = vmatprep.subr.mxu0 0.0
  %377 = vmatpush1.msra.mxu0 0.0
  %378 = vmatprep.subr.mxu0 0.0
  %379 = vmatpush1.msra.mxu0 0.0
  %380 = vmatprep.subr.mxu0 0.0
  %381 = vmatpush1.msra.mxu0 0.0
  %382 = vmatprep.subr.mxu0 0.0
  %383 = vmatpush1.msra.mxu0 0.0
  %384 = vmatprep.subr.mxu0 0.0
  %385 = vmatpush1.msra.mxu0 0.0
  %386 = vmatprep.subr.mxu0 0.0
  %387 = vmatpush1.msra.mxu0 0.0
  %388 = vmatprep.subr.mxu0 0.0
  %389 = vmatpush1.msra.mxu0 0.0
  %390 = vmatprep.subr.mxu0 0.0
  %391 = vmatpush1.msra.mxu0 0.0
  %392 = vmatprep.mubr.f32.mxu0 0.0
  %393 = vmatmul.mubr.f32.gmra.mrb[0].mxu0 %v202
  %v394 = vpop.f32.mrb[0].mxu0
  %v395 = vadd.f32 0.0, %v394
  %v396 = vpop.f32.mrb[0].mxu0
  %397 = vdwg.mxu0
  %v398 = vadd.f32 %v206, %v324
  %v399 = vxor.u32 %v398, 2147483648
  %v400 = vmul.f32 %v399, 1.442695
  %v401 = vpow.pop %v400
  %v402 = vadd.f32 %v401, 1.0
  %v403 = vrcp.pop %v402
  %v404 = vmul.f32 1.0, %v403
  %v405 = vadd.f32 %v207, %v326
  %v406 = vxor.u32 %v405, 2147483648
  %v407 = vmul.f32 %v406, 1.442695
  %v408 = vpow.pop %v407
  %v409 = vadd.f32 %v408, 1.0
  %v410 = vrcp.pop %v409
  %v411 = vmul.f32 1.0, %v410
  %v412 = vadd.f32 %v395, %v200
  %v413 = vmul.f32 %v404, %v412
  %v414 = vadd.f32 %v208, %v413
  %v415 = vtanh.pop %v414
  %v416 = vsub.f32 1.0, %v411
  %v417 = vmul.f32 %v416, %v415
  %v418 = vmul.f32 %v411, %v202
  %v419 = vadd.f32 %v417, %v418
  %420 = vst [vmem:[#allocation2] sm:$0xff] %v419
  %s421 = smul.u32 1, 3
  %s422 = smul.addr %s421, 8
  %s423 = scalar_lea.vmem [#allocation3], %s422
  %v424 = vld [vmem:[%s423] sm:$0xff]
  %v425 = vld [vmem:[%s423 + $0x8] sm:$0xff]
  %v426 = vld [vmem:[%s423 + $0x10] sm:$0xff]
  %v427 = vld [vmem:[%s3] sm:$0xff]
  %v428 = vld [vmem:[%s3 + $0x8] sm:$0xff]
  %v429 = vld [vmem:[%s3 + $0x10] sm:$0xff]
  %v430 = vld [vmem:[%s3 + $0x18] sm:$0xff]
  %v431 = vld [vmem:[%s3 + $0x20] sm:$0xff]
  %v432 = vld [vmem:[%s3 + $0x28] sm:$0xff]
  %v433 = vld [vmem:[%s3 + $0x30] sm:$0xff]
  %v434 = vld [vmem:[%s3 + $0x38] sm:$0xff]
  %v435 = vld [vmem:[%s3 + $0x40] sm:$0xff]
  %v436 = vld [vmem:[%s3 + $0x48] sm:$0xff]
  %v437 = vld [vmem:[%s3 + $0x50] sm:$0xff]
  %v438 = vld [vmem:[%s3 + $0x58] sm:$0xff]
  %v439 = vld [vmem:[%s3 + $0x60] sm:$0xff]
  %v440 = vld [vmem:[%s3 + $0x68] sm:$0xff]
  %v441 = vld [vmem:[%s3 + $0x70] sm:$0xff]
  %v442 = vld [vmem:[%s3 + $0x78] sm:$0xff]
  %v443 = vld [vmem:[%s3 + $0x80] sm:$0xff]
  %v444 = vld [vmem:[%s3 + $0x88] sm:$0xff]
  %v445 = vld [vmem:[%s3 + $0x90] sm:$0xff]
  %v446 = vld [vmem:[%s3 + $0x98] sm:$0xff]
  %v447 = vld [vmem:[%s3 + $0xa0] sm:$0xff]
  %v448 = vld [vmem:[%s3 + $0xa8] sm:$0xff]
  %v449 = vld [vmem:[%s3 + $0xb0] sm:$0xff]
  %v450 = vld [vmem:[%s3 + $0xb8] sm:$0xff]
  %v451 = vld [vmem:[%s3 + $0xc0] sm:$0xff]
  %v452 = vld [vmem:[%s3 + $0xc8] sm:$0xff]
  %v453 = vld [vmem:[%s3 + $0xd0] sm:$0xff]
  %v454 = vld [vmem:[%s3 + $0xd8] sm:$0xff]
  %v455 = vld [vmem:[%s3 + $0xe0] sm:$0xff]
  %v456 = vld [vmem:[%s3 + $0xe8] sm:$0xff]
  %v457 = vld [vmem:[%s3 + $0xf0] sm:$0xff]
  %v458 = vld [vmem:[%s3 + $0xf8] sm:$0xff]
  %v459 = vld [vmem:[%s3 + $0x100] sm:$0xff]
  %v460 = vld [vmem:[%s3 + $0x108] sm:$0xff]
  %v461 = vld [vmem:[%s3 + $0x110] sm:$0xff]
  %v462 = vld [vmem:[%s3 + $0x118] sm:$0xff]
  %v463 = vld [vmem:[%s3 + $0x120] sm:$0xff]
  %v464 = vld [vmem:[%s3 + $0x128] sm:$0xff]
  %v465 = vld [vmem:[%s3 + $0x130] sm:$0xff]
  %v466 = vld [vmem:[%s3 + $0x138] sm:$0xff]
  %v467 = vld [vmem:[%s3 + $0x140] sm:$0xff]
  %v468 = vld [vmem:[%s3 + $0x148] sm:$0xff]
  %v469 = vld [vmem:[%s3 + $0x150] sm:$0xff]
  %v470 = vld [vmem:[%s3 + $0x158] sm:$0xff]
  %v471 = vld [vmem:[%s3 + $0x160] sm:$0xff]
  %v472 = vld [vmem:[%s3 + $0x168] sm:$0xff]
  %v473 = vld [vmem:[%s3 + $0x170] sm:$0xff]
  %v474 = vld [vmem:[%s3 + $0x178] sm:$0xff]
  %475 = vmatprep.subr.mxu0 %v428
  %476 = vmatpush1.msra.mxu0 %v427
  %477 = vmatprep.subr.mxu0 %v431
  %478 = vmatpush1.msra.mxu0 %v430
  %479 = vmatprep.subr.mxu0 %v434
  %480 = vmatpush1.msra.mxu0 %v433
  %481 = vmatprep.subr.mxu0 %v437
  %482 = vmatpush1.msra.mxu0 %v436
  %483 = vmatprep.subr.mxu0 %v440
  %484 = vmatpush1.msra.mxu0 %v439
  %485 = vmatprep.subr.mxu0 %v443
  %486 = vmatpush1.msra.mxu0 %v442
  %487 = vmatprep.subr.mxu0 %v446
  %488 = vmatpush1.msra.mxu0 %v445
  %489 = vmatprep.subr.mxu0 %v449
  %490 = vmatpush1.msra.mxu0 %v448
  %491 = vmatprep.subr.mxu0 %v452
  %492 = vmatpush1.msra.mxu0 %v451
  %493 = vmatprep.subr.mxu0 %v455
  %494 = vmatpush1.msra.mxu0 %v454
  %495 = vmatprep.subr.mxu0 %v458
  %496 = vmatpush1.msra.mxu0 %v457
  %497 = vmatprep.subr.mxu0 %v461
  %498 = vmatpush1.msra.mxu0 %v460
  %499 = vmatprep.subr.mxu0 %v464
  %500 = vmatpush1.msra.mxu0 %v463
  %501 = vmatprep.subr.mxu0 %v467
  %502 = vmatpush1.msra.mxu0 %v466
  %503 = vmatprep.subr.mxu0 %v470
  %504 = vmatpush1.msra.mxu0 %v469
  %505 = vmatprep.subr.mxu0 %v473
  %506 = vmatpush1.msra.mxu0 %v472
  %507 = vmatprep.subr.mxu0 0.0
  %508 = vmatpush1.msra.mxu0 0.0
  %509 = vmatprep.subr.mxu0 0.0
  %510 = vmatpush1.msra.mxu0 0.0
  %511 = vmatprep.subr.mxu0 0.0
  %512 = vmatpush1.msra.mxu0 0.0
  %513 = vmatprep.subr.mxu0 0.0
  %514 = vmatpush1.msra.mxu0 0.0
  %515 = vmatprep.subr.mxu0 0.0
  %516 = vmatpush1.msra.mxu0 0.0
  %517 = vmatprep.subr.mxu0 0.0
  %518 = vmatpush1.msra.mxu0 0.0
  %519 = vmatprep.subr.mxu0 0.0
  %520 = vmatpush1.msra.mxu0 0.0
  %521 = vmatprep.subr.mxu0 0.0
  %522 = vmatpush1.msra.mxu0 0.0
  %523 = vmatprep.subr.mxu0 0.0
  %524 = vmatpush1.msra.mxu0 0.0
  %525 = vmatprep.subr.mxu0 0.0
  %526 = vmatpush1.msra.mxu0 0.0
  %527 = vmatprep.subr.mxu0 0.0
  %528 = vmatpush1.msra.mxu0 0.0
  %529 = vmatprep.subr.mxu0 0.0
  %530 = vmatpush1.msra.mxu0 0.0
  %531 = vmatprep.subr.mxu0 0.0
  %532 = vmatpush1.msra.mxu0 0.0
  %533 = vmatprep.subr.mxu0 0.0
  %534 = vmatpush1.msra.mxu0 0.0
  %535 = vmatprep.subr.mxu0 0.0
  %536 = vmatpush1.msra.mxu0 0.0
  %537 = vmatprep.subr.mxu0 0.0
  %538 = vmatpush1.msra.mxu0 0.0
  %539 = vmatprep.mubr.f32.mxu0 0.0
  %540 = vmatmul.mubr.f32.gmra.mrb[0].mxu0 %v419
  %v541 = vpop.f32.mrb[0].mxu0
  %v542 = vadd.f32 0.0, %v541
  %v543 = vpop.f32.mrb[0].mxu0
  %v544 = vadd.f32 0.0, %v543
  %545 = vdwg.mxu0
  %546 = vmatprep.subr.mxu0 0.0
  %547 = vmatpush1.msra.mxu0 %v429
  %548 = vmatprep.subr.mxu0 0.0
  %549 = vmatpush1.msra.mxu0 %v432
  %550 = vmatprep.subr.mxu0 0.0
  %551 = vmatpush1.msra.mxu0 %v435
  %552 = vmatprep.subr.mxu0 0.0
  %553 = vmatpush1.msra.mxu0 %v438
  %554 = vmatprep.subr.mxu0 0.0
  %555 = vmatpush1.msra.mxu0 %v441
  %556 = vmatprep.subr.mxu0 0.0
  %557 = vmatpush1.msra.mxu0 %v444
  %558 = vmatprep.subr.mxu0 0.0
  %559 = vmatpush1.msra.mxu0 %v447
  %560 = vmatprep.subr.mxu0 0.0
  %561 = vmatpush1.msra.mxu0 %v450
  %562 = vmatprep.subr.mxu0 0.0
  %563 = vmatpush1.msra.mxu0 %v453
  %564 = vmatprep.subr.mxu0 0.0
  %565 = vmatpush1.msra.mxu0 %v456
  %566 = vmatprep.subr.mxu0 0.0
  %567 = vmatpush1.msra.mxu0 %v459
  %568 = vmatprep.subr.mxu0 0.0
  %569 = vmatpush1.msra.mxu0 %v462
  %570 = vmatprep.subr.mxu0 0.0
  %571 = vmatpush1.msra.mxu0 %v465
  %572 = vmatprep.subr.mxu0 0.0
  %573 = vmatpush1.msra.mxu0 %v468
  %574 = vmatprep.subr.mxu0 0.0
  %575 = vmatpush1.msra.mxu0 %v471
  %576 = vmatprep.subr.mxu0 0.0
  %577 = vmatpush1.msra.mxu0 %v474
  %578 = vmatprep.subr.mxu0 0.0
  %579 = vmatpush1.msra.mxu0 0.0
  %580 = vmatprep.subr.mxu0 0.0
  %581 = vmatpush1.msra.mxu0 0.0
  %582 = vmatprep.subr.mxu0 0.0
  %583 = vmatpush1.msra.mxu0 0.0
  %584 = vmatprep.subr.mxu0 0.0
  %585 = vmatpush1.msra.mxu0 0.0
  %586 = vmatprep.subr.mxu0 0.0
  %587 = vmatpush1.msra.mxu0 0.0
  %588 = vmatprep.subr.mxu0 0.0
  %589 = vmatpush1.msra.mxu0 0.0
  %590 = vmatprep.subr.mxu0 0.0
  %591 = vmatpush1.msra.mxu0 0.0
  %592 = vmatprep.subr.mxu0 0.0
  %593 = vmatpush1.msra.mxu0 0.0
  %594 = vmatprep.subr.mxu0 0.0
  %595 = vmatpush1.msra.mxu0 0.0
  %596 = vmatprep.subr.mxu0 0.0
  %597 = vmatpush1.msra.mxu0 0.0
  %598 = vmatprep.subr.mxu0 0.0
  %599 = vmatpush1.msra.mxu0 0.0
  %600 = vmatprep.subr.mxu0 0.0
  %601 = vmatpush1.msra.mxu0 0.0
  %602 = vmatprep.subr.mxu0 0.0
  %603 = vmatpush1.msra.mxu0 0.0
  %604 = vmatprep.subr.mxu0 0.0
  %605 = vmatpush1.msra.mxu0 0.0
  %606 = vmatprep.subr.mxu0 0.0
  %607 = vmatpush1.msra.mxu0 0.0
  %608 = vmatprep.subr.mxu0 0.0
  %609 = vmatpush1.msra.mxu0 0.0
  %610 = vmatprep.mubr.f32.mxu0 0.0
  %611 = vmatmul.mubr.f32.gmra.mrb[0].mxu0 %v419
  %v612 = vpop.f32.mrb[0].mxu0
  %v613 = vadd.f32 0.0, %v612
  %v614 = vpop.f32.mrb[0].mxu0
  %615 = vdwg.mxu0
  %v616 = vadd.f32 %v424, %v542
  %v617 = vxor.u32 %v616, 2147483648
  %v618 = vmul.f32 %v617, 1.442695
  %v619 = vpow.pop %v618
  %v620 = vadd.f32 %v619, 1.0
  %v621 = vrcp.pop %v620
  %v622 = vmul.f32 1.0, %v621
  %v623 = vadd.f32 %v425, %v544
  %v624 = vxor.u32 %v623, 2147483648
  %v625 = vmul.f32 %v624, 1.442695
  %v626 = vpow.pop %v625
  %v627 = vadd.f32 %v626, 1.0
  %v628 = vrcp.pop %v627
  %v629 = vmul.f32 1.0, %v628
  %v630 = vadd.f32 %v613, %v200
  %v631 = vmul.f32 %v622, %v630
  %v632 = vadd.f32 %v426, %v631
  %v633 = vtanh.pop %v632
  %v634 = vsub.f32 1.0, %v629
  %v635 = vmul.f32 %v634, %v633
  %v636 = vmul.f32 %v629, %v419
  %v637 = vadd.f32 %v635, %v636
  %s638 = scalar_lea.vmem [#allocation2], 8
  %639 = vst [vmem:[%s638] sm:$0xff] %v637
  %s640 = smul.u32 2, 3
  %s641 = smul.addr %s640, 8
  %s642 = scalar_lea.vmem [#allocation3], %s641
  %v643 = vld [vmem:[%s642] sm:$0xff]
  %v644 = vld [vmem:[%s642 + $0x8] sm:$0xff]
  %v645 = vld [vmem:[%s642 + $0x10] sm:$0xff]
  %v646 = vld [vmem:[%s3] sm:$0xff]
  %v647 = vld [vmem:[%s3 + $0x8] sm:$0xff]
  %v648 = vld [vmem:[%s3 + $0x10] sm:$0xff]
  %v649 = vld [vmem:[%s3 + $0x18] sm:$0xff]
  %v650 = vld [vmem:[%s3 + $0x20] sm:$0xff]
  %v651 = vld [vmem:[%s3 + $0x28] sm:$0xff]
  %v652 = vld [vmem:[%s3 + $0x30] sm:$0xff]
  %v653 = vld [vmem:[%s3 + $0x38] sm:$0xff]
  %v654 = vld [vmem:[%s3 + $0x40] sm:$0xff]
  %v655 = vld [vmem:[%s3 + $0x48] sm:$0xff]
  %v656 = vld [vmem:[%s3 + $0x50] sm:$0xff]
  %v657 = vld [vmem:[%s3 + $0x58] sm:$0xff]
  %v658 = vld [vmem:[%s3 + $0x60] sm:$0xff]
  %v659 = vld [vmem:[%s3 + $0x68] sm:$0xff]
  %v660 = vld [vmem:[%s3 + $0x70] sm:$0xff]
  %v661 = vld [vmem:[%s3 + $0x78] sm:$0xff]
  %v662 = vld [vmem:[%s3 + $0x80] sm:$0xff]
  %v663 = vld [vmem:[%s3 + $0x88] sm:$0xff]
  %v664 = vld [vmem:[%s3 + $0x90] sm:$0xff]
  %v665 = vld [vmem:[%s3 + $0x98] sm:$0xff]
  %v666 = vld [vmem:[%s3 + $0xa0] sm:$0xff]
  %v667 = vld [vmem:[%s3 + $0xa8] sm:$0xff]
  %v668 = vld [vmem:[%s3 + $0xb0] sm:$0xff]
  %v669 = vld [vmem:[%s3 + $0xb8] sm:$0xff]
  %v670 = vld [vmem:[%s3 + $0xc0] sm:$0xff]
  %v671 = vld [vmem:[%s3 + $0xc8] sm:$0xff]
  %v672 = vld [vmem:[%s3 + $0xd0] sm:$0xff]
  %v673 = vld [vmem:[%s3 + $0xd8] sm:$0xff]
  %v674 = vld [vmem:[%s3 + $0xe0] sm:$0xff]
  %v675 = vld [vmem:[%s3 + $0xe8] sm:$0xff]
  %v676 = vld [vmem:[%s3 + $0xf0] sm:$0xff]
  %v677 = vld [vmem:[%s3 + $0xf8] sm:$0xff]
  %v678 = vld [vmem:[%s3 + $0x100] sm:$0xff]
  %v679 = vld [vmem:[%s3 + $0x108] sm:$0xff]
  %v680 = vld [vmem:[%s3 + $0x110] sm:$0xff]
  %v681 = vld [vmem:[%s3 + $0x118] sm:$0xff]
  %v682 = vld [vmem:[%s3 + $0x120] sm:$0xff]
  %v683 = vld [vmem:[%s3 + $0x128] sm:$0xff]
  %v684 = vld [vmem:[%s3 + $0x130] sm:$0xff]
  %v685 = vld [vmem:[%s3 + $0x138] sm:$0xff]
  %v686 = vld [vmem:[%s3 + $0x140] sm:$0xff]
  %v687 = vld [vmem:[%s3 + $0x148] sm:$0xff]
  %v688 = vld [vmem:[%s3 + $0x150] sm:$0xff]
  %v689 = vld [vmem:[%s3 + $0x158] sm:$0xff]
  %v690 = vld [vmem:[%s3 + $0x160] sm:$0xff]
  %v691 = vld [vmem:[%s3 + $0x168] sm:$0xff]
  %v692 = vld [vmem:[%s3 + $0x170] sm:$0xff]
  %v693 = vld [vmem:[%s3 + $0x178] sm:$0xff]
  %694 = vmatprep.subr.mxu0 %v647
  %695 = vmatpush1.msra.mxu0 %v646
  %696 = vmatprep.subr.mxu0 %v650
  %697 = vmatpush1.msra.mxu0 %v649
  %698 = vmatprep.subr.mxu0 %v653
  %699 = vmatpush1.msra.mxu0 %v652
  %700 = vmatprep.subr.mxu0 %v656
  %701 = vmatpush1.msra.mxu0 %v655
  %702 = vmatprep.subr.mxu0 %v659
  %703 = vmatpush1.msra.mxu0 %v658
  %704 = vmatprep.subr.mxu0 %v662
  %705 = vmatpush1.msra.mxu0 %v661
  %706 = vmatprep.subr.mxu0 %v665
  %707 = vmatpush1.msra.mxu0 %v664
  %708 = vmatprep.subr.mxu0 %v668
  %709 = vmatpush1.msra.mxu0 %v667
  %710 = vmatprep.subr.mxu0 %v671
  %711 = vmatpush1.msra.mxu0 %v670
  %712 = vmatprep.subr.mxu0 %v674
  %713 = vmatpush1.msra.mxu0 %v673
  %714 = vmatprep.subr.mxu0 %v677
  %715 = vmatpush1.msra.mxu0 %v676
  %716 = vmatprep.subr.mxu0 %v680
  %717 = vmatpush1.msra.mxu0 %v679
  %718 = vmatprep.subr.mxu0 %v683
  %719 = vmatpush1.msra.mxu0 %v682
  %720 = vmatprep.subr.mxu0 %v686
  %721 = vmatpush1.msra.mxu0 %v685
  %722 = vmatprep.subr.mxu0 %v689
  %723 = vmatpush1.msra.mxu0 %v688
  %724 = vmatprep.subr.mxu0 %v692
  %725 = vmatpush1.msra.mxu0 %v691
  %726 = vmatprep.subr.mxu0 0.0
  %727 = vmatpush1.msra.mxu0 0.0
  %728 = vmatprep.subr.mxu0 0.0
  %729 = vmatpush1.msra.mxu0 0.0
  %730 = vmatprep.subr.mxu0 0.0
  %731 = vmatpush1.msra.mxu0 0.0
  %732 = vmatprep.subr.mxu0 0.0
  %733 = vmatpush1.msra.mxu0 0.0
  %734 = vmatprep.subr.mxu0 0.0
  %735 = vmatpush1.msra.mxu0 0.0
  %736 = vmatprep.subr.mxu0 0.0
  %737 = vmatpush1.msra.mxu0 0.0
  %738 = vmatprep.subr.mxu0 0.0
  %739 = vmatpush1.msra.mxu0 0.0
  %740 = vmatprep.subr.mxu0 0.0
  %741 = vmatpush1.msra.mxu0 0.0
  %742 = vmatprep.subr.mxu0 0.0
  %743 = vmatpush1.msra.mxu0 0.0
  %744 = vmatprep.subr.mxu0 0.0
  %745 = vmatpush1.msra.mxu0 0.0
  %746 = vmatprep.subr.mxu0 0.0
  %747 = vmatpush1.msra.mxu0 0.0
  %748 = vmatprep.subr.mxu0 0.0
  %749 = vmatpush1.msra.mxu0 0.0
  %750 = vmatprep.subr.mxu0 0.0
  %751 = vmatpush1.msra.mxu0 0.0
  %752 = vmatprep.subr.mxu0 0.0
  %753 = vmatpush1.msra.mxu0 0.0
  %754 = vmatprep.subr.mxu0 0.0
  %755 = vmatpush1.msra.mxu0 0.0
  %756 = vmatprep.subr.mxu0 0.0
  %757 = vmatpush1.msra.mxu0 0.0
  %758 = vmatprep.mubr.f32.mxu0 0.0
  %759 = vmatmul.mubr.f32.gmra.mrb[0].mxu0 %v637
  %v760 = vpop.f32.mrb[0].mxu0
  %v761 = vadd.f32 0.0, %v760
  %v762 = vpop.f32.mrb[0].mxu0
  %v763 = vadd.f32 0.0, %v762
  %764 = vdwg.mxu0
  %765 = vmatprep.subr.mxu0 0.0
  %766 = vmatpush1.msra.mxu0 %v648
  %767 = vmatprep.subr.mxu0 0.0
  %768 = vmatpush1.msra.mxu0 %v651
  %769 = vmatprep.subr.mxu0 0.0
  %770 = vmatpush1.msra.mxu0 %v654
  %771 = vmatprep.subr.mxu0 0.0
  %772 = vmatpush1.msra.mxu0 %v657
  %773 = vmatprep.subr.mxu0 0.0
  %774 = vmatpush1.msra.mxu0 %v660
  %775 = vmatprep.subr.mxu0 0.0
  %776 = vmatpush1.msra.mxu0 %v663
  %777 = vmatprep.subr.mxu0 0.0
  %778 = vmatpush1.msra.mxu0 %v666
  %779 = vmatprep.subr.mxu0 0.0
  %780 = vmatpush1.msra.mxu0 %v669
  %781 = vmatprep.subr.mxu0 0.0
  %782 = vmatpush1.msra.mxu0 %v672
  %783 = vmatprep.subr.mxu0 0.0
  %784 = vmatpush1.msra.mxu0 %v675
  %785 = vmatprep.subr.mxu0 0.0
  %786 = vmatpush1.msra.mxu0 %v678
  %787 = vmatprep.subr.mxu0 0.0
  %788 = vmatpush1.msra.mxu0 %v681
  %789 = vmatprep.subr.mxu0 0.0
  %790 = vmatpush1.msra.mxu0 %v684
  %791 = vmatprep.subr.mxu0 0.0
  %792 = vmatpush1.msra.mxu0 %v687
  %793 = vmatprep.subr.mxu0 0.0
  %794 = vmatpush1.msra.mxu0 %v690
  %795 = vmatprep.subr.mxu0 0.0
  %796 = vmatpush1.msra.mxu0 %v693
  %797 = vmatprep.subr.mxu0 0.0
  %798 = vmatpush1.msra.mxu0 0.0
  %799 = vmatprep.subr.mxu0 0.0
  %800 = vmatpush1.msra.mxu0 0.0
  %801 = vmatprep.subr.mxu0 0.0
  %802 = vmatpush1.msra.mxu0 0.0
  %803 = vmatprep.subr.mxu0 0.0
  %804 = vmatpush1.msra.mxu0 0.0
  %805 = vmatprep.subr.mxu0 0.0
  %806 = vmatpush1.msra.mxu0 0.0
  %807 = vmatprep.subr.mxu0 0.0
  %808 = vmatpush1.msra.mxu0 0.0
  %809 = vmatprep.subr.mxu0 0.0
  %810 = vmatpush1.msra.mxu0 0.0
  %811 = vmatprep.subr.mxu0 0.0
  %812 = vmatpush1.msra.mxu0 0.0
  %813 = vmatprep.subr.mxu0 0.0
  %814 = vmatpush1.msra.mxu0 0.0
  %815 = vmatprep.subr.mxu0 0.0
  %816 = vmatpush1.msra.mxu0 0.0
  %817 = vmatprep.subr.mxu0 0.0
  %818 = vmatpush1.msra.mxu0 0.0
  %819 = vmatprep.subr.mxu0 0.0
  %820 = vmatpush1.msra.mxu0 0.0
  %821 = vmatprep.subr.mxu0 0.0
  %822 = vmatpush1.msra.mxu0 0.0
  %823 = vmatprep.subr.mxu0 0.0
  %824 = vmatpush1.msra.mxu0 0.0
  %825 = vmatprep.subr.mxu0 0.0
  %826 = vmatpush1.msra.mxu0 0.0
  %827 = vmatprep.subr.mxu0 0.0
  %828 = vmatpush1.msra.mxu0 0.0
  %829 = vmatprep.mubr.f32.mxu0 0.0
  %830 = vmatmul.mubr.f32.gmra.mrb[0].mxu0 %v637
  %v831 = vpop.f32.mrb[0].mxu0
  %v832 = vadd.f32 0.0, %v831
  %v833 = vpop.f32.mrb[0].mxu0
  %834 = vdwg.mxu0
  %v835 = vadd.f32 %v643, %v761
  %v836 = vxor.u32 %v835, 2147483648
  %v837 = vmul.f32 %v836, 1.442695
  %v838 = vpow.pop %v837
  %v839 = vadd.f32 %v838, 1.0
  %v840 = vrcp.pop %v839
  %v841 = vmul.f32 1.0, %v840
  %v842 = vadd.f32 %v644, %v763
  %v843 = vxor.u32 %v842, 2147483648
  %v844 = vmul.f32 %v843, 1.442695
  %v845 = vpow.pop %v844
  %v846 = vadd.f32 %v845, 1.0
  %v847 = vrcp.pop %v846
  %v848 = vmul.f32 1.0, %v847
  %v849 = vadd.f32 %v832, %v200
  %v850 = vmul.f32 %v841, %v849
  %v851 = vadd.f32 %v645, %v850
  %v852 = vtanh.pop %v851
  %v853 = vsub.f32 1.0, %v848
  %v854 = vmul.f32 %v853, %v852
  %v855 = vmul.f32 %v848, %v637
  %v856 = vadd.f32 %v854, %v855
  %s857 = scalar_lea.vmem [#allocation2], 16
  %858 = vst [vmem:[%s857] sm:$0xff] %v856
  %s859 = smul.u32 3, 3
  %s860 = smul.addr %s859, 8
  %s861 = scalar_lea.vmem [#allocation3], %s860
  %v862 = vld [vmem:[%s861] sm:$0xff]
  %v863 = vld [vmem:[%s861 + $0x8] sm:$0xff]
  %v864 = vld [vmem:[%s861 + $0x10] sm:$0xff]
  %v865 = vld [vmem:[%s3] sm:$0xff]
  %v866 = vld [vmem:[%s3 + $0x8] sm:$0xff]
  %v867 = vld [vmem:[%s3 + $0x10] sm:$0xff]
  %v868 = vld [vmem:[%s3 + $0x18] sm:$0xff]
  %v869 = vld [vmem:[%s3 + $0x20] sm:$0xff]
  %v870 = vld [vmem:[%s3 + $0x28] sm:$0xff]
  %v871 = vld [vmem:[%s3 + $0x30] sm:$0xff]
  %v872 = vld [vmem:[%s3 + $0x38] sm:$0xff]
  %v873 = vld [vmem:[%s3 + $0x40] sm:$0xff]
  %v874 = vld [vmem:[%s3 + $0x48] sm:$0xff]
  %v875 = vld [vmem:[%s3 + $0x50] sm:$0xff]
  %v876 = vld [vmem:[%s3 + $0x58] sm:$0xff]
  %v877 = vld [vmem:[%s3 + $0x60] sm:$0xff]
  %v878 = vld [vmem:[%s3 + $0x68] sm:$0xff]
  %v879 = vld [vmem:[%s3 + $0x70] sm:$0xff]
  %v880 = vld [vmem:[%s3 + $0x78] sm:$0xff]
  %v881 = vld [vmem:[%s3 + $0x80] sm:$0xff]
  %v882 = vld [vmem:[%s3 + $0x88] sm:$0xff]
  %v883 = vld [vmem:[%s3 + $0x90] sm:$0xff]
  %v884 = vld [vmem:[%s3 + $0x98] sm:$0xff]
  %v885 = vld [vmem:[%s3 + $0xa0] sm:$0xff]
  %v886 = vld [vmem:[%s3 + $0xa8] sm:$0xff]
  %v887 = vld [vmem:[%s3 + $0xb0] sm:$0xff]
  %v888 = vld [vmem:[%s3 + $0xb8] sm:$0xff]
  %v889 = vld [vmem:[%s3 + $0xc0] sm:$0xff]
  %v890 = vld [vmem:[%s3 + $0xc8] sm:$0xff]
  %v891 = vld [vmem:[%s3 + $0xd0] sm:$0xff]
  %v892 = vld [vmem:[%s3 + $0xd8] sm:$0xff]
  %v893 = vld [vmem:[%s3 + $0xe0] sm:$0xff]
  %v894 = vld [vmem:[%s3 + $0xe8] sm:$0xff]
  %v895 = vld [vmem:[%s3 + $0xf0] sm:$0xff]
  %v896 = vld [vmem:[%s3 + $0xf8] sm:$0xff]
  %v897 = vld [vmem:[%s3 + $0x100] sm:$0xff]
  %v898 = vld [vmem:[%s3 + $0x108] sm:$0xff]
  %v899 = vld [vmem:[%s3 + $0x110] sm:$0xff]
  %v900 = vld [vmem:[%s3 + $0x118] sm:$0xff]
  %v901 = vld [vmem:[%s3 + $0x120] sm:$0xff]
  %v902 = vld [vmem:[%s3 + $0x128] sm:$0xff]
  %v903 = vld [vmem:[%s3 + $0x130] sm:$0xff]
  %v904 = vld [vmem:[%s3 + $0x138] sm:$0xff]
  %v905 = vld [vmem:[%s3 + $0x140] sm:$0xff]
  %v906 = vld [vmem:[%s3 + $0x148] sm:$0xff]
  %v907 = vld [vmem:[%s3 + $0x150] sm:$0xff]
  %v908 = vld [vmem:[%s3 + $0x158] sm:$0xff]
  %v909 = vld [vmem:[%s3 + $0x160] sm:$0xff]
  %v910 = vld [vmem:[%s3 + $0x168] sm:$0xff]
  %v911 = vld [vmem:[%s3 + $0x170] sm:$0xff]
  %v912 = vld [vmem:[%s3 + $0x178] sm:$0xff]
  %913 = vmatprep.subr.mxu0 %v866
  %914 = vmatpush1.msra.mxu0 %v865
  %915 = vmatprep.subr.mxu0 %v869
  %916 = vmatpush1.msra.mxu0 %v868
  %917 = vmatprep.subr.mxu0 %v872
  %918 = vmatpush1.msra.mxu0 %v871
  %919 = vmatprep.subr.mxu0 %v875
  %920 = vmatpush1.msra.mxu0 %v874
  %921 = vmatprep.subr.mxu0 %v878
  %922 = vmatpush1.msra.mxu0 %v877
  %923 = vmatprep.subr.mxu0 %v881
  %924 = vmatpush1.msra.mxu0 %v880
  %925 = vmatprep.subr.mxu0 %v884
  %926 = vmatpush1.msra.mxu0 %v883
  %927 = vmatprep.subr.mxu0 %v887
  %928 = vmatpush1.msra.mxu0 %v886
  %929 = vmatprep.subr.mxu0 %v890
  %930 = vmatpush1.msra.mxu0 %v889
  %931 = vmatprep.subr.mxu0 %v893
  %932 = vmatpush1.msra.mxu0 %v892
  %933 = vmatprep.subr.mxu0 %v896
  %934 = vmatpush1.msra.mxu0 %v895
  %935 = vmatprep.subr.mxu0 %v899
  %936 = vmatpush1.msra.mxu0 %v898
  %937 = vmatprep.subr.mxu0 %v902
  %938 = vmatpush1.msra.mxu0 %v901
  %939 = vmatprep.subr.mxu0 %v905
  %940 = vmatpush1.msra.mxu0 %v904
  %941 = vmatprep.subr.mxu0 %v908
  %942 = vmatpush1.msra.mxu0 %v907
  %943 = vmatprep.subr.mxu0 %v911
  %944 = vmatpush1.msra.mxu0 %v910
  %945 = vmatprep.subr.mxu0 0.0
  %946 = vmatpush1.msra.mxu0 0.0
  %947 = vmatprep.subr.mxu0 0.0
  %948 = vmatpush1.msra.mxu0 0.0
  %949 = vmatprep.subr.mxu0 0.0
  %950 = vmatpush1.msra.mxu0 0.0
  %951 = vmatprep.subr.mxu0 0.0
  %952 = vmatpush1.msra.mxu0 0.0
  %953 = vmatprep.subr.mxu0 0.0
  %954 = vmatpush1.msra.mxu0 0.0
  %955 = vmatprep.subr.mxu0 0.0
  %956 = vmatpush1.msra.mxu0 0.0
  %957 = vmatprep.subr.mxu0 0.0
  %958 = vmatpush1.msra.mxu0 0.0
  %959 = vmatprep.subr.mxu0 0.0
  %960 = vmatpush1.msra.mxu0 0.0
  %961 = vmatprep.subr.mxu0 0.0
  %962 = vmatpush1.msra.mxu0 0.0
  %963 = vmatprep.subr.mxu0 0.0
  %964 = vmatpush1.msra.mxu0 0.0
  %965 = vmatprep.subr.mxu0 0.0
  %966 = vmatpush1.msra.mxu0 0.0
  %967 = vmatprep.subr.mxu0 0.0
  %968 = vmatpush1.msra.mxu0 0.0
  %969 = vmatprep.subr.mxu0 0.0
  %970 = vmatpush1.msra.mxu0 0.0
  %971 = vmatprep.subr.mxu0 0.0
  %972 = vmatpush1.msra.mxu0 0.0
  %973 = vmatprep.subr.mxu0 0.0
  %974 = vmatpush1.msra.mxu0 0.0
  %975 = vmatprep.subr.mxu0 0.0
  %976 = vmatpush1.msra.mxu0 0.0
  %977 = vmatprep.mubr.f32.mxu0 0.0
  %978 = vmatmul.mubr.f32.gmra.mrb[0].mxu0 %v856
  %v979 = vpop.f32.mrb[0].mxu0
  %v980 = vadd.f32 0.0, %v979
  %v981 = vpop.f32.mrb[0].mxu0
  %v982 = vadd.f32 0.0, %v981
  %983 = vdwg.mxu0
  %984 = vmatprep.subr.mxu0 0.0
  %985 = vmatpush1.msra.mxu0 %v867
  %986 = vmatprep.subr.mxu0 0.0
  %987 = vmatpush1.msra.mxu0 %v870
  %988 = vmatprep.subr.mxu0 0.0
  %989 = vmatpush1.msra.mxu0 %v873
  %990 = vmatprep.subr.mxu0 0.0
  %991 = vmatpush1.msra.mxu0 %v876
  %992 = vmatprep.subr.mxu0 0.0
  %993 = vmatpush1.msra.mxu0 %v879
  %994 = vmatprep.subr.mxu0 0.0
  %995 = vmatpush1.msra.mxu0 %v882
  %996 = vmatprep.subr.mxu0 0.0
  %997 = vmatpush1.msra.mxu0 %v885
  %998 = vmatprep.subr.mxu0 0.0
  %999 = vmatpush1.msra.mxu0 %v888
  %1000 = vmatprep.subr.mxu0 0.0
  %1001 = vmatpush1.msra.mxu0 %v891
  %1002 = vmatprep.subr.mxu0 0.0
  %1003 = vmatpush1.msra.mxu0 %v894
  %1004 = vmatprep.subr.mxu0 0.0
  %1005 = vmatpush1.msra.mxu0 %v897
  %1006 = vmatprep.subr.mxu0 0.0
  %1007 = vmatpush1.msra.mxu0 %v900
  %1008 = vmatprep.subr.mxu0 0.0
  %1009 = vmatpush1.msra.mxu0 %v903
  %1010 = vmatprep.subr.mxu0 0.0
  %1011 = vmatpush1.msra.mxu0 %v906
  %1012 = vmatprep.subr.mxu0 0.0
  %1013 = vmatpush1.msra.mxu0 %v909
  %1014 = vmatprep.subr.mxu0 0.0
  %1015 = vmatpush1.msra.mxu0 %v912
  %1016 = vmatprep.subr.mxu0 0.0
  %1017 = vmatpush1.msra.mxu0 0.0
  %1018 = vmatprep.subr.mxu0 0.0
  %1019 = vmatpush1.msra.mxu0 0.0
  %1020 = vmatprep.subr.mxu0 0.0
  %1021 = vmatpush1.msra.mxu0 0.0
  %1022 = vmatprep.subr.mxu0 0.0
  %1023 = vmatpush1.msra.mxu0 0.0
  %1024 = vmatprep.subr.mxu0 0.0
  %1025 = vmatpush1.msra.mxu0 0.0
  %1026 = vmatprep.subr.mxu0 0.0
  %1027 = vmatpush1.msra.mxu0 0.0
  %1028 = vmatprep.subr.mxu0 0.0
  %1029 = vmatpush1.msra.mxu0 0.0
  %1030 = vmatprep.subr.mxu0 0.0
  %1031 = vmatpush1.msra.mxu0 0.0
  %1032 = vmatprep.subr.mxu0 0.0
  %1033 = vmatpush1.msra.mxu0 0.0
  %1034 = vmatprep.subr.mxu0 0.0
  %1035 = vmatpush1.msra.mxu0 0.0
  %1036 = vmatprep.subr.mxu0 0.0
  %1037 = vmatpush1.msra.mxu0 0.0
  %1038 = vmatprep.subr.mxu0 0.0
  %1039 = vmatpush1.msra.mxu0 0.0
  %1040 = vmatprep.subr.mxu0 0.0
  %1041 = vmatpush1.msra.mxu0 0.0
  %1042 = vmatprep.subr.mxu0 0.0
  %1043 = vmatpush1.msra.mxu0 0.0
  %1044 = vmatprep.subr.mxu0 0.0
  %1045 = vmatpush1.msra.mxu0 0.0
  %1046 = vmatprep.subr.mxu0 0.0
  %1047 = vmatpush1.msra.mxu0 0.0
  %1048 = vmatprep.mubr.f32.mxu0 0.0
  %1049 = vmatmul.mubr.f32.gmra.mrb[0].mxu0 %v856
  %v1050 = vpop.f32.mrb[0].mxu0
  %v1051 = vadd.f32 0.0, %v1050
  %v1052 = vpop.f32.mrb[0].mxu0
  %1053 = vdwg.mxu0
  %v1054 = vadd.f32 %v862, %v980
  %v1055 = vxor.u32 %v1054, 2147483648
  %v1056 = vmul.f32 %v1055, 1.442695
  %v1057 = vpow.pop %v1056
  %v1058 = vadd.f32 %v1057, 1.0
  %v1059 = vrcp.pop %v1058
  %v1060 = vmul.f32 1.0, %v1059
  %v1061 = vadd.f32 %v863, %v982
  %v1062 = vxor.u32 %v1061, 2147483648
  %v1063 = vmul.f32 %v1062, 1.442695
  %v1064 = vpow.pop %v1063
  %v1065 = vadd.f32 %v1064, 1.0
  %v1066 = vrcp.pop %v1065
  %v1067 = vmul.f32 1.0, %v1066
  %v1068 = vadd.f32 %v1051, %v200
  %v1069 = vmul.f32 %v1060, %v1068
  %v1070 = vadd.f32 %v864, %v1069
  %v1071 = vtanh.pop %v1070
  %v1072 = vsub.f32 1.0, %v1067
  %v1073 = vmul.f32 %v1072, %v1071
  %v1074 = vmul.f32 %v1067, %v856
  %v1075 = vadd.f32 %v1073, %v1074
  %s1076 = scalar_lea.vmem [#allocation2], 24
  %1077 = vst [vmem:[%s1076] sm:$0xff] %v1075
  %s1078 = smul.u32 4, 3
  %s1079 = smul.addr %s1078, 8
  %s1080 = scalar_lea.vmem [#allocation3], %s1079
  %v1081 = vld [vmem:[%s1080] sm:$0xff]
  %v1082 = vld [vmem:[%s1080 + $0x8] sm:$0xff]
  %v1083 = vld [vmem:[%s1080 + $0x10] sm:$0xff]
  %v1084 = vld [vmem:[%s3] sm:$0xff]
  %v1085 = vld [vmem:[%s3 + $0x8] sm:$0xff]
  %v1086 = vld [vmem:[%s3 + $0x10] sm:$0xff]
  %v1087 = vld [vmem:[%s3 + $0x18] sm:$0xff]
  %v1088 = vld [vmem:[%s3 + $0x20] sm:$0xff]
  %v1089 = vld [vmem:[%s3 + $0x28] sm:$0xff]
  %v1090 = vld [vmem:[%s3 + $0x30] sm:$0xff]
  %v1091 = vld [vmem:[%s3 + $0x38] sm:$0xff]
  %v1092 = vld [vmem:[%s3 + $0x40] sm:$0xff]
  %v1093 = vld [vmem:[%s3 + $0x48] sm:$0xff]
  %v1094 = vld [vmem:[%s3 + $0x50] sm:$0xff]
  %v1095 = vld [vmem:[%s3 + $0x58] sm:$0xff]
  %v1096 = vld [vmem:[%s3 + $0x60] sm:$0xff]
  %v1097 = vld [vmem:[%s3 + $0x68] sm:$0xff]
  %v1098 = vld [vmem:[%s3 + $0x70] sm:$0xff]
  %v1099 = vld [vmem:[%s3 + $0x78] sm:$0xff]
  %v1100 = vld [vmem:[%s3 + $0x80] sm:$0xff]
  %v1101 = vld [vmem:[%s3 + $0x88] sm:$0xff]
  %v1102 = vld [vmem:[%s3 + $0x90] sm:$0xff]
  %v1103 = vld [vmem:[%s3 + $0x98] sm:$0xff]
  %v1104 = vld [vmem:[%s3 + $0xa0] sm:$0xff]
  %v1105 = vld [vmem:[%s3 + $0xa8] sm:$0xff]
  %v1106 = vld [vmem:[%s3 + $0xb0] sm:$0xff]
  %v1107 = vld [vmem:[%s3 + $0xb8] sm:$0xff]
  %v1108 = vld [vmem:[%s3 + $0xc0] sm:$0xff]
  %v1109 = vld [vmem:[%s3 + $0xc8] sm:$0xff]
  %v1110 = vld [vmem:[%s3 + $0xd0] sm:$0xff]
  %v1111 = vld [vmem:[%s3 + $0xd8] sm:$0xff]
  %v1112 = vld [vmem:[%s3 + $0xe0] sm:$0xff]
  %v1113 = vld [vmem:[%s3 + $0xe8] sm:$0xff]
  %v1114 = vld [vmem:[%s3 + $0xf0] sm:$0xff]
  %v1115 = vld [vmem:[%s3 + $0xf8] sm:$0xff]
  %v1116 = vld [vmem:[%s3 + $0x100] sm:$0xff]
  %v1117 = vld [vmem:[%s3 + $0x108] sm:$0xff]
  %v1118 = vld [vmem:[%s3 + $0x110] sm:$0xff]
  %v1119 = vld [vmem:[%s3 + $0x118] sm:$0xff]
  %v1120 = vld [vmem:[%s3 + $0x120] sm:$0xff]
  %v1121 = vld [vmem:[%s3 + $0x128] sm:$0xff]
  %v1122 = vld [vmem:[%s3 + $0x130] sm:$0xff]
  %v1123 = vld [vmem:[%s3 + $0x138] sm:$0xff]
  %v1124 = vld [vmem:[%s3 + $0x140] sm:$0xff]
  %v1125 = vld [vmem:[%s3 + $0x148] sm:$0xff]
  %v1126 = vld [vmem:[%s3 + $0x150] sm:$0xff]
  %v1127 = vld [vmem:[%s3 + $0x158] sm:$0xff]
  %v1128 = vld [vmem:[%s3 + $0x160] sm:$0xff]
  %v1129 = vld [vmem:[%s3 + $0x168] sm:$0xff]
  %v1130 = vld [vmem:[%s3 + $0x170] sm:$0xff]
  %v1131 = vld [vmem:[%s3 + $0x178] sm:$0xff]
  %1132 = vmatprep.subr.mxu0 %v1085
  %1133 = vmatpush1.msra.mxu0 %v1084
  %1134 = vmatprep.subr.mxu0 %v1088
  %1135 = vmatpush1.msra.mxu0 %v1087
  %1136 = vmatprep.subr.mxu0 %v1091
  %1137 = vmatpush1.msra.mxu0 %v1090
  %1138 = vmatprep.subr.mxu0 %v1094
  %1139 = vmatpush1.msra.mxu0 %v1093
  %1140 = vmatprep.subr.mxu0 %v1097
  %1141 = vmatpush1.msra.mxu0 %v1096
  %1142 = vmatprep.subr.mxu0 %v1100
  %1143 = vmatpush1.msra.mxu0 %v1099
  %1144 = vmatprep.subr.mxu0 %v1103
  %1145 = vmatpush1.msra.mxu0 %v1102
  %1146 = vmatprep.subr.mxu0 %v1106
  %1147 = vmatpush1.msra.mxu0 %v1105
  %1148 = vmatprep.subr.mxu0 %v1109
  %1149 = vmatpush1.msra.mxu0 %v1108
  %1150 = vmatprep.subr.mxu0 %v1112
  %1151 = vmatpush1.msra.mxu0 %v1111
  %1152 = vmatprep.subr.mxu0 %v1115
  %1153 = vmatpush1.msra.mxu0 %v1114
  %1154 = vmatprep.subr.mxu0 %v1118
  %1155 = vmatpush1.msra.mxu0 %v1117
  %1156 = vmatprep.subr.mxu0 %v1121
  %1157 = vmatpush1.msra.mxu0 %v1120
  %1158 = vmatprep.subr.mxu0 %v1124
  %1159 = vmatpush1.msra.mxu0 %v1123
  %1160 = vmatprep.subr.mxu0 %v1127
  %1161 = vmatpush1.msra.mxu0 %v1126
  %1162 = vmatprep.subr.mxu0 %v1130
  %1163 = vmatpush1.msra.mxu0 %v1129
  %1164 = vmatprep.subr.mxu0 0.0
  %1165 = vmatpush1.msra.mxu0 0.0
  %1166 = vmatprep.subr.mxu0 0.0
  %1167 = vmatpush1.msra.mxu0 0.0
  %1168 = vmatprep.subr.mxu0 0.0
  %1169 = vmatpush1.msra.mxu0 0.0
  %1170 = vmatprep.subr.mxu0 0.0
  %1171 = vmatpush1.msra.mxu0 0.0
  %1172 = vmatprep.subr.mxu0 0.0
  %1173 = vmatpush1.msra.mxu0 0.0
  %1174 = vmatprep.subr.mxu0 0.0
  %1175 = vmatpush1.msra.mxu0 0.0
  %1176 = vmatprep.subr.mxu0 0.0
  %1177 = vmatpush1.msra.mxu0 0.0
  %1178 = vmatprep.subr.mxu0 0.0
  %1179 = vmatpush1.msra.mxu0 0.0
  %1180 = vmatprep.subr.mxu0 0.0
  %1181 = vmatpush1.msra.mxu0 0.0
  %1182 = vmatprep.subr.mxu0 0.0
  %1183 = vmatpush1.msra.mxu0 0.0
  %1184 = vmatprep.subr.mxu0 0.0
  %1185 = vmatpush1.msra.mxu0 0.0
  %1186 = vmatprep.subr.mxu0 0.0
  %1187 = vmatpush1.msra.mxu0 0.0
  %1188 = vmatprep.subr.mxu0 0.0
  %1189 = vmatpush1.msra.mxu0 0.0
  %1190 = vmatprep.subr.mxu0 0.0
  %1191 = vmatpush1.msra.mxu0 0.0
  %1192 = vmatprep.subr.mxu0 0.0
  %1193 = vmatpush1.msra.mxu0 0.0
  %1194 = vmatprep.subr.mxu0 0.0
  %1195 = vmatpush1.msra.mxu0 0.0
  %1196 = vmatprep.mubr.f32.mxu0 0.0
  %1197 = vmatmul.mubr.f32.gmra.mrb[0].mxu0 %v1075
  %v1198 = vpop.f32.mrb[0].mxu0
  %v1199 = vadd.f32 0.0, %v1198
  %v1200 = vpop.f32.mrb[0].mxu0
  %v1201 = vadd.f32 0.0, %v1200
  %1202 = vdwg.mxu0
  %1203 = vmatprep.subr.mxu0 0.0
  %1204 = vmatpush1.msra.mxu0 %v1086
  %1205 = vmatprep.subr.mxu0 0.0
  %1206 = vmatpush1.msra.mxu0 %v1089
  %1207 = vmatprep.subr.mxu0 0.0
  %1208 = vmatpush1.msra.mxu0 %v1092
  %1209 = vmatprep.subr.mxu0 0.0
  %1210 = vmatpush1.msra.mxu0 %v1095
  %1211 = vmatprep.subr.mxu0 0.0
  %1212 = vmatpush1.msra.mxu0 %v1098
  %1213 = vmatprep.subr.mxu0 0.0
  %1214 = vmatpush1.msra.mxu0 %v1101
  %1215 = vmatprep.subr.mxu0 0.0
  %1216 = vmatpush1.msra.mxu0 %v1104
  %1217 = vmatprep.subr.mxu0 0.0
  %1218 = vmatpush1.msra.mxu0 %v1107
  %1219 = vmatprep.subr.mxu0 0.0
  %1220 = vmatpush1.msra.mxu0 %v1110
  %1221 = vmatprep.subr.mxu0 0.0
  %1222 = vmatpush1.msra.mxu0 %v1113
  %1223 = vmatprep.subr.mxu0 0.0
  %1224 = vmatpush1.msra.mxu0 %v1116
  %1225 = vmatprep.subr.mxu0 0.0
  %1226 = vmatpush1.msra.mxu0 %v1119
  %1227 = vmatprep.subr.mxu0 0.0
  %1228 = vmatpush1.msra.mxu0 %v1122
  %1229 = vmatprep.subr.mxu0 0.0
  %1230 = vmatpush1.msra.mxu0 %v1125
  %1231 = vmatprep.subr.mxu0 0.0
  %1232 = vmatpush1.msra.mxu0 %v1128
  %1233 = vmatprep.subr.mxu0 0.0
  %1234 = vmatpush1.msra.mxu0 %v1131
  %1235 = vmatprep.subr.mxu0 0.0
  %1236 = vmatpush1.msra.mxu0 0.0
  %1237 = vmatprep.subr.mxu0 0.0
  %1238 = vmatpush1.msra.mxu0 0.0
  %1239 = vmatprep.subr.mxu0 0.0
  %1240 = vmatpush1.msra.mxu0 0.0
  %1241 = vmatprep.subr.mxu0 0.0
  %1242 = vmatpush1.msra.mxu0 0.0
  %1243 = vmatprep.subr.mxu0 0.0
  %1244 = vmatpush1.msra.mxu0 0.0
  %1245 = vmatprep.subr.mxu0 0.0
  %1246 = vmatpush1.msra.mxu0 0.0
  %1247 = vmatprep.subr.mxu0 0.0
  %1248 = vmatpush1.msra.mxu0 0.0
  %1249 = vmatprep.subr.mxu0 0.0
  %1250 = vmatpush1.msra.mxu0 0.0
  %1251 = vmatprep.subr.mxu0 0.0
  %1252 = vmatpush1.msra.mxu0 0.0
  %1253 = vmatprep.subr.mxu0 0.0
  %1254 = vmatpush1.msra.mxu0 0.0
  %1255 = vmatprep.subr.mxu0 0.0
  %1256 = vmatpush1.msra.mxu0 0.0
  %1257 = vmatprep.subr.mxu0 0.0
  %1258 = vmatpush1.msra.mxu0 0.0
  %1259 = vmatprep.subr.mxu0 0.0
  %1260 = vmatpush1.msra.mxu0 0.0
  %1261 = vmatprep.subr.mxu0 0.0
  %1262 = vmatpush1.msra.mxu0 0.0
  %1263 = vmatprep.subr.mxu0 0.0
  %1264 = vmatpush1.msra.mxu0 0.0
  %1265 = vmatprep.subr.mxu0 0.0
  %1266 = vmatpush1.msra.mxu0 0.0
  %1267 = vmatprep.mubr.f32.mxu0 0.0
  %1268 = vmatmul.mubr.f32.gmra.mrb[0].mxu0 %v1075
  %v1269 = vpop.f32.mrb[0].mxu0
  %v1270 = vadd.f32 0.0, %v1269
  %v1271 = vpop.f32.mrb[0].mxu0
  %1272 = vdwg.mxu0
  %v1273 = vadd.f32 %v1081, %v1199
  %v1274 = vxor.u32 %v1273, 2147483648
  %v1275 = vmul.f32 %v1274, 1.442695
  %v1276 = vpow.pop %v1275
  %v1277 = vadd.f32 %v1276, 1.0
  %v1278 = vrcp.pop %v1277
  %v1279 = vmul.f32 1.0, %v1278
  %v1280 = vadd.f32 %v1082, %v1201
  %v1281 = vxor.u32 %v1280, 2147483648
  %v1282 = vmul.f32 %v1281, 1.442695
  %v1283 = vpow.pop %v1282
  %v1284 = vadd.f32 %v1283, 1.0
  %v1285 = vrcp.pop %v1284
  %v1286 = vmul.f32 1.0, %v1285
  %v1287 = vadd.f32 %v1270, %v200
  %v1288 = vmul.f32 %v1279, %v1287
  %v1289 = vadd.f32 %v1083, %v1288
  %v1290 = vtanh.pop %v1289
  %v1291 = vsub.f32 1.0, %v1286
  %v1292 = vmul.f32 %v1291, %v1290
  %v1293 = vmul.f32 %v1286, %v1075
  %v1294 = vadd.f32 %v1292, %v1293
  %s1295 = scalar_lea.vmem [#allocation2], 32
  %1296 = vst [vmem:[%s1295] sm:$0xff] %v1294
  %s1297 = smul.u32 5, 3
  %s1298 = smul.addr %s1297, 8
  %s1299 = scalar_lea.vmem [#allocation3], %s1298
  %v1300 = vld [vmem:[%s1299] sm:$0xff]
  %v1301 = vld [vmem:[%s1299 + $0x8] sm:$0xff]
  %v1302 = vld [vmem:[%s1299 + $0x10] sm:$0xff]
  %v1303 = vld [vmem:[%s3] sm:$0xff]
  %v1304 = vld [vmem:[%s3 + $0x8] sm:$0xff]
  %v1305 = vld [vmem:[%s3 + $0x10] sm:$0xff]
  %v1306 = vld [vmem:[%s3 + $0x18] sm:$0xff]
  %v1307 = vld [vmem:[%s3 + $0x20] sm:$0xff]
  %v1308 = vld [vmem:[%s3 + $0x28] sm:$0xff]
  %v1309 = vld [vmem:[%s3 + $0x30] sm:$0xff]
  %v1310 = vld [vmem:[%s3 + $0x38] sm:$0xff]
  %v1311 = vld [vmem:[%s3 + $0x40] sm:$0xff]
  %v1312 = vld [vmem:[%s3 + $0x48] sm:$0xff]
  %v1313 = vld [vmem:[%s3 + $0x50] sm:$0xff]
  %v1314 = vld [vmem:[%s3 + $0x58] sm:$0xff]
  %v1315 = vld [vmem:[%s3 + $0x60] sm:$0xff]
  %v1316 = vld [vmem:[%s3 + $0x68] sm:$0xff]
  %v1317 = vld [vmem:[%s3 + $0x70] sm:$0xff]
  %v1318 = vld [vmem:[%s3 + $0x78] sm:$0xff]
  %v1319 = vld [vmem:[%s3 + $0x80] sm:$0xff]
  %v1320 = vld [vmem:[%s3 + $0x88] sm:$0xff]
  %v1321 = vld [vmem:[%s3 + $0x90] sm:$0xff]
  %v1322 = vld [vmem:[%s3 + $0x98] sm:$0xff]
  %v1323 = vld [vmem:[%s3 + $0xa0] sm:$0xff]
  %v1324 = vld [vmem:[%s3 + $0xa8] sm:$0xff]
  %v1325 = vld [vmem:[%s3 + $0xb0] sm:$0xff]
  %v1326 = vld [vmem:[%s3 + $0xb8] sm:$0xff]
  %v1327 = vld [vmem:[%s3 + $0xc0] sm:$0xff]
  %v1328 = vld [vmem:[%s3 + $0xc8] sm:$0xff]
  %v1329 = vld [vmem:[%s3 + $0xd0] sm:$0xff]
  %v1330 = vld [vmem:[%s3 + $0xd8] sm:$0xff]
  %v1331 = vld [vmem:[%s3 + $0xe0] sm:$0xff]
  %v1332 = vld [vmem:[%s3 + $0xe8] sm:$0xff]
  %v1333 = vld [vmem:[%s3 + $0xf0] sm:$0xff]
  %v1334 = vld [vmem:[%s3 + $0xf8] sm:$0xff]
  %v1335 = vld [vmem:[%s3 + $0x100] sm:$0xff]
  %v1336 = vld [vmem:[%s3 + $0x108] sm:$0xff]
  %v1337 = vld [vmem:[%s3 + $0x110] sm:$0xff]
  %v1338 = vld [vmem:[%s3 + $0x118] sm:$0xff]
  %v1339 = vld [vmem:[%s3 + $0x120] sm:$0xff]
  %v1340 = vld [vmem:[%s3 + $0x128] sm:$0xff]
  %v1341 = vld [vmem:[%s3 + $0x130] sm:$0xff]
  %v1342 = vld [vmem:[%s3 + $0x138] sm:$0xff]
  %v1343 = vld [vmem:[%s3 + $0x140] sm:$0xff]
  %v1344 = vld [vmem:[%s3 + $0x148] sm:$0xff]
  %v1345 = vld [vmem:[%s3 + $0x150] sm:$0xff]
  %v1346 = vld [vmem:[%s3 + $0x158] sm:$0xff]
  %v1347 = vld [vmem:[%s3 + $0x160] sm:$0xff]
  %v1348 = vld [vmem:[%s3 + $0x168] sm:$0xff]
  %v1349 = vld [vmem:[%s3 + $0x170] sm:$0xff]
  %v1350 = vld [vmem:[%s3 + $0x178] sm:$0xff]
  %1351 = vmatprep.subr.mxu0 %v1304
  %1352 = vmatpush1.msra.mxu0 %v1303
  %1353 = vmatprep.subr.mxu0 %v1307
  %1354 = vmatpush1.msra.mxu0 %v1306
  %1355 = vmatprep.subr.mxu0 %v1310
  %1356 = vmatpush1.msra.mxu0 %v1309
  %1357 = vmatprep.subr.mxu0 %v1313
  %1358 = vmatpush1.msra.mxu0 %v1312
  %1359 = vmatprep.subr.mxu0 %v1316
  %1360 = vmatpush1.msra.mxu0 %v1315
  %1361 = vmatprep.subr.mxu0 %v1319
  %1362 = vmatpush1.msra.mxu0 %v1318
  %1363 = vmatprep.subr.mxu0 %v1322
  %1364 = vmatpush1.msra.mxu0 %v1321
  %1365 = vmatprep.subr.mxu0 %v1325
  %1366 = vmatpush1.msra.mxu0 %v1324
  %1367 = vmatprep.subr.mxu0 %v1328
  %1368 = vmatpush1.msra.mxu0 %v1327
  %1369 = vmatprep.subr.mxu0 %v1331
  %1370 = vmatpush1.msra.mxu0 %v1330
  %1371 = vmatprep.subr.mxu0 %v1334
  %1372 = vmatpush1.msra.mxu0 %v1333
  %1373 = vmatprep.subr.mxu0 %v1337
  %1374 = vmatpush1.msra.mxu0 %v1336
  %1375 = vmatprep.subr.mxu0 %v1340
  %1376 = vmatpush1.msra.mxu0 %v1339
  %1377 = vmatprep.subr.mxu0 %v1343
  %1378 = vmatpush1.msra.mxu0 %v1342
  %1379 = vmatprep.subr.mxu0 %v1346
  %1380 = vmatpush1.msra.mxu0 %v1345
  %1381 = vmatprep.subr.mxu0 %v1349
  %1382 = vmatpush1.msra.mxu0 %v1348
  %1383 = vmatprep.subr.mxu0 0.0
  %1384 = vmatpush1.msra.mxu0 0.0
  %1385 = vmatprep.subr.mxu0 0.0
  %1386 = vmatpush1.msra.mxu0 0.0
  %1387 = vmatprep.subr.mxu0 0.0
  %1388 = vmatpush1.msra.mxu0 0.0
  %1389 = vmatprep.subr.mxu0 0.0
  %1390 = vmatpush1.msra.mxu0 0.0
  %1391 = vmatprep.subr.mxu0 0.0
  %1392 = vmatpush1.msra.mxu0 0.0
  %1393 = vmatprep.subr.mxu0 0.0
  %1394 = vmatpush1.msra.mxu0 0.0
  %1395 = vmatprep.subr.mxu0 0.0
  %1396 = vmatpush1.msra.mxu0 0.0
  %1397 = vmatprep.subr.mxu0 0.0
  %1398 = vmatpush1.msra.mxu0 0.0
  %1399 = vmatprep.subr.mxu0 0.0
  %1400 = vmatpush1.msra.mxu0 0.0
  %1401 = vmatprep.subr.mxu0 0.0
  %1402 = vmatpush1.msra.mxu0 0.0
  %1403 = vmatprep.subr.mxu0 0.0
  %1404 = vmatpush1.msra.mxu0 0.0
  %1405 = vmatprep.subr.mxu0 0.0
  %1406 = vmatpush1.msra.mxu0 0.0
  %1407 = vmatprep.subr.mxu0 0.0
  %1408 = vmatpush1.msra.mxu0 0.0
  %1409 = vmatprep.subr.mxu0 0.0
  %1410 = vmatpush1.msra.mxu0 0.0
  %1411 = vmatprep.subr.mxu0 0.0
  %1412 = vmatpush1.msra.mxu0 0.0
  %1413 = vmatprep.subr.mxu0 0.0
  %1414 = vmatpush1.msra.mxu0 0.0
  %1415 = vmatprep.mubr.f32.mxu0 0.0
  %1416 = vmatmul.mubr.f32.gmra.mrb[0].mxu0 %v1294
  %v1417 = vpop.f32.mrb[0].mxu0
  %v1418 = vadd.f32 0.0, %v1417
  %v1419 = vpop.f32.mrb[0].mxu0
  %v1420 = vadd.f32 0.0, %v1419
  %1421 = vdwg.mxu0
  %1422 = vmatprep.subr.mxu0 0.0
  %1423 = vmatpush1.msra.mxu0 %v1305
  %1424 = vmatprep.subr.mxu0 0.0
  %1425 = vmatpush1.msra.mxu0 %v1308
  %1426 = vmatprep.subr.mxu0 0.0
  %1427 = vmatpush1.msra.mxu0 %v1311
  %1428 = vmatprep.subr.mxu0 0.0
  %1429 = vmatpush1.msra.mxu0 %v1314
  %1430 = vmatprep.subr.mxu0 0.0
  %1431 = vmatpush1.msra.mxu0 %v1317
  %1432 = vmatprep.subr.mxu0 0.0
  %1433 = vmatpush1.msra.mxu0 %v1320
  %1434 = vmatprep.subr.mxu0 0.0
  %1435 = vmatpush1.msra.mxu0 %v1323
  %1436 = vmatprep.subr.mxu0 0.0
  %1437 = vmatpush1.msra.mxu0 %v1326
  %1438 = vmatprep.subr.mxu0 0.0
  %1439 = vmatpush1.msra.mxu0 %v1329
  %1440 = vmatprep.subr.mxu0 0.0
  %1441 = vmatpush1.msra.mxu0 %v1332
  %1442 = vmatprep.subr.mxu0 0.0
  %1443 = vmatpush1.msra.mxu0 %v1335
  %1444 = vmatprep.subr.mxu0 0.0
  %1445 = vmatpush1.msra.mxu0 %v1338
  %1446 = vmatprep.subr.mxu0 0.0
  %1447 = vmatpush1.msra.mxu0 %v1341
  %1448 = vmatprep.subr.mxu0 0.0
  %1449 = vmatpush1.msra.mxu0 %v1344
  %1450 = vmatprep.subr.mxu0 0.0
  %1451 = vmatpush1.msra.mxu0 %v1347
  %1452 = vmatprep.subr.mxu0 0.0
  %1453 = vmatpush1.msra.mxu0 %v1350
  %1454 = vmatprep.subr.mxu0 0.0
  %1455 = vmatpush1.msra.mxu0 0.0
  %1456 = vmatprep.subr.mxu0 0.0
  %1457 = vmatpush1.msra.mxu0 0.0
  %1458 = vmatprep.subr.mxu0 0.0
  %1459 = vmatpush1.msra.mxu0 0.0
  %1460 = vmatprep.subr.mxu0 0.0
  %1461 = vmatpush1.msra.mxu0 0.0
  %1462 = vmatprep.subr.mxu0 0.0
  %1463 = vmatpush1.msra.mxu0 0.0
  %1464 = vmatprep.subr.mxu0 0.0
  %1465 = vmatpush1.msra.mxu0 0.0
  %1466 = vmatprep.subr.mxu0 0.0
  %1467 = vmatpush1.msra.mxu0 0.0
  %1468 = vmatprep.subr.mxu0 0.0
  %1469 = vmatpush1.msra.mxu0 0.0
  %1470 = vmatprep.subr.mxu0 0.0
  %1471 = vmatpush1.msra.mxu0 0.0
  %1472 = vmatprep.subr.mxu0 0.0
  %1473 = vmatpush1.msra.mxu0 0.0
  %1474 = vmatprep.subr.mxu0 0.0
  %1475 = vmatpush1.msra.mxu0 0.0
  %1476 = vmatprep.subr.mxu0 0.0
  %1477 = vmatpush1.msra.mxu0 0.0
  %1478 = vmatprep.subr.mxu0 0.0
  %1479 = vmatpush1.msra.mxu0 0.0
  %1480 = vmatprep.subr.mxu0 0.0
  %1481 = vmatpush1.msra.mxu0 0.0
  %1482 = vmatprep.subr.mxu0 0.0
  %1483 = vmatpush1.msra.mxu0 0.0
  %1484 = vmatprep.subr.mxu0 0.0
  %1485 = vmatpush1.msra.mxu0 0.0
  %1486 = vmatprep.mubr.f32.mxu0 0.0
  %1487 = vmatmul.mubr.f32.gmra.mrb[0].mxu0 %v1294
  %v1488 = vpop.f32.mrb[0].mxu0
  %v1489 = vadd.f32 0.0, %v1488
  %v1490 = vpop.f32.mrb[0].mxu0
  %1491 = vdwg.mxu0
  %v1492 = vadd.f32 %v1300, %v1418
  %v1493 = vxor.u32 %v1492, 2147483648
  %v1494 = vmul.f32 %v1493, 1.442695
  %v1495 = vpow.pop %v1494
  %v1496 = vadd.f32 %v1495, 1.0
  %v1497 = vrcp.pop %v1496
  %v1498 = vmul.f32 1.0, %v1497
  %v1499 = vadd.f32 %v1301, %v1420
  %v1500 = vxor.u32 %v1499, 2147483648
  %v1501 = vmul.f32 %v1500, 1.442695
  %v1502 = vpow.pop %v1501
  %v1503 = vadd.f32 %v1502, 1.0
  %v1504 = vrcp.pop %v1503
  %v1505 = vmul.f32 1.0, %v1504
  %v1506 = vadd.f32 %v1489, %v200
  %v1507 = vmul.f32 %v1498, %v1506
  %v1508 = vadd.f32 %v1302, %v1507
  %v1509 = vtanh.pop %v1508
  %v1510 = vsub.f32 1.0, %v1505
  %v1511 = vmul.f32 %v1510, %v1509
  %v1512 = vmul.f32 %v1505, %v1294
  %v1513 = vadd.f32 %v1511, %v1512
  %s1514 = scalar_lea.vmem [#allocation2], 40
  %1515 = vst [vmem:[%s1514] sm:$0xff] %v1513
  %s1516 = smul.u32 6, 3
  %s1517 = smul.addr %s1516, 8
  %s1518 = scalar_lea.vmem [#allocation3], %s1517
  %v1519 = vld [vmem:[%s1518] sm:$0xff]
  %v1520 = vld [vmem:[%s1518 + $0x8] sm:$0xff]
  %v1521 = vld [vmem:[%s1518 + $0x10] sm:$0xff]
  %v1522 = vld [vmem:[%s3] sm:$0xff]
  %v1523 = vld [vmem:[%s3 + $0x8] sm:$0xff]
  %v1524 = vld [vmem:[%s3 + $0x10] sm:$0xff]
  %v1525 = vld [vmem:[%s3 + $0x18] sm:$0xff]
  %v1526 = vld [vmem:[%s3 + $0x20] sm:$0xff]
  %v1527 = vld [vmem:[%s3 + $0x28] sm:$0xff]
  %v1528 = vld [vmem:[%s3 + $0x30] sm:$0xff]
  %v1529 = vld [vmem:[%s3 + $0x38] sm:$0xff]
  %v1530 = vld [vmem:[%s3 + $0x40] sm:$0xff]
  %v1531 = vld [vmem:[%s3 + $0x48] sm:$0xff]
  %v1532 = vld [vmem:[%s3 + $0x50] sm:$0xff]
  %v1533 = vld [vmem:[%s3 + $0x58] sm:$0xff]
  %v1534 = vld [vmem:[%s3 + $0x60] sm:$0xff]
  %v1535 = vld [vmem:[%s3 + $0x68] sm:$0xff]
  %v1536 = vld [vmem:[%s3 + $0x70] sm:$0xff]
  %v1537 = vld [vmem:[%s3 + $0x78] sm:$0xff]
  %v1538 = vld [vmem:[%s3 + $0x80] sm:$0xff]
  %v1539 = vld [vmem:[%s3 + $0x88] sm:$0xff]
  %v1540 = vld [vmem:[%s3 + $0x90] sm:$0xff]
  %v1541 = vld [vmem:[%s3 + $0x98] sm:$0xff]
  %v1542 = vld [vmem:[%s3 + $0xa0] sm:$0xff]
  %v1543 = vld [vmem:[%s3 + $0xa8] sm:$0xff]
  %v1544 = vld [vmem:[%s3 + $0xb0] sm:$0xff]
  %v1545 = vld [vmem:[%s3 + $0xb8] sm:$0xff]
  %v1546 = vld [vmem:[%s3 + $0xc0] sm:$0xff]
  %v1547 = vld [vmem:[%s3 + $0xc8] sm:$0xff]
  %v1548 = vld [vmem:[%s3 + $0xd0] sm:$0xff]
  %v1549 = vld [vmem:[%s3 + $0xd8] sm:$0xff]
  %v1550 = vld [vmem:[%s3 + $0xe0] sm:$0xff]
  %v1551 = vld [vmem:[%s3 + $0xe8] sm:$0xff]
  %v1552 = vld [vmem:[%s3 + $0xf0] sm:$0xff]
  %v1553 = vld [vmem:[%s3 + $0xf8] sm:$0xff]
  %v1554 = vld [vmem:[%s3 + $0x100] sm:$0xff]
  %v1555 = vld [vmem:[%s3 + $0x108] sm:$0xff]
  %v1556 = vld [vmem:[%s3 + $0x110] sm:$0xff]
  %v1557 = vld [vmem:[%s3 + $0x118] sm:$0xff]
  %v1558 = vld [vmem:[%s3 + $0x120] sm:$0xff]
  %v1559 = vld [vmem:[%s3 + $0x128] sm:$0xff]
  %v1560 = vld [vmem:[%s3 + $0x130] sm:$0xff]
  %v1561 = vld [vmem:[%s3 + $0x138] sm:$0xff]
  %v1562 = vld [vmem:[%s3 + $0x140] sm:$0xff]
  %v1563 = vld [vmem:[%s3 + $0x148] sm:$0xff]
  %v1564 = vld [vmem:[%s3 + $0x150] sm:$0xff]
  %v1565 = vld [vmem:[%s3 + $0x158] sm:$0xff]
  %v1566 = vld [vmem:[%s3 + $0x160] sm:$0xff]
  %v1567 = vld [vmem:[%s3 + $0x168] sm:$0xff]
  %v1568 = vld [vmem:[%s3 + $0x170] sm:$0xff]
  %v1569 = vld [vmem:[%s3 + $0x178] sm:$0xff]
  %1570 = vmatprep.subr.mxu0 %v1523
  %1571 = vmatpush1.msra.mxu0 %v1522
  %1572 = vmatprep.subr.mxu0 %v1526
  %1573 = vmatpush1.msra.mxu0 %v1525
  %1574 = vmatprep.subr.mxu0 %v1529
  %1575 = vmatpush1.msra.mxu0 %v1528
  %1576 = vmatprep.subr.mxu0 %v1532
  %1577 = vmatpush1.msra.mxu0 %v1531
  %1578 = vmatprep.subr.mxu0 %v1535
  %1579 = vmatpush1.msra.mxu0 %v1534
  %1580 = vmatprep.subr.mxu0 %v1538
  %1581 = vmatpush1.msra.mxu0 %v1537
  %1582 = vmatprep.subr.mxu0 %v1541
  %1583 = vmatpush1.msra.mxu0 %v1540
  %1584 = vmatprep.subr.mxu0 %v1544
  %1585 = vmatpush1.msra.mxu0 %v1543
  %1586 = vmatprep.subr.mxu0 %v1547
  %1587 = vmatpush1.msra.mxu0 %v1546
  %1588 = vmatprep.subr.mxu0 %v1550
  %1589 = vmatpush1.msra.mxu0 %v1549
  %1590 = vmatprep.subr.mxu0 %v1553
  %1591 = vmatpush1.msra.mxu0 %v1552
  %1592 = vmatprep.subr.mxu0 %v1556
  %1593 = vmatpush1.msra.mxu0 %v1555
  %1594 = vmatprep.subr.mxu0 %v1559
  %1595 = vmatpush1.msra.mxu0 %v1558
  %1596 = vmatprep.subr.mxu0 %v1562
  %1597 = vmatpush1.msra.mxu0 %v1561
  %1598 = vmatprep.subr.mxu0 %v1565
  %1599 = vmatpush1.msra.mxu0 %v1564
  %1600 = vmatprep.subr.mxu0 %v1568
  %1601 = vmatpush1.msra.mxu0 %v1567
  %1602 = vmatprep.subr.mxu0 0.0
  %1603 = vmatpush1.msra.mxu0 0.0
  %1604 = vmatprep.subr.mxu0 0.0
  %1605 = vmatpush1.msra.mxu0 0.0
  %1606 = vmatprep.subr.mxu0 0.0
  %1607 = vmatpush1.msra.mxu0 0.0
  %1608 = vmatprep.subr.mxu0 0.0
  %1609 = vmatpush1.msra.mxu0 0.0
  %1610 = vmatprep.subr.mxu0 0.0
  %1611 = vmatpush1.msra.mxu0 0.0
  %1612 = vmatprep.subr.mxu0 0.0
  %1613 = vmatpush1.msra.mxu0 0.0
  %1614 = vmatprep.subr.mxu0 0.0
  %1615 = vmatpush1.msra.mxu0 0.0
  %1616 = vmatprep.subr.mxu0 0.0
  %1617 = vmatpush1.msra.mxu0 0.0
  %1618 = vmatprep.subr.mxu0 0.0
  %1619 = vmatpush1.msra.mxu0 0.0
  %1620 = vmatprep.subr.mxu0 0.0
  %1621 = vmatpush1.msra.mxu0 0.0
  %1622 = vmatprep.subr.mxu0 0.0
  %1623 = vmatpush1.msra.mxu0 0.0
  %1624 = vmatprep.subr.mxu0 0.0
  %1625 = vmatpush1.msra.mxu0 0.0
  %1626 = vmatprep.subr.mxu0 0.0
  %1627 = vmatpush1.msra.mxu0 0.0
  %1628 = vmatprep.subr.mxu0 0.0
  %1629 = vmatpush1.msra.mxu0 0.0
  %1630 = vmatprep.subr.mxu0 0.0
  %1631 = vmatpush1.msra.mxu0 0.0
  %1632 = vmatprep.subr.mxu0 0.0
  %1633 = vmatpush1.msra.mxu0 0.0
  %1634 = vmatprep.mubr.f32.mxu0 0.0
  %1635 = vmatmul.mubr.f32.gmra.mrb[0].mxu0 %v1513
  %v1636 = vpop.f32.mrb[0].mxu0
  %v1637 = vadd.f32 0.0, %v1636
  %v1638 = vpop.f32.mrb[0].mxu0
  %v1639 = vadd.f32 0.0, %v1638
  %1640 = vdwg.mxu0
  %1641 = vmatprep.subr.mxu0 0.0
  %1642 = vmatpush1.msra.mxu0 %v1524
  %1643 = vmatprep.subr.mxu0 0.0
  %1644 = vmatpush1.msra.mxu0 %v1527
  %1645 = vmatprep.subr.mxu0 0.0
  %1646 = vmatpush1.msra.mxu0 %v1530
  %1647 = vmatprep.subr.mxu0 0.0
  %1648 = vmatpush1.msra.mxu0 %v1533
  %1649 = vmatprep.subr.mxu0 0.0
  %1650 = vmatpush1.msra.mxu0 %v1536
  %1651 = vmatprep.subr.mxu0 0.0
  %1652 = vmatpush1.msra.mxu0 %v1539
  %1653 = vmatprep.subr.mxu0 0.0
  %1654 = vmatpush1.msra.mxu0 %v1542
  %1655 = vmatprep.subr.mxu0 0.0
  %1656 = vmatpush1.msra.mxu0 %v1545
  %1657 = vmatprep.subr.mxu0 0.0
  %1658 = vmatpush1.msra.mxu0 %v1548
  %1659 = vmatprep.subr.mxu0 0.0
  %1660 = vmatpush1.msra.mxu0 %v1551
  %1661 = vmatprep.subr.mxu0 0.0
  %1662 = vmatpush1.msra.mxu0 %v1554
  %1663 = vmatprep.subr.mxu0 0.0
  %1664 = vmatpush1.msra.mxu0 %v1557
  %1665 = vmatprep.subr.mxu0 0.0
  %1666 = vmatpush1.msra.mxu0 %v1560
  %1667 = vmatprep.subr.mxu0 0.0
  %1668 = vmatpush1.msra.mxu0 %v1563
  %1669 = vmatprep.subr.mxu0 0.0
  %1670 = vmatpush1.msra.mxu0 %v1566
  %1671 = vmatprep.subr.mxu0 0.0
  %1672 = vmatpush1.msra.mxu0 %v1569
  %1673 = vmatprep.subr.mxu0 0.0
  %1674 = vmatpush1.msra.mxu0 0.0
  %1675 = vmatprep.subr.mxu0 0.0
  %1676 = vmatpush1.msra.mxu0 0.0
  %1677 = vmatprep.subr.mxu0 0.0
  %1678 = vmatpush1.msra.mxu0 0.0
  %1679 = vmatprep.subr.mxu0 0.0
  %1680 = vmatpush1.msra.mxu0 0.0
  %1681 = vmatprep.subr.mxu0 0.0
  %1682 = vmatpush1.msra.mxu0 0.0
  %1683 = vmatprep.subr.mxu0 0.0
  %1684 = vmatpush1.msra.mxu0 0.0
  %1685 = vmatprep.subr.mxu0 0.0
  %1686 = vmatpush1.msra.mxu0 0.0
  %1687 = vmatprep.subr.mxu0 0.0
  %1688 = vmatpush1.msra.mxu0 0.0
  %1689 = vmatprep.subr.mxu0 0.0
  %1690 = vmatpush1.msra.mxu0 0.0
  %1691 = vmatprep.subr.mxu0 0.0
  %1692 = vmatpush1.msra.mxu0 0.0
  %1693 = vmatprep.subr.mxu0 0.0
  %1694 = vmatpush1.msra.mxu0 0.0
  %1695 = vmatprep.subr.mxu0 0.0
  %1696 = vmatpush1.msra.mxu0 0.0
  %1697 = vmatprep.subr.mxu0 0.0
  %1698 = vmatpush1.msra.mxu0 0.0
  %1699 = vmatprep.subr.mxu0 0.0
  %1700 = vmatpush1.msra.mxu0 0.0
  %1701 = vmatprep.subr.mxu0 0.0
  %1702 = vmatpush1.msra.mxu0 0.0
  %1703 = vmatprep.subr.mxu0 0.0
  %1704 = vmatpush1.msra.mxu0 0.0
  %1705 = vmatprep.mubr.f32.mxu0 0.0
  %1706 = vmatmul.mubr.f32.gmra.mrb[0].mxu0 %v1513
  %v1707 = vpop.f32.mrb[0].mxu0
  %v1708 = vadd.f32 0.0, %v1707
  %v1709 = vpop.f32.mrb[0].mxu0
  %1710 = vdwg.mxu0
  %v1711 = vadd.f32 %v1519, %v1637
  %v1712 = vxor.u32 %v1711, 2147483648
  %v1713 = vmul.f32 %v1712, 1.442695
  %v1714 = vpow.pop %v1713
  %v1715 = vadd.f32 %v1714, 1.0
  %v1716 = vrcp.pop %v1715
  %v1717 = vmul.f32 1.0, %v1716
  %v1718 = vadd.f32 %v1520, %v1639
  %v1719 = vxor.u32 %v1718, 2147483648
  %v1720 = vmul.f32 %v1719, 1.442695
  %v1721 = vpow.pop %v1720
  %v1722 = vadd.f32 %v1721, 1.0
  %v1723 = vrcp.pop %v1722
  %v1724 = vmul.f32 1.0, %v1723
  %v1725 = vadd.f32 %v1708, %v200
  %v1726 = vmul.f32 %v1717, %v1725
  %v1727 = vadd.f32 %v1521, %v1726
  %v1728 = vtanh.pop %v1727
  %v1729 = vsub.f32 1.0, %v1724
  %v1730 = vmul.f32 %v1729, %v1728
  %v1731 = vmul.f32 %v1724, %v1513
  %v1732 = vadd.f32 %v1730, %v1731
  %s1733 = scalar_lea.vmem [#allocation2], 48
  %1734 = vst [vmem:[%s1733] sm:$0xff] %v1732
  %s1735 = smul.u32 7, 3
  %s1736 = smul.addr %s1735, 8
  %s1737 = scalar_lea.vmem [#allocation3], %s1736
  %v1738 = vld [vmem:[%s1737] sm:$0xff]
  %v1739 = vld [vmem:[%s1737 + $0x8] sm:$0xff]
  %v1740 = vld [vmem:[%s1737 + $0x10] sm:$0xff]
  %v1741 = vld [vmem:[%s3] sm:$0xff]
  %v1742 = vld [vmem:[%s3 + $0x8] sm:$0xff]
  %v1743 = vld [vmem:[%s3 + $0x10] sm:$0xff]
  %v1744 = vld [vmem:[%s3 + $0x18] sm:$0xff]
  %v1745 = vld [vmem:[%s3 + $0x20] sm:$0xff]
  %v1746 = vld [vmem:[%s3 + $0x28] sm:$0xff]
  %v1747 = vld [vmem:[%s3 + $0x30] sm:$0xff]
  %v1748 = vld [vmem:[%s3 + $0x38] sm:$0xff]
  %v1749 = vld [vmem:[%s3 + $0x40] sm:$0xff]
  %v1750 = vld [vmem:[%s3 + $0x48] sm:$0xff]
  %v1751 = vld [vmem:[%s3 + $0x50] sm:$0xff]
  %v1752 = vld [vmem:[%s3 + $0x58] sm:$0xff]
  %v1753 = vld [vmem:[%s3 + $0x60] sm:$0xff]
  %v1754 = vld [vmem:[%s3 + $0x68] sm:$0xff]
  %v1755 = vld [vmem:[%s3 + $0x70] sm:$0xff]
  %v1756 = vld [vmem:[%s3 + $0x78] sm:$0xff]
  %v1757 = vld [vmem:[%s3 + $0x80] sm:$0xff]
  %v1758 = vld [vmem:[%s3 + $0x88] sm:$0xff]
  %v1759 = vld [vmem:[%s3 + $0x90] sm:$0xff]
  %v1760 = vld [vmem:[%s3 + $0x98] sm:$0xff]
  %v1761 = vld [vmem:[%s3 + $0xa0] sm:$0xff]
  %v1762 = vld [vmem:[%s3 + $0xa8] sm:$0xff]
  %v1763 = vld [vmem:[%s3 + $0xb0] sm:$0xff]
  %v1764 = vld [vmem:[%s3 + $0xb8] sm:$0xff]
  %v1765 = vld [vmem:[%s3 + $0xc0] sm:$0xff]
  %v1766 = vld [vmem:[%s3 + $0xc8] sm:$0xff]
  %v1767 = vld [vmem:[%s3 + $0xd0] sm:$0xff]
  %v1768 = vld [vmem:[%s3 + $0xd8] sm:$0xff]
  %v1769 = vld [vmem:[%s3 + $0xe0] sm:$0xff]
  %v1770 = vld [vmem:[%s3 + $0xe8] sm:$0xff]
  %v1771 = vld [vmem:[%s3 + $0xf0] sm:$0xff]
  %v1772 = vld [vmem:[%s3 + $0xf8] sm:$0xff]
  %v1773 = vld [vmem:[%s3 + $0x100] sm:$0xff]
  %v1774 = vld [vmem:[%s3 + $0x108] sm:$0xff]
  %v1775 = vld [vmem:[%s3 + $0x110] sm:$0xff]
  %v1776 = vld [vmem:[%s3 + $0x118] sm:$0xff]
  %v1777 = vld [vmem:[%s3 + $0x120] sm:$0xff]
  %v1778 = vld [vmem:[%s3 + $0x128] sm:$0xff]
  %v1779 = vld [vmem:[%s3 + $0x130] sm:$0xff]
  %v1780 = vld [vmem:[%s3 + $0x138] sm:$0xff]
  %v1781 = vld [vmem:[%s3 + $0x140] sm:$0xff]
  %v1782 = vld [vmem:[%s3 + $0x148] sm:$0xff]
  %v1783 = vld [vmem:[%s3 + $0x150] sm:$0xff]
  %v1784 = vld [vmem:[%s3 + $0x158] sm:$0xff]
  %v1785 = vld [vmem:[%s3 + $0x160] sm:$0xff]
  %v1786 = vld [vmem:[%s3 + $0x168] sm:$0xff]
  %v1787 = vld [vmem:[%s3 + $0x170] sm:$0xff]
  %v1788 = vld [vmem:[%s3 + $0x178] sm:$0xff]
  %1789 = vmatprep.subr.mxu0 %v1742
  %1790 = vmatpush1.msra.mxu0 %v1741
  %1791 = vmatprep.subr.mxu0 %v1745
  %1792 = vmatpush1.msra.mxu0 %v1744
  %1793 = vmatprep.subr.mxu0 %v1748
  %1794 = vmatpush1.msra.mxu0 %v1747
  %1795 = vmatprep.subr.mxu0 %v1751
  %1796 = vmatpush1.msra.mxu0 %v1750
  %1797 = vmatprep.subr.mxu0 %v1754
  %1798 = vmatpush1.msra.mxu0 %v1753
  %1799 = vmatprep.subr.mxu0 %v1757
  %1800 = vmatpush1.msra.mxu0 %v1756
  %1801 = vmatprep.subr.mxu0 %v1760
  %1802 = vmatpush1.msra.mxu0 %v1759
  %1803 = vmatprep.subr.mxu0 %v1763
  %1804 = vmatpush1.msra.mxu0 %v1762
  %1805 = vmatprep.subr.mxu0 %v1766
  %1806 = vmatpush1.msra.mxu0 %v1765
  %1807 = vmatprep.subr.mxu0 %v1769
  %1808 = vmatpush1.msra.mxu0 %v1768
  %1809 = vmatprep.subr.mxu0 %v1772
  %1810 = vmatpush1.msra.mxu0 %v1771
  %1811 = vmatprep.subr.mxu0 %v1775
  %1812 = vmatpush1.msra.mxu0 %v1774
  %1813 = vmatprep.subr.mxu0 %v1778
  %1814 = vmatpush1.msra.mxu0 %v1777
  %1815 = vmatprep.subr.mxu0 %v1781
  %1816 = vmatpush1.msra.mxu0 %v1780
  %1817 = vmatprep.subr.mxu0 %v1784
  %1818 = vmatpush1.msra.mxu0 %v1783
  %1819 = vmatprep.subr.mxu0 %v1787
  %1820 = vmatpush1.msra.mxu0 %v1786
  %1821 = vmatprep.subr.mxu0 0.0
  %1822 = vmatpush1.msra.mxu0 0.0
  %1823 = vmatprep.subr.mxu0 0.0
  %1824 = vmatpush1.msra.mxu0 0.0
  %1825 = vmatprep.subr.mxu0 0.0
  %1826 = vmatpush1.msra.mxu0 0.0
  %1827 = vmatprep.subr.mxu0 0.0
  %1828 = vmatpush1.msra.mxu0 0.0
  %1829 = vmatprep.subr.mxu0 0.0
  %1830 = vmatpush1.msra.mxu0 0.0
  %1831 = vmatprep.subr.mxu0 0.0
  %1832 = vmatpush1.msra.mxu0 0.0
  %1833 = vmatprep.subr.mxu0 0.0
  %1834 = vmatpush1.msra.mxu0 0.0
  %1835 = vmatprep.subr.mxu0 0.0
  %1836 = vmatpush1.msra.mxu0 0.0
  %1837 = vmatprep.subr.mxu0 0.0
  %1838 = vmatpush1.msra.mxu0 0.0
  %1839 = vmatprep.subr.mxu0 0.0
  %1840 = vmatpush1.msra.mxu0 0.0
  %1841 = vmatprep.subr.mxu0 0.0
  %1842 = vmatpush1.msra.mxu0 0.0
  %1843 = vmatprep.subr.mxu0 0.0
  %1844 = vmatpush1.msra.mxu0 0.0
  %1845 = vmatprep.subr.mxu0 0.0
  %1846 = vmatpush1.msra.mxu0 0.0
  %1847 = vmatprep.subr.mxu0 0.0
  %1848 = vmatpush1.msra.mxu0 0.0
  %1849 = vmatprep.subr.mxu0 0.0
  %1850 = vmatpush1.msra.mxu0 0.0
  %1851 = vmatprep.subr.mxu0 0.0
  %1852 = vmatpush1.msra.mxu0 0.0
  %1853 = vmatprep.mubr.f32.mxu0 0.0
  %1854 = vmatmul.mubr.f32.gmra.mrb[0].mxu0 %v1732
  %v1855 = vpop.f32.mrb[0].mxu0
  %v1856 = vadd.f32 0.0, %v1855
  %v1857 = vpop.f32.mrb[0].mxu0
  %v1858 = vadd.f32 0.0, %v1857
  %1859 = vdwg.mxu0
  %1860 = vmatprep.subr.mxu0 0.0
  %1861 = vmatpush1.msra.mxu0 %v1743
  %1862 = vmatprep.subr.mxu0 0.0
  %1863 = vmatpush1.msra.mxu0 %v1746
  %1864 = vmatprep.subr.mxu0 0.0
  %1865 = vmatpush1.msra.mxu0 %v1749
  %1866 = vmatprep.subr.mxu0 0.0
  %1867 = vmatpush1.msra.mxu0 %v1752
  %1868 = vmatprep.subr.mxu0 0.0
  %1869 = vmatpush1.msra.mxu0 %v1755
  %1870 = vmatprep.subr.mxu0 0.0
  %1871 = vmatpush1.msra.mxu0 %v1758
  %1872 = vmatprep.subr.mxu0 0.0
  %1873 = vmatpush1.msra.mxu0 %v1761
  %1874 = vmatprep.subr.mxu0 0.0
  %1875 = vmatpush1.msra.mxu0 %v1764
  %1876 = vmatprep.subr.mxu0 0.0
  %1877 = vmatpush1.msra.mxu0 %v1767
  %1878 = vmatprep.subr.mxu0 0.0
  %1879 = vmatpush1.msra.mxu0 %v1770
  %1880 = vmatprep.subr.mxu0 0.0
  %1881 = vmatpush1.msra.mxu0 %v1773
  %1882 = vmatprep.subr.mxu0 0.0
  %1883 = vmatpush1.msra.mxu0 %v1776
  %1884 = vmatprep.subr.mxu0 0.0
  %1885 = vmatpush1.msra.mxu0 %v1779
  %1886 = vmatprep.subr.mxu0 0.0
  %1887 = vmatpush1.msra.mxu0 %v1782
  %1888 = vmatprep.subr.mxu0 0.0
  %1889 = vmatpush1.msra.mxu0 %v1785
  %1890 = vmatprep.subr.mxu0 0.0
  %1891 = vmatpush1.msra.mxu0 %v1788
  %1892 = vmatprep.subr.mxu0 0.0
  %1893 = vmatpush1.msra.mxu0 0.0
  %1894 = vmatprep.subr.mxu0 0.0
  %1895 = vmatpush1.msra.mxu0 0.0
  %1896 = vmatprep.subr.mxu0 0.0
  %1897 = vmatpush1.msra.mxu0 0.0
  %1898 = vmatprep.subr.mxu0 0.0
  %1899 = vmatpush1.msra.mxu0 0.0
  %1900 = vmatprep.subr.mxu0 0.0
  %1901 = vmatpush1.msra.mxu0 0.0
  %1902 = vmatprep.subr.mxu0 0.0
  %1903 = vmatpush1.msra.mxu0 0.0
  %1904 = vmatprep.subr.mxu0 0.0
  %1905 = vmatpush1.msra.mxu0 0.0
  %1906 = vmatprep.subr.mxu0 0.0
  %1907 = vmatpush1.msra.mxu0 0.0
  %1908 = vmatprep.subr.mxu0 0.0
  %1909 = vmatpush1.msra.mxu0 0.0
  %1910 = vmatprep.subr.mxu0 0.0
  %1911 = vmatpush1.msra.mxu0 0.0
  %1912 = vmatprep.subr.mxu0 0.0
  %1913 = vmatpush1.msra.mxu0 0.0
  %1914 = vmatprep.subr.mxu0 0.0
  %1915 = vmatpush1.msra.mxu0 0.0
  %1916 = vmatprep.subr.mxu0 0.0
  %1917 = vmatpush1.msra.mxu0 0.0
  %1918 = vmatprep.subr.mxu0 0.0
  %1919 = vmatpush1.msra.mxu0 0.0
  %1920 = vmatprep.subr.mxu0 0.0
  %1921 = vmatpush1.msra.mxu0 0.0
  %1922 = vmatprep.subr.mxu0 0.0
  %1923 = vmatpush1.msra.mxu0 0.0
  %1924 = vmatprep.mubr.f32.mxu0 0.0
  %1925 = vmatmul.mubr.f32.gmra.mrb[0].mxu0 %v1732
  %v1926 = vpop.f32.mrb[0].mxu0
  %v1927 = vadd.f32 0.0, %v1926
  %v1928 = vpop.f32.mrb[0].mxu0
  %1929 = vdwg.mxu0
  %v1930 = vadd.f32 %v1738, %v1856
  %v1931 = vxor.u32 %v1930, 2147483648
  %v1932 = vmul.f32 %v1931, 1.442695
  %v1933 = vpow.pop %v1932
  %v1934 = vadd.f32 %v1933, 1.0
  %v1935 = vrcp.pop %v1934
  %v1936 = vmul.f32 1.0, %v1935
  %v1937 = vadd.f32 %v1739, %v1858
  %v1938 = vxor.u32 %v1937, 2147483648
  %v1939 = vmul.f32 %v1938, 1.442695
  %v1940 = vpow.pop %v1939
  %v1941 = vadd.f32 %v1940, 1.0
  %v1942 = vrcp.pop %v1941
  %v1943 = vmul.f32 1.0, %v1942
  %v1944 = vadd.f32 %v1927, %v200
  %v1945 = vmul.f32 %v1936, %v1944
  %v1946 = vadd.f32 %v1740, %v1945
  %v1947 = vtanh.pop %v1946
  %v1948 = vsub.f32 1.0, %v1943
  %v1949 = vmul.f32 %v1948, %v1947
  %v1950 = vmul.f32 %v1943, %v1732
  %v1951 = vadd.f32 %v1949, %v1950
  %s1952 = scalar_lea.vmem [#allocation2], 56
  %1953 = vst [vmem:[%s1952] sm:$0xff] %v1951
  %v1954 = vld [vmem:[#allocation2] sm:$0xff]
  %v1955 = vld [vmem:[#allocation2 + $0x8] sm:$0xff]
  %v1956 = vld [vmem:[#allocation2 + $0x10] sm:$0xff]
  %v1957 = vld [vmem:[#allocation2 + $0x18] sm:$0xff]
  %v1958 = vld [vmem:[#allocation2 + $0x20] sm:$0xff]
  %v1959 = vld [vmem:[#allocation2 + $0x28] sm:$0xff]
  %v1960 = vld [vmem:[#allocation2 + $0x30] sm:$0xff]
  %v1961 = vld [vmem:[#allocation2 + $0x38] sm:$0xff]
  %v1962 = vld [vmem:[%s6] sm:$0xff]
  %v1963 = vld [vmem:[%s6 + $0x8] sm:$0xff]
  %v1964 = vld [vmem:[%s6 + $0x10] sm:$0xff]
  %v1965 = vld [vmem:[%s6 + $0x18] sm:$0xff]
  %v1966 = vld [vmem:[%s6 + $0x20] sm:$0xff]
  %v1967 = vld [vmem:[%s6 + $0x28] sm:$0xff]
  %v1968 = vld [vmem:[%s6 + $0x30] sm:$0xff]
  %v1969 = vld [vmem:[%s6 + $0x38] sm:$0xff]
  %v1970 = vld [vmem:[%s6 + $0x40] sm:$0xff]
  %v1971 = vld [vmem:[%s6 + $0x48] sm:$0xff]
  %v1972 = vld [vmem:[%s6 + $0x50] sm:$0xff]
  %v1973 = vld [vmem:[%s6 + $0x58] sm:$0xff]
  %v1974 = vld [vmem:[%s6 + $0x60] sm:$0xff]
  %v1975 = vld [vmem:[%s6 + $0x68] sm:$0xff]
  %v1976 = vld [vmem:[%s6 + $0x70] sm:$0xff]
  %v1977 = vld [vmem:[%s6 + $0x78] sm:$0xff]
  %v1978 = vld [vmem:[%s6 + $0x80] sm:$0xff]
  %v1979 = vld [vmem:[%s6 + $0x88] sm:$0xff]
  %v1980 = vld [vmem:[%s6 + $0x90] sm:$0xff]
  %v1981 = vld [vmem:[%s6 + $0x98] sm:$0xff]
  %v1982 = vld [vmem:[%s6 + $0xa0] sm:$0xff]
  %v1983 = vld [vmem:[%s6 + $0xa8] sm:$0xff]
  %v1984 = vld [vmem:[%s6 + $0xb0] sm:$0xff]
  %v1985 = vld [vmem:[%s6 + $0xb8] sm:$0xff]
  %v1986 = vld [vmem:[%s6 + $0xc0] sm:$0xff]
  %v1987 = vld [vmem:[%s6 + $0xc8] sm:$0xff]
  %v1988 = vld [vmem:[%s6 + $0xd0] sm:$0xff]
  %v1989 = vld [vmem:[%s6 + $0xd8] sm:$0xff]
  %v1990 = vld [vmem:[%s6 + $0xe0] sm:$0xff]
  %v1991 = vld [vmem:[%s6 + $0xe8] sm:$0xff]
  %v1992 = vld [vmem:[%s6 + $0xf0] sm:$0xff]
  %v1993 = vld [vmem:[%s6 + $0xf8] sm:$0xff]
  %v1994 = vld [vmem:[%s6 + $0x100] sm:$0xff]
  %v1995 = vld [vmem:[%s6 + $0x108] sm:$0xff]
  %v1996 = vld [vmem:[%s6 + $0x110] sm:$0xff]
  %v1997 = vld [vmem:[%s6 + $0x118] sm:$0xff]
  %v1998 = vld [vmem:[%s6 + $0x120] sm:$0xff]
  %v1999 = vld [vmem:[%s6 + $0x128] sm:$0xff]
  %v2000 = vld [vmem:[%s6 + $0x130] sm:$0xff]
  %v2001 = vld [vmem:[%s6 + $0x138] sm:$0xff]
  %v2002 = vld [vmem:[%s6 + $0x140] sm:$0xff]
  %v2003 = vld [vmem:[%s6 + $0x148] sm:$0xff]
  %v2004 = vld [vmem:[%s6 + $0x150] sm:$0xff]
  %v2005 = vld [vmem:[%s6 + $0x158] sm:$0xff]
  %v2006 = vld [vmem:[%s6 + $0x160] sm:$0xff]
  %v2007 = vld [vmem:[%s6 + $0x168] sm:$0xff]
  %v2008 = vld [vmem:[%s6 + $0x170] sm:$0xff]
  %v2009 = vld [vmem:[%s6 + $0x178] sm:$0xff]
  %v2010 = vld [vmem:[%s8] sm:$0x7]
  %v2012 = vlaneseq
  %v2013 = vshrl.u32 %v2012, 7
  %v2014 = vsub.s32 0, %v2013
  %v2015 = vrot.slane %v2010, %v2014
  %v2016 = vlaneseq
  %v2017 = vshrl.u32 %v2016, 7
  %v2018 = vsub.s32 1, %v2017
  %v2019 = vrot.slane %v2010, %v2018
  %v2020 = vlaneseq
  %v2021 = vshrl.u32 %v2020, 7
  %v2022 = vsub.s32 2, %v2021
  %v2023 = vrot.slane %v2010, %v2022
  %2027 = vmatprep.subr.mxu0 %v1963
  %2028 = vmatpush1.msra.mxu0 %v1962
  %2029 = vmatprep.subr.mxu0 %v1966
  %2030 = vmatpush1.msra.mxu0 %v1965
  %2031 = vmatprep.subr.mxu0 %v1969
  %2032 = vmatpush1.msra.mxu0 %v1968
  %2033 = vmatprep.subr.mxu0 %v1972
  %2034 = vmatpush1.msra.mxu0 %v1971
  %2035 = vmatprep.subr.mxu0 %v1975
  %2036 = vmatpush1.msra.mxu0 %v1974
  %2037 = vmatprep.subr.mxu0 %v1978
  %2038 = vmatpush1.msra.mxu0 %v1977
  %2039 = vmatprep.subr.mxu0 %v1981
  %2040 = vmatpush1.msra.mxu0 %v1980
  %2041 = vmatprep.subr.mxu0 %v1984
  %2042 = vmatpush1.msra.mxu0 %v1983
  %2043 = vmatprep.subr.mxu0 %v1987
  %2044 = vmatpush1.msra.mxu0 %v1986
  %2045 = vmatprep.subr.mxu0 %v1990
  %2046 = vmatpush1.msra.mxu0 %v1989
  %2047 = vmatprep.subr.mxu0 %v1993
  %2048 = vmatpush1.msra.mxu0 %v1992
  %2049 = vmatprep.subr.mxu0 %v1996
  %2050 = vmatpush1.msra.mxu0 %v1995
  %2051 = vmatprep.subr.mxu0 %v1999
  %2052 = vmatpush1.msra.mxu0 %v1998
  %2053 = vmatprep.subr.mxu0 %v2002
  %2054 = vmatpush1.msra.mxu0 %v2001
  %2055 = vmatprep.subr.mxu0 %v2005
  %2056 = vmatpush1.msra.mxu0 %v2004
  %2057 = vmatprep.subr.mxu0 %v2008
  %2058 = vmatpush1.msra.mxu0 %v2007
  %2059 = vmatprep.subr.mxu0 0.0
  %2060 = vmatpush1.msra.mxu0 0.0
  %2061 = vmatprep.subr.mxu0 0.0
  %2062 = vmatpush1.msra.mxu0 0.0
  %2063 = vmatprep.subr.mxu0 0.0
  %2064 = vmatpush1.msra.mxu0 0.0
  %2065 = vmatprep.subr.mxu0 0.0
  %2066 = vmatpush1.msra.mxu0 0.0
  %2067 = vmatprep.subr.mxu0 0.0
  %2068 = vmatpush1.msra.mxu0 0.0
  %2069 = vmatprep.subr.mxu0 0.0
  %2070 = vmatpush1.msra.mxu0 0.0
  %2071 = vmatprep.subr.mxu0 0.0
  %2072 = vmatpush1.msra.mxu0 0.0
  %2073 = vmatprep.subr.mxu0 0.0
  %2074 = vmatpush1.msra.mxu0 0.0
  %2075 = vmatprep.subr.mxu0 0.0
  %2076 = vmatpush1.msra.mxu0 0.0
  %2077 = vmatprep.subr.mxu0 0.0
  %2078 = vmatpush1.msra.mxu0 0.0
  %2079 = vmatprep.subr.mxu0 0.0
  %2080 = vmatpush1.msra.mxu0 0.0
  %2081 = vmatprep.subr.mxu0 0.0
  %2082 = vmatpush1.msra.mxu0 0.0
  %2083 = vmatprep.subr.mxu0 0.0
  %2084 = vmatpush1.msra.mxu0 0.0
  %2085 = vmatprep.subr.mxu0 0.0
  %2086 = vmatpush1.msra.mxu0 0.0
  %2087 = vmatprep.subr.mxu0 0.0
  %2088 = vmatpush1.msra.mxu0 0.0
  %2089 = vmatprep.subr.mxu0 0.0
  %2090 = vmatpush1.msra.mxu0 0.0
  %2091 = vmatprep.mubr.f32.mxu0 0.0
  %2092 = vmatmul.mubr.f32.gmra.mrb[0].mxu0 %v1954
  %v2093 = vpop.f32.mrb[0].mxu0
  %v2094 = vadd.f32 %v2015, %v2093
  %v2095 = vpop.f32.mrb[0].mxu0
  %v2096 = vadd.f32 %v2019, %v2095
  %2097 = vmatprep.mubr.f32.mxu0 0.0
  %2098 = vmatmul.mubr.f32.gmra.mrb[0].mxu0 %v1955
  %v2099 = vpop.f32.mrb[0].mxu0
  %v2100 = vadd.f32 %v2015, %v2099
  %v2101 = vpop.f32.mrb[0].mxu0
  %v2102 = vadd.f32 %v2019, %v2101
  %2103 = vmatprep.mubr.f32.mxu0 0.0
  %2104 = vmatmul.mubr.f32.gmra.mrb[0].mxu0 %v1956
  %v2105 = vpop.f32.mrb[0].mxu0
  %v2106 = vadd.f32 %v2015, %v2105
  %v2107 = vpop.f32.mrb[0].mxu0
  %v2108 = vadd.f32 %v2019, %v2107
  %2109 = vmatprep.mubr.f32.mxu0 0.0
  %2110 = vmatmul.mubr.f32.gmra.mrb[0].mxu0 %v1957
  %v2111 = vpop.f32.mrb[0].mxu0
  %v2112 = vadd.f32 %v2015, %v2111
  %v2113 = vpop.f32.mrb[0].mxu0
  %v2114 = vadd.f32 %v2019, %v2113
  %2115 = vmatprep.mubr.f32.mxu0 0.0
  %2116 = vmatmul.mubr.f32.gmra.mrb[0].mxu0 %v1958
  %v2117 = vpop.f32.mrb[0].mxu0
  %v2118 = vadd.f32 %v2015, %v2117
  %v2119 = vpop.f32.mrb[0].mxu0
  %v2120 = vadd.f32 %v2019, %v2119
  %2121 = vmatprep.mubr.f32.mxu0 0.0
  %2122 = vmatmul.mubr.f32.gmra.mrb[0].mxu0 %v1959
  %v2123 = vpop.f32.mrb[0].mxu0
  %v2124 = vadd.f32 %v2015, %v2123
  %v2125 = vpop.f32.mrb[0].mxu0
  %v2126 = vadd.f32 %v2019, %v2125
  %2127 = vmatprep.mubr.f32.mxu0 0.0
  %2128 = vmatmul.mubr.f32.gmra.mrb[0].mxu0 %v1960
  %v2129 = vpop.f32.mrb[0].mxu0
  %v2130 = vadd.f32 %v2015, %v2129
  %v2131 = vpop.f32.mrb[0].mxu0
  %v2132 = vadd.f32 %v2019, %v2131
  %2133 = vmatprep.mubr.f32.mxu0 0.0
  %2134 = vmatmul.mubr.f32.gmra.mrb[0].mxu0 %v1961
  %v2135 = vpop.f32.mrb[0].mxu0
  %v2136 = vadd.f32 %v2015, %v2135
  %v2137 = vpop.f32.mrb[0].mxu0
  %v2138 = vadd.f32 %v2019, %v2137
  %2139 = vdwg.mxu0
  %2140 = vmatprep.subr.mxu0 0.0
  %2141 = vmatpush1.msra.mxu0 %v1964
  %2142 = vmatprep.subr.mxu0 0.0
  %2143 = vmatpush1.msra.mxu0 %v1967
  %2144 = vmatprep.subr.mxu0 0.0
  %2145 = vmatpush1.msra.mxu0 %v1970
  %2146 = vmatprep.subr.mxu0 0.0
  %2147 = vmatpush1.msra.mxu0 %v1973
  %2148 = vmatprep.subr.mxu0 0.0
  %2149 = vmatpush1.msra.mxu0 %v1976
  %2150 = vmatprep.subr.mxu0 0.0
  %2151 = vmatpush1.msra.mxu0 %v1979
  %2152 = vmatprep.subr.mxu0 0.0
  %2153 = vmatpush1.msra.mxu0 %v1982
  %2154 = vmatprep.subr.mxu0 0.0
  %2155 = vmatpush1.msra.mxu0 %v1985
  %2156 = vmatprep.subr.mxu0 0.0
  %2157 = vmatpush1.msra.mxu0 %v1988
  %2158 = vmatprep.subr.mxu0 0.0
  %2159 = vmatpush1.msra.mxu0 %v1991
  %2160 = vmatprep.subr.mxu0 0.0
  %2161 = vmatpush1.msra.mxu0 %v1994
  %2162 = vmatprep.subr.mxu0 0.0
  %2163 = vmatpush1.msra.mxu0 %v1997
  %2164 = vmatprep.subr.mxu0 0.0
  %2165 = vmatpush1.msra.mxu0 %v2000
  %2166 = vmatprep.subr.mxu0 0.0
  %2167 = vmatpush1.msra.mxu0 %v2003
  %2168 = vmatprep.subr.mxu0 0.0
  %2169 = vmatpush1.msra.mxu0 %v2006
  %2170 = vmatprep.subr.mxu0 0.0
  %2171 = vmatpush1.msra.mxu0 %v2009
  %2172 = vmatprep.subr.mxu0 0.0
  %2173 = vmatpush1.msra.mxu0 0.0
  %2174 = vmatprep.subr.mxu0 0.0
  %2175 = vmatpush1.msra.mxu0 0.0
  %2176 = vmatprep.subr.mxu0 0.0
  %2177 = vmatpush1.msra.mxu0 0.0
  %2178 = vmatprep.subr.mxu0 0.0
  %2179 = vmatpush1.msra.mxu0 0.0
  %2180 = vmatprep.subr.mxu0 0.0
  %2181 = vmatpush1.msra.mxu0 0.0
  %2182 = vmatprep.subr.mxu0 0.0
  %2183 = vmatpush1.msra.mxu0 0.0
  %2184 = vmatprep.subr.mxu0 0.0
  %2185 = vmatpush1.msra.mxu0 0.0
  %2186 = vmatprep.subr.mxu0 0.0
  %2187 = vmatpush1.msra.mxu0 0.0
  %2188 = vmatprep.subr.mxu0 0.0
  %2189 = vmatpush1.msra.mxu0 0.0
  %2190 = vmatprep.subr.mxu0 0.0
  %2191 = vmatpush1.msra.mxu0 0.0
  %2192 = vmatprep.subr.mxu0 0.0
  %2193 = vmatpush1.msra.mxu0 0.0
  %2194 = vmatprep.subr.mxu0 0.0
  %2195 = vmatpush1.msra.mxu0 0.0
  %2196 = vmatprep.subr.mxu0 0.0
  %2197 = vmatpush1.msra.mxu0 0.0
  %2198 = vmatprep.subr.mxu0 0.0
  %2199 = vmatpush1.msra.mxu0 0.0
  %2200 = vmatprep.subr.mxu0 0.0
  %2201 = vmatpush1.msra.mxu0 0.0
  %2202 = vmatprep.subr.mxu0 0.0
  %2203 = vmatpush1.msra.mxu0 0.0
  %2204 = vmatprep.mubr.f32.mxu0 0.0
  %2205 = vmatmul.mubr.f32.gmra.mrb[0].mxu0 %v1954
  %v2206 = vpop.f32.mrb[0].mxu0
  %v2207 = vadd.f32 %v2023, %v2206
  %v2208 = vpop.f32.mrb[0].mxu0
  %2209 = vmatprep.mubr.f32.mxu0 0.0
  %2210 = vmatmul.mubr.f32.gmra.mrb[0].mxu0 %v1955
  %v2211 = vpop.f32.mrb[0].mxu0
  %v2212 = vadd.f32 %v2023, %v2211
  %v2213 = vpop.f32.mrb[0].mxu0
  %2214 = vmatprep.mubr.f32.mxu0 0.0
  %2215 = vmatmul.mubr.f32.gmra.mrb[0].mxu0 %v1956
  %v2216 = vpop.f32.mrb[0].mxu0
  %v2217 = vadd.f32 %v2023, %v2216
  %v2218 = vpop.f32.mrb[0].mxu0
  %2219 = vmatprep.mubr.f32.mxu0 0.0
  %2220 = vmatmul.mubr.f32.gmra.mrb[0].mxu0 %v1957
  %v2221 = vpop.f32.mrb[0].mxu0
  %v2222 = vadd.f32 %v2023, %v2221
  %v2223 = vpop.f32.mrb[0].mxu0
  %2224 = vmatprep.mubr.f32.mxu0 0.0
  %2225 = vmatmul.mubr.f32.gmra.mrb[0].mxu0 %v1958
  %v2226 = vpop.f32.mrb[0].mxu0
  %v2227 = vadd.f32 %v2023, %v2226
  %v2228 = vpop.f32.mrb[0].mxu0
  %2229 = vmatprep.mubr.f32.mxu0 0.0
  %2230 = vmatmul.mubr.f32.gmra.mrb[0].mxu0 %v1959
  %v2231 = vpop.f32.mrb[0].mxu0
  %v2232 = vadd.f32 %v2023, %v2231
  %v2233 = vpop.f32.mrb[0].mxu0
  %2234 = vmatprep.mubr.f32.mxu0 0.0
  %2235 = vmatmul.mubr.f32.gmra.mrb[0].mxu0 %v1960
  %v2236 = vpop.f32.mrb[0].mxu0
  %v2237 = vadd.f32 %v2023, %v2236
  %v2238 = vpop.f32.mrb[0].mxu0
  %2239 = vmatprep.mubr.f32.mxu0 0.0
  %2240 = vmatmul.mubr.f32.gmra.mrb[0].mxu0 %v1961
  %v2241 = vpop.f32.mrb[0].mxu0
  %v2242 = vadd.f32 %v2023, %v2241
  %v2243 = vpop.f32.mrb[0].mxu0
  %2244 = vdwg.mxu0
  %2245 = vst [vmem:[#allocation3] sm:$0xff] %v2094
  %2246 = vst [vmem:[#allocation3 + $0x8] sm:$0xff] %v2096
  %2247 = vst [vmem:[#allocation3 + $0x10] sm:$0xff] %v2207
  %2248 = vst [vmem:[#allocation3 + $0x18] sm:$0xff] %v2100
  %2249 = vst [vmem:[#allocation3 + $0x20] sm:$0xff] %v2102
  %2250 = vst [vmem:[#allocation3 + $0x28] sm:$0xff] %v2212
  %2251 = vst [vmem:[#allocation3 + $0x30] sm:$0xff] %v2106
  %2252 = vst [vmem:[#allocation3 + $0x38] sm:$0xff] %v2108
  %2253 = vst [vmem:[#allocation3 + $0x40] sm:$0xff] %v2217
  %2254 = vst [vmem:[#allocation3 + $0x48] sm:$0xff] %v2112
  %2255 = vst [vmem:[#allocation3 + $0x50] sm:$0xff] %v2114
  %2256 = vst [vmem:[#allocation3 + $0x58] sm:$0xff] %v2222
  %2257 = vst [vmem:[#allocation3 + $0x60] sm:$0xff] %v2118
  %2258 = vst [vmem:[#allocation3 + $0x68] sm:$0xff] %v2120
  %2259 = vst [vmem:[#allocation3 + $0x70] sm:$0xff] %v2227
  %2260 = vst [vmem:[#allocation3 + $0x78] sm:$0xff] %v2124
  %2261 = vst [vmem:[#allocation3 + $0x80] sm:$0xff] %v2126
  %2262 = vst [vmem:[#allocation3 + $0x88] sm:$0xff] %v2232
  %2263 = vst [vmem:[#allocation3 + $0x90] sm:$0xff] %v2130
  %2264 = vst [vmem:[#allocation3 + $0x98] sm:$0xff] %v2132
  %2265 = vst [vmem:[#allocation3 + $0xa0] sm:$0xff] %v2237
  %2266 = vst [vmem:[#allocation3 + $0xa8] sm:$0xff] %v2136
  %2267 = vst [vmem:[#allocation3 + $0xb0] sm:$0xff] %v2138
  %2268 = vst [vmem:[#allocation3 + $0xb8] sm:$0xff] %v2242
  %v2269 = vld [vmem:[%s9] sm:$0x1]
  %v2271 = vlaneseq
  %v2272 = vshrl.u32 %v2271, 7
  %v2273 = vsub.s32 0, %v2272
  %v2274 = vrot.slane %v2269, %v2273
  %v2276 = vld [vmem:[%s11] sm:$0x1]
  %v2278 = vlaneseq
  %v2279 = vshrl.u32 %v2278, 7
  %v2280 = vsub.s32 0, %v2279
  %v2281 = vrot.slane %v2276, %v2280
  %s2283 = scalar_lea.vmem %s1, 8
  %v2284 = vld [vmem:[%s2283] sm:$0xff]
  %v2285 = vld [vmem:[%s205] sm:$0xff]
  %v2286 = vld [vmem:[%s205 + $0x8] sm:$0xff]
  %v2287 = vld [vmem:[%s205 + $0x10] sm:$0xff]
  %v2288 = vld [vmem:[%s7] sm:$0xff]
  %v2289 = vld [vmem:[%s7 + $0x8] sm:$0xff]
  %v2290 = vld [vmem:[%s7 + $0x10] sm:$0xff]
  %v2291 = vld [vmem:[%s7 + $0x18] sm:$0xff]
  %v2292 = vld [vmem:[%s7 + $0x20] sm:$0xff]
  %v2293 = vld [vmem:[%s7 + $0x28] sm:$0xff]
  %v2294 = vld [vmem:[%s7 + $0x30] sm:$0xff]
  %v2295 = vld [vmem:[%s7 + $0x38] sm:$0xff]
  %v2296 = vld [vmem:[%s7 + $0x40] sm:$0xff]
  %v2297 = vld [vmem:[%s7 + $0x48] sm:$0xff]
  %v2298 = vld [vmem:[%s7 + $0x50] sm:$0xff]
  %v2299 = vld [vmem:[%s7 + $0x58] sm:$0xff]
  %v2300 = vld [vmem:[%s7 + $0x60] sm:$0xff]
  %v2301 = vld [vmem:[%s7 + $0x68] sm:$0xff]
  %v2302 = vld [vmem:[%s7 + $0x70] sm:$0xff]
  %v2303 = vld [vmem:[%s7 + $0x78] sm:$0xff]
  %v2304 = vld [vmem:[%s7 + $0x80] sm:$0xff]
  %v2305 = vld [vmem:[%s7 + $0x88] sm:$0xff]
  %v2306 = vld [vmem:[%s7 + $0x90] sm:$0xff]
  %v2307 = vld [vmem:[%s7 + $0x98] sm:$0xff]
  %v2308 = vld [vmem:[%s7 + $0xa0] sm:$0xff]
  %v2309 = vld [vmem:[%s7 + $0xa8] sm:$0xff]
  %v2310 = vld [vmem:[%s7 + $0xb0] sm:$0xff]
  %v2311 = vld [vmem:[%s7 + $0xb8] sm:$0xff]
  %v2312 = vld [vmem:[%s7 + $0xc0] sm:$0xff]
  %v2313 = vld [vmem:[%s7 + $0xc8] sm:$0xff]
  %v2314 = vld [vmem:[%s7 + $0xd0] sm:$0xff]
  %v2315 = vld [vmem:[%s7 + $0xd8] sm:$0xff]
  %v2316 = vld [vmem:[%s7 + $0xe0] sm:$0xff]
  %v2317 = vld [vmem:[%s7 + $0xe8] sm:$0xff]
  %v2318 = vld [vmem:[%s7 + $0xf0] sm:$0xff]
  %v2319 = vld [vmem:[%s7 + $0xf8] sm:$0xff]
  %v2320 = vld [vmem:[%s7 + $0x100] sm:$0xff]
  %v2321 = vld [vmem:[%s7 + $0x108] sm:$0xff]
  %v2322 = vld [vmem:[%s7 + $0x110] sm:$0xff]
  %v2323 = vld [vmem:[%s7 + $0x118] sm:$0xff]
  %v2324 = vld [vmem:[%s7 + $0x120] sm:$0xff]
  %v2325 = vld [vmem:[%s7 + $0x128] sm:$0xff]
  %v2326 = vld [vmem:[%s7 + $0x130] sm:$0xff]
  %v2327 = vld [vmem:[%s7 + $0x138] sm:$0xff]
  %v2328 = vld [vmem:[%s7 + $0x140] sm:$0xff]
  %v2329 = vld [vmem:[%s7 + $0x148] sm:$0xff]
  %v2330 = vld [vmem:[%s7 + $0x150] sm:$0xff]
  %v2331 = vld [vmem:[%s7 + $0x158] sm:$0xff]
  %v2332 = vld [vmem:[%s7 + $0x160] sm:$0xff]
  %v2333 = vld [vmem:[%s7 + $0x168] sm:$0xff]
  %v2334 = vld [vmem:[%s7 + $0x170] sm:$0xff]
  %v2335 = vld [vmem:[%s7 + $0x178] sm:$0xff]
  %2336 = vmatprep.subr.mxu0 %v2289
  %2337 = vmatpush1.msra.mxu0 %v2288
  %2338 = vmatprep.subr.mxu0 %v2292
  %2339 = vmatpush1.msra.mxu0 %v2291
  %2340 = vmatprep.subr.mxu0 %v2295
  %2341 = vmatpush1.msra.mxu0 %v2294
  %2342 = vmatprep.subr.mxu0 %v2298
  %2343 = vmatpush1.msra.mxu0 %v2297
  %2344 = vmatprep.subr.mxu0 %v2301
  %2345 = vmatpush1.msra.mxu0 %v2300
  %2346 = vmatprep.subr.mxu0 %v2304
  %2347 = vmatpush1.msra.mxu0 %v2303
  %2348 = vmatprep.subr.mxu0 %v2307
  %2349 = vmatpush1.msra.mxu0 %v2306
  %2350 = vmatprep.subr.mxu0 %v2310
  %2351 = vmatpush1.msra.mxu0 %v2309
  %2352 = vmatprep.subr.mxu0 %v2313
  %2353 = vmatpush1.msra.mxu0 %v2312
  %2354 = vmatprep.subr.mxu0 %v2316
  %2355 = vmatpush1.msra.mxu0 %v2315
  %2356 = vmatprep.subr.mxu0 %v2319
  %2357 = vmatpush1.msra.mxu0 %v2318
  %2358 = vmatprep.subr.mxu0 %v2322
  %2359 = vmatpush1.msra.mxu0 %v2321
  %2360 = vmatprep.subr.mxu0 %v2325
  %2361 = vmatpush1.msra.mxu0 %v2324
  %2362 = vmatprep.subr.mxu0 %v2328
  %2363 = vmatpush1.msra.mxu0 %v2327
  %2364 = vmatprep.subr.mxu0 %v2331
  %2365 = vmatpush1.msra.mxu0 %v2330
  %2366 = vmatprep.subr.mxu0 %v2334
  %2367 = vmatpush1.msra.mxu0 %v2333
  %2368 = vmatprep.subr.mxu0 0.0
  %2369 = vmatpush1.msra.mxu0 0.0
  %2370 = vmatprep.subr.mxu0 0.0
  %2371 = vmatpush1.msra.mxu0 0.0
  %2372 = vmatprep.subr.mxu0 0.0
  %2373 = vmatpush1.msra.mxu0 0.0
  %2374 = vmatprep.subr.mxu0 0.0
  %2375 = vmatpush1.msra.mxu0 0.0
  %2376 = vmatprep.subr.mxu0 0.0
  %2377 = vmatpush1.msra.mxu0 0.0
  %2378 = vmatprep.subr.mxu0 0.0
  %2379 = vmatpush1.msra.mxu0 0.0
  %2380 = vmatprep.subr.mxu0 0.0
  %2381 = vmatpush1.msra.mxu0 0.0
  %2382 = vmatprep.subr.mxu0 0.0
  %2383 = vmatpush1.msra.mxu0 0.0
  %2384 = vmatprep.subr.mxu0 0.0
  %2385 = vmatpush1.msra.mxu0 0.0
  %2386 = vmatprep.subr.mxu0 0.0
  %2387 = vmatpush1.msra.mxu0 0.0
  %2388 = vmatprep.subr.mxu0 0.0
  %2389 = vmatpush1.msra.mxu0 0.0
  %2390 = vmatprep.subr.mxu0 0.0
  %2391 = vmatpush1.msra.mxu0 0.0
  %2392 = vmatprep.subr.mxu0 0.0
  %2393 = vmatpush1.msra.mxu0 0.0
  %2394 = vmatprep.subr.mxu0 0.0
  %2395 = vmatpush1.msra.mxu0 0.0
  %2396 = vmatprep.subr.mxu0 0.0
  %2397 = vmatpush1.msra.mxu0 0.0
  %2398 = vmatprep.subr.mxu0 0.0
  %2399 = vmatpush1.msra.mxu0 0.0
  %2400 = vmatprep.mubr.f32.mxu0 0.0
  %2401 = vmatmul.mubr.f32.gmra.mrb[0].mxu0 %v2284
  %v2402 = vpop.f32.mrb[0].mxu0
  %v2403 = vadd.f32 0.0, %v2402
  %v2404 = vpop.f32.mrb[0].mxu0
  %v2405 = vadd.f32 0.0, %v2404
  %2406 = vdwg.mxu0
  %2407 = vmatprep.subr.mxu0 0.0
  %2408 = vmatpush1.msra.mxu0 %v2290
  %2409 = vmatprep.subr.mxu0 0.0
  %2410 = vmatpush1.msra.mxu0 %v2293
  %2411 = vmatprep.subr.mxu0 0.0
  %2412 = vmatpush1.msra.mxu0 %v2296
  %2413 = vmatprep.subr.mxu0 0.0
  %2414 = vmatpush1.msra.mxu0 %v2299
  %2415 = vmatprep.subr.mxu0 0.0
  %2416 = vmatpush1.msra.mxu0 %v2302
  %2417 = vmatprep.subr.mxu0 0.0
  %2418 = vmatpush1.msra.mxu0 %v2305
  %2419 = vmatprep.subr.mxu0 0.0
  %2420 = vmatpush1.msra.mxu0 %v2308
  %2421 = vmatprep.subr.mxu0 0.0
  %2422 = vmatpush1.msra.mxu0 %v2311
  %2423 = vmatprep.subr.mxu0 0.0
  %2424 = vmatpush1.msra.mxu0 %v2314
  %2425 = vmatprep.subr.mxu0 0.0
  %2426 = vmatpush1.msra.mxu0 %v2317
  %2427 = vmatprep.subr.mxu0 0.0
  %2428 = vmatpush1.msra.mxu0 %v2320
  %2429 = vmatprep.subr.mxu0 0.0
  %2430 = vmatpush1.msra.mxu0 %v2323
  %2431 = vmatprep.subr.mxu0 0.0
  %2432 = vmatpush1.msra.mxu0 %v2326
  %2433 = vmatprep.subr.mxu0 0.0
  %2434 = vmatpush1.msra.mxu0 %v2329
  %2435 = vmatprep.subr.mxu0 0.0
  %2436 = vmatpush1.msra.mxu0 %v2332
  %2437 = vmatprep.subr.mxu0 0.0
  %2438 = vmatpush1.msra.mxu0 %v2335
  %2439 = vmatprep.subr.mxu0 0.0
  %2440 = vmatpush1.msra.mxu0 0.0
  %2441 = vmatprep.subr.mxu0 0.0
  %2442 = vmatpush1.msra.mxu0 0.0
  %2443 = vmatprep.subr.mxu0 0.0
  %2444 = vmatpush1.msra.mxu0 0.0
  %2445 = vmatprep.subr.mxu0 0.0
  %2446 = vmatpush1.msra.mxu0 0.0
  %2447 = vmatprep.subr.mxu0 0.0
  %2448 = vmatpush1.msra.mxu0 0.0
  %2449 = vmatprep.subr.mxu0 0.0
  %2450 = vmatpush1.msra.mxu0 0.0
  %2451 = vmatprep.subr.mxu0 0.0
  %2452 = vmatpush1.msra.mxu0 0.0
  %2453 = vmatprep.subr.mxu0 0.0
  %2454 = vmatpush1.msra.mxu0 0.0
  %2455 = vmatprep.subr.mxu0 0.0
  %2456 = vmatpush1.msra.mxu0 0.0
  %2457 = vmatprep.subr.mxu0 0.0
  %2458 = vmatpush1.msra.mxu0 0.0
  %2459 = vmatprep.subr.mxu0 0.0
  %2460 = vmatpush1.msra.mxu0 0.0
  %2461 = vmatprep.subr.mxu0 0.0
  %2462 = vmatpush1.msra.mxu0 0.0
  %2463 = vmatprep.subr.mxu0 0.0
  %2464 = vmatpush1.msra.mxu0 0.0
  %2465 = vmatprep.subr.mxu0 0.0
  %2466 = vmatpush1.msra.mxu0 0.0
  %2467 = vmatprep.subr.mxu0 0.0
  %2468 = vmatpush1.msra.mxu0 0.0
  %2469 = vmatprep.subr.mxu0 0.0
  %2470 = vmatpush1.msra.mxu0 0.0
  %2471 = vmatprep.mubr.f32.mxu0 0.0
  %2472 = vmatmul.mubr.f32.gmra.mrb[0].mxu0 %v2284
  %v2473 = vpop.f32.mrb[0].mxu0
  %v2474 = vadd.f32 0.0, %v2473
  %v2475 = vpop.f32.mrb[0].mxu0
  %2476 = vdwg.mxu0
  %v2477 = vadd.f32 %v2285, %v2403
  %v2478 = vxor.u32 %v2477, 2147483648
  %v2479 = vmul.f32 %v2478, 1.442695
  %v2480 = vpow.pop %v2479
  %v2481 = vadd.f32 %v2480, 1.0
  %v2482 = vrcp.pop %v2481
  %v2483 = vmul.f32 1.0, %v2482
  %v2484 = vadd.f32 %v2286, %v2405
  %v2485 = vxor.u32 %v2484, 2147483648
  %v2486 = vmul.f32 %v2485, 1.442695
  %v2487 = vpow.pop %v2486
  %v2488 = vadd.f32 %v2487, 1.0
  %v2489 = vrcp.pop %v2488
  %v2490 = vmul.f32 1.0, %v2489
  %v2491 = vadd.f32 %v2474, %v2274
  %v2492 = vmul.f32 %v2483, %v2491
  %v2493 = vadd.f32 %v2287, %v2492
  %v2494 = vtanh.pop %v2493
  %v2495 = vsub.f32 1.0, %v2490
  %v2496 = vmul.f32 %v2495, %v2494
  %v2497 = vmul.f32 %v2490, %v2284
  %v2498 = vadd.f32 %v2496, %v2497
  %v2499 = vld [vmem:[%s10] sm:$0xff]
  %v2500 = vld [vmem:[%s10 + $0x8] sm:$0xff]
  %v2501 = vld [vmem:[%s10 + $0x10] sm:$0xff]
  %v2502 = vld [vmem:[%s10 + $0x18] sm:$0xff]
  %v2503 = vld [vmem:[%s10 + $0x20] sm:$0xff]
  %v2504 = vld [vmem:[%s10 + $0x28] sm:$0xff]
  %v2505 = vld [vmem:[%s10 + $0x30] sm:$0xff]
  %v2506 = vld [vmem:[%s10 + $0x38] sm:$0xff]
  %v2507 = vld [vmem:[%s10 + $0x40] sm:$0xff]
  %v2508 = vld [vmem:[%s10 + $0x48] sm:$0xff]
  %v2509 = vld [vmem:[%s10 + $0x50] sm:$0xff]
  %v2510 = vld [vmem:[%s10 + $0x58] sm:$0xff]
  %v2511 = vld [vmem:[%s10 + $0x60] sm:$0xff]
  %v2512 = vld [vmem:[%s10 + $0x68] sm:$0xff]
  %v2513 = vld [vmem:[%s10 + $0x70] sm:$0xff]
  %v2514 = vld [vmem:[%s10 + $0x78] sm:$0xff]
  %2515 = vmatprep.subr.mxu0 0.0
  %2516 = vmatpush1.msra.mxu0 %v2499
  %2517 = vmatprep.subr.mxu0 0.0
  %2518 = vmatpush1.msra.mxu0 %v2500
  %2519 = vmatprep.subr.mxu0 0.0
  %2520 = vmatpush1.msra.mxu0 %v2501
  %2521 = vmatprep.subr.mxu0 0.0
  %2522 = vmatpush1.msra.mxu0 %v2502
  %2523 = vmatprep.subr.mxu0 0.0
  %2524 = vmatpush1.msra.mxu0 %v2503
  %2525 = vmatprep.subr.mxu0 0.0
  %2526 = vmatpush1.msra.mxu0 %v2504
  %2527 = vmatprep.subr.mxu0 0.0
  %2528 = vmatpush1.msra.mxu0 %v2505
  %2529 = vmatprep.subr.mxu0 0.0
  %2530 = vmatpush1.msra.mxu0 %v2506
  %2531 = vmatprep.subr.mxu0 0.0
  %2532 = vmatpush1.msra.mxu0 %v2507
  %2533 = vmatprep.subr.mxu0 0.0
  %2534 = vmatpush1.msra.mxu0 %v2508
  %2535 = vmatprep.subr.mxu0 0.0
  %2536 = vmatpush1.msra.mxu0 %v2509
  %2537 = vmatprep.subr.mxu0 0.0
  %2538 = vmatpush1.msra.mxu0 %v2510
  %2539 = vmatprep.subr.mxu0 0.0
  %2540 = vmatpush1.msra.mxu0 %v2511
  %2541 = vmatprep.subr.mxu0 0.0
  %2542 = vmatpush1.msra.mxu0 %v2512
  %2543 = vmatprep.subr.mxu0 0.0
  %2544 = vmatpush1.msra.mxu0 %v2513
  %2545 = vmatprep.subr.mxu0 0.0
  %2546 = vmatpush1.msra.mxu0 %v2514
  %2547 = vmatprep.subr.mxu0 0.0
  %2548 = vmatpush1.msra.mxu0 0.0
  %2549 = vmatprep.subr.mxu0 0.0
  %2550 = vmatpush1.msra.mxu0 0.0
  %2551 = vmatprep.subr.mxu0 0.0
  %2552 = vmatpush1.msra.mxu0 0.0
  %2553 = vmatprep.subr.mxu0 0.0
  %2554 = vmatpush1.msra.mxu0 0.0
  %2555 = vmatprep.subr.mxu0 0.0
  %2556 = vmatpush1.msra.mxu0 0.0
  %2557 = vmatprep.subr.mxu0 0.0
  %2558 = vmatpush1.msra.mxu0 0.0
  %2559 = vmatprep.subr.mxu0 0.0
  %2560 = vmatpush1.msra.mxu0 0.0
  %2561 = vmatprep.subr.mxu0 0.0
  %2562 = vmatpush1.msra.mxu0 0.0
  %2563 = vmatprep.subr.mxu0 0.0
  %2564 = vmatpush1.msra.mxu0 0.0
  %2565 = vmatprep.subr.mxu0 0.0
  %2566 = vmatpush1.msra.mxu0 0.0
  %2567 = vmatprep.subr.mxu0 0.0
  %2568 = vmatpush1.msra.mxu0 0.0
  %2569 = vmatprep.subr.mxu0 0.0
  %2570 = vmatpush1.msra.mxu0 0.0
  %2571 = vmatprep.subr.mxu0 0.0
  %2572 = vmatpush1.msra.mxu0 0.0
  %2573 = vmatprep.subr.mxu0 0.0
  %2574 = vmatpush1.msra.mxu0 0.0
  %2575 = vmatprep.subr.mxu0 0.0
  %2576 = vmatpush1.msra.mxu0 0.0
  %2577 = vmatprep.subr.mxu0 0.0
  %2578 = vmatpush1.msra.mxu0 0.0
  %2579 = vmatprep.mubr.f32.mxu0 0.0
  %2580 = vmatmul.mubr.f32.gmra.mrb[0].mxu0 %v2498
  %v2581 = vpop.f32.mrb[0].mxu0
  %v2582 = vadd.f32 %v2281, %v2581
  %v2583 = vpop.f32.mrb[0].mxu0
  %2584 = vdwg.mxu0
  %2585 = vst [vmem:[%s12] sm:$0xff] %v2582
  %v2586 = vld [vmem:[%s423] sm:$0xff]
  %v2587 = vld [vmem:[%s423 + $0x8] sm:$0xff]
  %v2588 = vld [vmem:[%s423 + $0x10] sm:$0xff]
  %v2589 = vld [vmem:[%s7] sm:$0xff]
  %v2590 = vld [vmem:[%s7 + $0x8] sm:$0xff]
  %v2591 = vld [vmem:[%s7 + $0x10] sm:$0xff]
  %v2592 = vld [vmem:[%s7 + $0x18] sm:$0xff]
  %v2593 = vld [vmem:[%s7 + $0x20] sm:$0xff]
  %v2594 = vld [vmem:[%s7 + $0x28] sm:$0xff]
  %v2595 = vld [vmem:[%s7 + $0x30] sm:$0xff]
  %v2596 = vld [vmem:[%s7 + $0x38] sm:$0xff]
  %v2597 = vld [vmem:[%s7 + $0x40] sm:$0xff]
  %v2598 = vld [vmem:[%s7 + $0x48] sm:$0xff]
  %v2599 = vld [vmem:[%s7 + $0x50] sm:$0xff]
  %v2600 = vld [vmem:[%s7 + $0x58] sm:$0xff]
  %v2601 = vld [vmem:[%s7 + $0x60] sm:$0xff]
  %v2602 = vld [vmem:[%s7 + $0x68] sm:$0xff]
  %v2603 = vld [vmem:[%s7 + $0x70] sm:$0xff]
  %v2604 = vld [vmem:[%s7 + $0x78] sm:$0xff]
  %v2605 = vld [vmem:[%s7 + $0x80] sm:$0xff]
  %v2606 = vld [vmem:[%s7 + $0x88] sm:$0xff]
  %v2607 = vld [vmem:[%s7 + $0x90] sm:$0xff]
  %v2608 = vld [vmem:[%s7 + $0x98] sm:$0xff]
  %v2609 = vld [vmem:[%s7 + $0xa0] sm:$0xff]
  %v2610 = vld [vmem:[%s7 + $0xa8] sm:$0xff]
  %v2611 = vld [vmem:[%s7 + $0xb0] sm:$0xff]
  %v2612 = vld [vmem:[%s7 + $0xb8] sm:$0xff]
  %v2613 = vld [vmem:[%s7 + $0xc0] sm:$0xff]
  %v2614 = vld [vmem:[%s7 + $0xc8] sm:$0xff]
  %v2615 = vld [vmem:[%s7 + $0xd0] sm:$0xff]
  %v2616 = vld [vmem:[%s7 + $0xd8] sm:$0xff]
  %v2617 = vld [vmem:[%s7 + $0xe0] sm:$0xff]
  %v2618 = vld [vmem:[%s7 + $0xe8] sm:$0xff]
  %v2619 = vld [vmem:[%s7 + $0xf0] sm:$0xff]
  %v2620 = vld [vmem:[%s7 + $0xf8] sm:$0xff]
  %v2621 = vld [vmem:[%s7 + $0x100] sm:$0xff]
  %v2622 = vld [vmem:[%s7 + $0x108] sm:$0xff]
  %v2623 = vld [vmem:[%s7 + $0x110] sm:$0xff]
  %v2624 = vld [vmem:[%s7 + $0x118] sm:$0xff]
  %v2625 = vld [vmem:[%s7 + $0x120] sm:$0xff]
  %v2626 = vld [vmem:[%s7 + $0x128] sm:$0xff]
  %v2627 = vld [vmem:[%s7 + $0x130] sm:$0xff]
  %v2628 = vld [vmem:[%s7 + $0x138] sm:$0xff]
  %v2629 = vld [vmem:[%s7 + $0x140] sm:$0xff]
  %v2630 = vld [vmem:[%s7 + $0x148] sm:$0xff]
  %v2631 = vld [vmem:[%s7 + $0x150] sm:$0xff]
  %v2632 = vld [vmem:[%s7 + $0x158] sm:$0xff]
  %v2633 = vld [vmem:[%s7 + $0x160] sm:$0xff]
  %v2634 = vld [vmem:[%s7 + $0x168] sm:$0xff]
  %v2635 = vld [vmem:[%s7 + $0x170] sm:$0xff]
  %v2636 = vld [vmem:[%s7 + $0x178] sm:$0xff]
  %2637 = vmatprep.subr.mxu0 %v2590
  %2638 = vmatpush1.msra.mxu0 %v2589
  %2639 = vmatprep.subr.mxu0 %v2593
  %2640 = vmatpush1.msra.mxu0 %v2592
  %2641 = vmatprep.subr.mxu0 %v2596
  %2642 = vmatpush1.msra.mxu0 %v2595
  %2643 = vmatprep.subr.mxu0 %v2599
  %2644 = vmatpush1.msra.mxu0 %v2598
  %2645 = vmatprep.subr.mxu0 %v2602
  %2646 = vmatpush1.msra.mxu0 %v2601
  %2647 = vmatprep.subr.mxu0 %v2605
  %2648 = vmatpush1.msra.mxu0 %v2604
  %2649 = vmatprep.subr.mxu0 %v2608
  %2650 = vmatpush1.msra.mxu0 %v2607
  %2651 = vmatprep.subr.mxu0 %v2611
  %2652 = vmatpush1.msra.mxu0 %v2610
  %2653 = vmatprep.subr.mxu0 %v2614
  %2654 = vmatpush1.msra.mxu0 %v2613
  %2655 = vmatprep.subr.mxu0 %v2617
  %2656 = vmatpush1.msra.mxu0 %v2616
  %2657 = vmatprep.subr.mxu0 %v2620
  %2658 = vmatpush1.msra.mxu0 %v2619
  %2659 = vmatprep.subr.mxu0 %v2623
  %2660 = vmatpush1.msra.mxu0 %v2622
  %2661 = vmatprep.subr.mxu0 %v2626
  %2662 = vmatpush1.msra.mxu0 %v2625
  %2663 = vmatprep.subr.mxu0 %v2629
  %2664 = vmatpush1.msra.mxu0 %v2628
  %2665 = vmatprep.subr.mxu0 %v2632
  %2666 = vmatpush1.msra.mxu0 %v2631
  %2667 = vmatprep.subr.mxu0 %v2635
  %2668 = vmatpush1.msra.mxu0 %v2634
  %2669 = vmatprep.subr.mxu0 0.0
  %2670 = vmatpush1.msra.mxu0 0.0
  %2671 = vmatprep.subr.mxu0 0.0
  %2672 = vmatpush1.msra.mxu0 0.0
  %2673 = vmatprep.subr.mxu0 0.0
  %2674 = vmatpush1.msra.mxu0 0.0
  %2675 = vmatprep.subr.mxu0 0.0
  %2676 = vmatpush1.msra.mxu0 0.0
  %2677 = vmatprep.subr.mxu0 0.0
  %2678 = vmatpush1.msra.mxu0 0.0
  %2679 = vmatprep.subr.mxu0 0.0
  %2680 = vmatpush1.msra.mxu0 0.0
  %2681 = vmatprep.subr.mxu0 0.0
  %2682 = vmatpush1.msra.mxu0 0.0
  %2683 = vmatprep.subr.mxu0 0.0
  %2684 = vmatpush1.msra.mxu0 0.0
  %2685 = vmatprep.subr.mxu0 0.0
  %2686 = vmatpush1.msra.mxu0 0.0
  %2687 = vmatprep.subr.mxu0 0.0
  %2688 = vmatpush1.msra.mxu0 0.0
  %2689 = vmatprep.subr.mxu0 0.0
  %2690 = vmatpush1.msra.mxu0 0.0
  %2691 = vmatprep.subr.mxu0 0.0
  %2692 = vmatpush1.msra.mxu0 0.0
  %2693 = vmatprep.subr.mxu0 0.0
  %2694 = vmatpush1.msra.mxu0 0.0
  %2695 = vmatprep.subr.mxu0 0.0
  %2696 = vmatpush1.msra.mxu0 0.0
  %2697 = vmatprep.subr.mxu0 0.0
  %2698 = vmatpush1.msra.mxu0 0.0
  %2699 = vmatprep.subr.mxu0 0.0
  %2700 = vmatpush1.msra.mxu0 0.0
  %2701 = vmatprep.mubr.f32.mxu0 0.0
  %2702 = vmatmul.mubr.f32.gmra.mrb[0].mxu0 %v2498
  %v2703 = vpop.f32.mrb[0].mxu0
  %v2704 = vadd.f32 0.0, %v2703
  %v2705 = vpop.f32.mrb[0].mxu0
  %v2706 = vadd.f32 0.0, %v2705
  %2707 = vdwg.mxu0
  %2708 = vmatprep.subr.mxu0 0.0
  %2709 = vmatpush1.msra.mxu0 %v2591
  %2710 = vmatprep.subr.mxu0 0.0
  %2711 = vmatpush1.msra.mxu0 %v2594
  %2712 = vmatprep.subr.mxu0 0.0
  %2713 = vmatpush1.msra.mxu0 %v2597
  %2714 = vmatprep.subr.mxu0 0.0
  %2715 = vmatpush1.msra.mxu0 %v2600
  %2716 = vmatprep.subr.mxu0 0.0
  %2717 = vmatpush1.msra.mxu0 %v2603
  %2718 = vmatprep.subr.mxu0 0.0
  %2719 = vmatpush1.msra.mxu0 %v2606
  %2720 = vmatprep.subr.mxu0 0.0
  %2721 = vmatpush1.msra.mxu0 %v2609
  %2722 = vmatprep.subr.mxu0 0.0
  %2723 = vmatpush1.msra.mxu0 %v2612
  %2724 = vmatprep.subr.mxu0 0.0
  %2725 = vmatpush1.msra.mxu0 %v2615
  %2726 = vmatprep.subr.mxu0 0.0
  %2727 = vmatpush1.msra.mxu0 %v2618
  %2728 = vmatprep.subr.mxu0 0.0
  %2729 = vmatpush1.msra.mxu0 %v2621
  %2730 = vmatprep.subr.mxu0 0.0
  %2731 = vmatpush1.msra.mxu0 %v2624
  %2732 = vmatprep.subr.mxu0 0.0
  %2733 = vmatpush1.msra.mxu0 %v2627
  %2734 = vmatprep.subr.mxu0 0.0
  %2735 = vmatpush1.msra.mxu0 %v2630
  %2736 = vmatprep.subr.mxu0 0.0
  %2737 = vmatpush1.msra.mxu0 %v2633
  %2738 = vmatprep.subr.mxu0 0.0
  %2739 = vmatpush1.msra.mxu0 %v2636
  %2740 = vmatprep.subr.mxu0 0.0
  %2741 = vmatpush1.msra.mxu0 0.0
  %2742 = vmatprep.subr.mxu0 0.0
  %2743 = vmatpush1.msra.mxu0 0.0
  %2744 = vmatprep.subr.mxu0 0.0
  %2745 = vmatpush1.msra.mxu0 0.0
  %2746 = vmatprep.subr.mxu0 0.0
  %2747 = vmatpush1.msra.mxu0 0.0
  %2748 = vmatprep.subr.mxu0 0.0
  %2749 = vmatpush1.msra.mxu0 0.0
  %2750 = vmatprep.subr.mxu0 0.0
  %2751 = vmatpush1.msra.mxu0 0.0
  %2752 = vmatprep.subr.mxu0 0.0
  %2753 = vmatpush1.msra.mxu0 0.0
  %2754 = vmatprep.subr.mxu0 0.0
  %2755 = vmatpush1.msra.mxu0 0.0
  %2756 = vmatprep.subr.mxu0 0.0
  %2757 = vmatpush1.msra.mxu0 0.0
  %2758 = vmatprep.subr.mxu0 0.0
  %2759 = vmatpush1.msra.mxu0 0.0
  %2760 = vmatprep.subr.mxu0 0.0
  %2761 = vmatpush1.msra.mxu0 0.0
  %2762 = vmatprep.subr.mxu0 0.0
  %2763 = vmatpush1.msra.mxu0 0.0
  %2764 = vmatprep.subr.mxu0 0.0
  %2765 = vmatpush1.msra.mxu0 0.0
  %2766 = vmatprep.subr.mxu0 0.0
  %2767 = vmatpush1.msra.mxu0 0.0
  %2768 = vmatprep.subr.mxu0 0.0
  %2769 = vmatpush1.msra.mxu0 0.0
  %2770 = vmatprep.subr.mxu0 0.0
  %2771 = vmatpush1.msra.mxu0 0.0
  %2772 = vmatprep.mubr.f32.mxu0 0.0
  %2773 = vmatmul.mubr.f32.gmra.mrb[0].mxu0 %v2498
  %v2774 = vpop.f32.mrb[0].mxu0
  %v2775 = vadd.f32 0.0, %v2774
  %v2776 = vpop.f32.mrb[0].mxu0
  %2777 = vdwg.mxu0
  %v2778 = vadd.f32 %v2586, %v2704
  %v2779 = vxor.u32 %v2778, 2147483648
  %v2780 = vmul.f32 %v2779, 1.442695
  %v2781 = vpow.pop %v2780
  %v2782 = vadd.f32 %v2781, 1.0
  %v2783 = vrcp.pop %v2782
  %v2784 = vmul.f32 1.0, %v2783
  %v2785 = vadd.f32 %v2587, %v2706
  %v2786 = vxor.u32 %v2785, 2147483648
  %v2787 = vmul.f32 %v2786, 1.442695
  %v2788 = vpow.pop %v2787
  %v2789 = vadd.f32 %v2788, 1.0
  %v2790 = vrcp.pop %v2789
  %v2791 = vmul.f32 1.0, %v2790
  %v2792 = vadd.f32 %v2775, %v2274
  %v2793 = vmul.f32 %v2784, %v2792
  %v2794 = vadd.f32 %v2588, %v2793
  %v2795 = vtanh.pop %v2794
  %v2796 = vsub.f32 1.0, %v2791
  %v2797 = vmul.f32 %v2796, %v2795
  %v2798 = vmul.f32 %v2791, %v2498
  %v2799 = vadd.f32 %v2797, %v2798
  %v2800 = vld [vmem:[%s10] sm:$0xff]
  %v2801 = vld [vmem:[%s10 + $0x8] sm:$0xff]
  %v2802 = vld [vmem:[%s10 + $0x10] sm:$0xff]
  %v2803 = vld [vmem:[%s10 + $0x18] sm:$0xff]
  %v2804 = vld [vmem:[%s10 + $0x20] sm:$0xff]
  %v2805 = vld [vmem:[%s10 + $0x28] sm:$0xff]
  %v2806 = vld [vmem:[%s10 + $0x30] sm:$0xff]
  %v2807 = vld [vmem:[%s10 + $0x38] sm:$0xff]
  %v2808 = vld [vmem:[%s10 + $0x40] sm:$0xff]
  %v2809 = vld [vmem:[%s10 + $0x48] sm:$0xff]
  %v2810 = vld [vmem:[%s10 + $0x50] sm:$0xff]
  %v2811 = vld [vmem:[%s10 + $0x58] sm:$0xff]
  %v2812 = vld [vmem:[%s10 + $0x60] sm:$0xff]
  %v2813 = vld [vmem:[%s10 + $0x68] sm:$0xff]
  %v2814 = vld [vmem:[%s10 + $0x70] sm:$0xff]
  %v2815 = vld [vmem:[%s10 + $0x78] sm:$0xff]
  %2816 = vmatprep.subr.mxu0 0.0
  %2817 = vmatpush1.msra.mxu0 %v2800
  %2818 = vmatprep.subr.mxu0 0.0
  %2819 = vmatpush1.msra.mxu0 %v2801
  %2820 = vmatprep.subr.mxu0 0.0
  %2821 = vmatpush1.msra.mxu0 %v2802
  %2822 = vmatprep.subr.mxu0 0.0
  %2823 = vmatpush1.msra.mxu0 %v2803
  %2824 = vmatprep.subr.mxu0 0.0
  %2825 = vmatpush1.msra.mxu0 %v2804
  %2826 = vmatprep.subr.mxu0 0.0
  %2827 = vmatpush1.msra.mxu0 %v2805
  %2828 = vmatprep.subr.mxu0 0.0
  %2829 = vmatpush1.msra.mxu0 %v2806
  %2830 = vmatprep.subr.mxu0 0.0
  %2831 = vmatpush1.msra.mxu0 %v2807
  %2832 = vmatprep.subr.mxu0 0.0
  %2833 = vmatpush1.msra.mxu0 %v2808
  %2834 = vmatprep.subr.mxu0 0.0
  %2835 = vmatpush1.msra.mxu0 %v2809
  %2836 = vmatprep.subr.mxu0 0.0
  %2837 = vmatpush1.msra.mxu0 %v2810
  %2838 = vmatprep.subr.mxu0 0.0
  %2839 = vmatpush1.msra.mxu0 %v2811
  %2840 = vmatprep.subr.mxu0 0.0
  %2841 = vmatpush1.msra.mxu0 %v2812
  %2842 = vmatprep.subr.mxu0 0.0
  %2843 = vmatpush1.msra.mxu0 %v2813
  %2844 = vmatprep.subr.mxu0 0.0
  %2845 = vmatpush1.msra.mxu0 %v2814
  %2846 = vmatprep.subr.mxu0 0.0
  %2847 = vmatpush1.msra.mxu0 %v2815
  %2848 = vmatprep.subr.mxu0 0.0
  %2849 = vmatpush1.msra.mxu0 0.0
  %2850 = vmatprep.subr.mxu0 0.0
  %2851 = vmatpush1.msra.mxu0 0.0
  %2852 = vmatprep.subr.mxu0 0.0
  %2853 = vmatpush1.msra.mxu0 0.0
  %2854 = vmatprep.subr.mxu0 0.0
  %2855 = vmatpush1.msra.mxu0 0.0
  %2856 = vmatprep.subr.mxu0 0.0
  %2857 = vmatpush1.msra.mxu0 0.0
  %2858 = vmatprep.subr.mxu0 0.0
  %2859 = vmatpush1.msra.mxu0 0.0
  %2860 = vmatprep.subr.mxu0 0.0
  %2861 = vmatpush1.msra.mxu0 0.0
  %2862 = vmatprep.subr.mxu0 0.0
  %2863 = vmatpush1.msra.mxu0 0.0
  %2864 = vmatprep.subr.mxu0 0.0
  %2865 = vmatpush1.msra.mxu0 0.0
  %2866 = vmatprep.subr.mxu0 0.0
  %2867 = vmatpush1.msra.mxu0 0.0
  %2868 = vmatprep.subr.mxu0 0.0
  %2869 = vmatpush1.msra.mxu0 0.0
  %2870 = vmatprep.subr.mxu0 0.0
  %2871 = vmatpush1.msra.mxu0 0.0
  %2872 = vmatprep.subr.mxu0 0.0
  %2873 = vmatpush1.msra.mxu0 0.0
  %2874 = vmatprep.subr.mxu0 0.0
  %2875 = vmatpush1.msra.mxu0 0.0
  %2876 = vmatprep.subr.mxu0 0.0
  %2877 = vmatpush1.msra.mxu0 0.0
  %2878 = vmatprep.subr.mxu0 0.0
  %2879 = vmatpush1.msra.mxu0 0.0
  %2880 = vmatprep.mubr.f32.mxu0 0.0
  %2881 = vmatmul.mubr.f32.gmra.mrb[0].mxu0 %v2799
  %v2882 = vpop.f32.mrb[0].mxu0
  %v2883 = vadd.f32 %v2281, %v2882
  %v2884 = vpop.f32.mrb[0].mxu0
  %2885 = vdwg.mxu0
  %s2886 = scalar_lea.vmem %s12, 8
  %2887 = vst [vmem:[%s2886] sm:$0xff] %v2883
  %v2888 = vld [vmem:[%s642] sm:$0xff]
  %v2889 = vld [vmem:[%s642 + $0x8] sm:$0xff]
  %v2890 = vld [vmem:[%s642 + $0x10] sm:$0xff]
  %v2891 = vld [vmem:[%s7] sm:$0xff]
  %v2892 = vld [vmem:[%s7 + $0x8] sm:$0xff]
  %v2893 = vld [vmem:[%s7 + $0x10] sm:$0xff]
  %v2894 = vld [vmem:[%s7 + $0x18] sm:$0xff]
  %v2895 = vld [vmem:[%s7 + $0x20] sm:$0xff]
  %v2896 = vld [vmem:[%s7 + $0x28] sm:$0xff]
  %v2897 = vld [vmem:[%s7 + $0x30] sm:$0xff]
  %v2898 = vld [vmem:[%s7 + $0x38] sm:$0xff]
  %v2899 = vld [vmem:[%s7 + $0x40] sm:$0xff]
  %v2900 = vld [vmem:[%s7 + $0x48] sm:$0xff]
  %v2901 = vld [vmem:[%s7 + $0x50] sm:$0xff]
  %v2902 = vld [vmem:[%s7 + $0x58] sm:$0xff]
  %v2903 = vld [vmem:[%s7 + $0x60] sm:$0xff]
  %v2904 = vld [vmem:[%s7 + $0x68] sm:$0xff]
  %v2905 = vld [vmem:[%s7 + $0x70] sm:$0xff]
  %v2906 = vld [vmem:[%s7 + $0x78] sm:$0xff]
  %v2907 = vld [vmem:[%s7 + $0x80] sm:$0xff]
  %v2908 = vld [vmem:[%s7 + $0x88] sm:$0xff]
  %v2909 = vld [vmem:[%s7 + $0x90] sm:$0xff]
  %v2910 = vld [vmem:[%s7 + $0x98] sm:$0xff]
  %v2911 = vld [vmem:[%s7 + $0xa0] sm:$0xff]
  %v2912 = vld [vmem:[%s7 + $0xa8] sm:$0xff]
  %v2913 = vld [vmem:[%s7 + $0xb0] sm:$0xff]
  %v2914 = vld [vmem:[%s7 + $0xb8] sm:$0xff]
  %v2915 = vld [vmem:[%s7 + $0xc0] sm:$0xff]
  %v2916 = vld [vmem:[%s7 + $0xc8] sm:$0xff]
  %v2917 = vld [vmem:[%s7 + $0xd0] sm:$0xff]
  %v2918 = vld [vmem:[%s7 + $0xd8] sm:$0xff]
  %v2919 = vld [vmem:[%s7 + $0xe0] sm:$0xff]
  %v2920 = vld [vmem:[%s7 + $0xe8] sm:$0xff]
  %v2921 = vld [vmem:[%s7 + $0xf0] sm:$0xff]
  %v2922 = vld [vmem:[%s7 + $0xf8] sm:$0xff]
  %v2923 = vld [vmem:[%s7 + $0x100] sm:$0xff]
  %v2924 = vld [vmem:[%s7 + $0x108] sm:$0xff]
  %v2925 = vld [vmem:[%s7 + $0x110] sm:$0xff]
  %v2926 = vld [vmem:[%s7 + $0x118] sm:$0xff]
  %v2927 = vld [vmem:[%s7 + $0x120] sm:$0xff]
  %v2928 = vld [vmem:[%s7 + $0x128] sm:$0xff]
  %v2929 = vld [vmem:[%s7 + $0x130] sm:$0xff]
  %v2930 = vld [vmem:[%s7 + $0x138] sm:$0xff]
  %v2931 = vld [vmem:[%s7 + $0x140] sm:$0xff]
  %v2932 = vld [vmem:[%s7 + $0x148] sm:$0xff]
  %v2933 = vld [vmem:[%s7 + $0x150] sm:$0xff]
  %v2934 = vld [vmem:[%s7 + $0x158] sm:$0xff]
  %v2935 = vld [vmem:[%s7 + $0x160] sm:$0xff]
  %v2936 = vld [vmem:[%s7 + $0x168] sm:$0xff]
  %v2937 = vld [vmem:[%s7 + $0x170] sm:$0xff]
  %v2938 = vld [vmem:[%s7 + $0x178] sm:$0xff]
  %2939 = vmatprep.subr.mxu0 %v2892
  %2940 = vmatpush1.msra.mxu0 %v2891
  %2941 = vmatprep.subr.mxu0 %v2895
  %2942 = vmatpush1.msra.mxu0 %v2894
  %2943 = vmatprep.subr.mxu0 %v2898
  %2944 = vmatpush1.msra.mxu0 %v2897
  %2945 = vmatprep.subr.mxu0 %v2901
  %2946 = vmatpush1.msra.mxu0 %v2900
  %2947 = vmatprep.subr.mxu0 %v2904
  %2948 = vmatpush1.msra.mxu0 %v2903
  %2949 = vmatprep.subr.mxu0 %v2907
  %2950 = vmatpush1.msra.mxu0 %v2906
  %2951 = vmatprep.subr.mxu0 %v2910
  %2952 = vmatpush1.msra.mxu0 %v2909
  %2953 = vmatprep.subr.mxu0 %v2913
  %2954 = vmatpush1.msra.mxu0 %v2912
  %2955 = vmatprep.subr.mxu0 %v2916
  %2956 = vmatpush1.msra.mxu0 %v2915
  %2957 = vmatprep.subr.mxu0 %v2919
  %2958 = vmatpush1.msra.mxu0 %v2918
  %2959 = vmatprep.subr.mxu0 %v2922
  %2960 = vmatpush1.msra.mxu0 %v2921
  %2961 = vmatprep.subr.mxu0 %v2925
  %2962 = vmatpush1.msra.mxu0 %v2924
  %2963 = vmatprep.subr.mxu0 %v2928
  %2964 = vmatpush1.msra.mxu0 %v2927
  %2965 = vmatprep.subr.mxu0 %v2931
  %2966 = vmatpush1.msra.mxu0 %v2930
  %2967 = vmatprep.subr.mxu0 %v2934
  %2968 = vmatpush1.msra.mxu0 %v2933
  %2969 = vmatprep.subr.mxu0 %v2937
  %2970 = vmatpush1.msra.mxu0 %v2936
  %2971 = vmatprep.subr.mxu0 0.0
  %2972 = vmatpush1.msra.mxu0 0.0
  %2973 = vmatprep.subr.mxu0 0.0
  %2974 = vmatpush1.msra.mxu0 0.0
  %2975 = vmatprep.subr.mxu0 0.0
  %2976 = vmatpush1.msra.mxu0 0.0
  %2977 = vmatprep.subr.mxu0 0.0
  %2978 = vmatpush1.msra.mxu0 0.0
  %2979 = vmatprep.subr.mxu0 0.0
  %2980 = vmatpush1.msra.mxu0 0.0
  %2981 = vmatprep.subr.mxu0 0.0
  %2982 = vmatpush1.msra.mxu0 0.0
  %2983 = vmatprep.subr.mxu0 0.0
  %2984 = vmatpush1.msra.mxu0 0.0
  %2985 = vmatprep.subr.mxu0 0.0
  %2986 = vmatpush1.msra.mxu0 0.0
  %2987 = vmatprep.subr.mxu0 0.0
  %2988 = vmatpush1.msra.mxu0 0.0
  %2989 = vmatprep.subr.mxu0 0.0
  %2990 = vmatpush1.msra.mxu0 0.0
  %2991 = vmatprep.subr.mxu0 0.0
  %2992 = vmatpush1.msra.mxu0 0.0
  %2993 = vmatprep.subr.mxu0 0.0
  %2994 = vmatpush1.msra.mxu0 0.0
  %2995 = vmatprep.subr.mxu0 0.0
  %2996 = vmatpush1.msra.mxu0 0.0
  %2997 = vmatprep.subr.mxu0 0.0
  %2998 = vmatpush1.msra.mxu0 0.0
  %2999 = vmatprep.subr.mxu0 0.0
  %3000 = vmatpush1.msra.mxu0 0.0
  %3001 = vmatprep.subr.mxu0 0.0
  %3002 = vmatpush1.msra.mxu0 0.0
  %3003 = vmatprep.mubr.f32.mxu0 0.0
  %3004 = vmatmul.mubr.f32.gmra.mrb[0].mxu0 %v2799
  %v3005 = vpop.f32.mrb[0].mxu0
  %v3006 = vadd.f32 0.0, %v3005
  %v3007 = vpop.f32.mrb[0].mxu0
  %v3008 = vadd.f32 0.0, %v3007
  %3009 = vdwg.mxu0
  %3010 = vmatprep.subr.mxu0 0.0
  %3011 = vmatpush1.msra.mxu0 %v2893
  %3012 = vmatprep.subr.mxu0 0.0
  %3013 = vmatpush1.msra.mxu0 %v2896
  %3014 = vmatprep.subr.mxu0 0.0
  %3015 = vmatpush1.msra.mxu0 %v2899
  %3016 = vmatprep.subr.mxu0 0.0
  %3017 = vmatpush1.msra.mxu0 %v2902
  %3018 = vmatprep.subr.mxu0 0.0
  %3019 = vmatpush1.msra.mxu0 %v2905
  %3020 = vmatprep.subr.mxu0 0.0
  %3021 = vmatpush1.msra.mxu0 %v2908
  %3022 = vmatprep.subr.mxu0 0.0
  %3023 = vmatpush1.msra.mxu0 %v2911
  %3024 = vmatprep.subr.mxu0 0.0
  %3025 = vmatpush1.msra.mxu0 %v2914
  %3026 = vmatprep.subr.mxu0 0.0
  %3027 = vmatpush1.msra.mxu0 %v2917
  %3028 = vmatprep.subr.mxu0 0.0
  %3029 = vmatpush1.msra.mxu0 %v2920
  %3030 = vmatprep.subr.mxu0 0.0
  %3031 = vmatpush1.msra.mxu0 %v2923
  %3032 = vmatprep.subr.mxu0 0.0
  %3033 = vmatpush1.msra.mxu0 %v2926
  %3034 = vmatprep.subr.mxu0 0.0
  %3035 = vmatpush1.msra.mxu0 %v2929
  %3036 = vmatprep.subr.mxu0 0.0
  %3037 = vmatpush1.msra.mxu0 %v2932
  %3038 = vmatprep.subr.mxu0 0.0
  %3039 = vmatpush1.msra.mxu0 %v2935
  %3040 = vmatprep.subr.mxu0 0.0
  %3041 = vmatpush1.msra.mxu0 %v2938
  %3042 = vmatprep.subr.mxu0 0.0
  %3043 = vmatpush1.msra.mxu0 0.0
  %3044 = vmatprep.subr.mxu0 0.0
  %3045 = vmatpush1.msra.mxu0 0.0
  %3046 = vmatprep.subr.mxu0 0.0
  %3047 = vmatpush1.msra.mxu0 0.0
  %3048 = vmatprep.subr.mxu0 0.0
  %3049 = vmatpush1.msra.mxu0 0.0
  %3050 = vmatprep.subr.mxu0 0.0
  %3051 = vmatpush1.msra.mxu0 0.0
  %3052 = vmatprep.subr.mxu0 0.0
  %3053 = vmatpush1.msra.mxu0 0.0
  %3054 = vmatprep.subr.mxu0 0.0
  %3055 = vmatpush1.msra.mxu0 0.0
  %3056 = vmatprep.subr.mxu0 0.0
  %3057 = vmatpush1.msra.mxu0 0.0
  %3058 = vmatprep.subr.mxu0 0.0
  %3059 = vmatpush1.msra.mxu0 0.0
  %3060 = vmatprep.subr.mxu0 0.0
  %3061 = vmatpush1.msra.mxu0 0.0
  %3062 = vmatprep.subr.mxu0 0.0
  %3063 = vmatpush1.msra.mxu0 0.0
  %3064 = vmatprep.subr.mxu0 0.0
  %3065 = vmatpush1.msra.mxu0 0.0
  %3066 = vmatprep.subr.mxu0 0.0
  %3067 = vmatpush1.msra.mxu0 0.0
  %3068 = vmatprep.subr.mxu0 0.0
  %3069 = vmatpush1.msra.mxu0 0.0
  %3070 = vmatprep.subr.mxu0 0.0
  %3071 = vmatpush1.msra.mxu0 0.0
  %3072 = vmatprep.subr.mxu0 0.0
  %3073 = vmatpush1.msra.mxu0 0.0
  %3074 = vmatprep.mubr.f32.mxu0 0.0
  %3075 = vmatmul.mubr.f32.gmra.mrb[0].mxu0 %v2799
  %v3076 = vpop.f32.mrb[0].mxu0
  %v3077 = vadd.f32 0.0, %v3076
  %v3078 = vpop.f32.mrb[0].mxu0
  %3079 = vdwg.mxu0
  %v3080 = vadd.f32 %v2888, %v3006
  %v3081 = vxor.u32 %v3080, 2147483648
  %v3082 = vmul.f32 %v3081, 1.442695
  %v3083 = vpow.pop %v3082
  %v3084 = vadd.f32 %v3083, 1.0
  %v3085 = vrcp.pop %v3084
  %v3086 = vmul.f32 1.0, %v3085
  %v3087 = vadd.f32 %v2889, %v3008
  %v3088 = vxor.u32 %v3087, 2147483648
  %v3089 = vmul.f32 %v3088, 1.442695
  %v3090 = vpow.pop %v3089
  %v3091 = vadd.f32 %v3090, 1.0
  %v3092 = vrcp.pop %v3091
  %v3093 = vmul.f32 1.0, %v3092
  %v3094 = vadd.f32 %v3077, %v2274
  %v3095 = vmul.f32 %v3086, %v3094
  %v3096 = vadd.f32 %v2890, %v3095
  %v3097 = vtanh.pop %v3096
  %v3098 = vsub.f32 1.0, %v3093
  %v3099 = vmul.f32 %v3098, %v3097
  %v3100 = vmul.f32 %v3093, %v2799
  %v3101 = vadd.f32 %v3099, %v3100
  %v3102 = vld [vmem:[%s10] sm:$0xff]
  %v3103 = vld [vmem:[%s10 + $0x8] sm:$0xff]
  %v3104 = vld [vmem:[%s10 + $0x10] sm:$0xff]
  %v3105 = vld [vmem:[%s10 + $0x18] sm:$0xff]
  %v3106 = vld [vmem:[%s10 + $0x20] sm:$0xff]
  %v3107 = vld [vmem:[%s10 + $0x28] sm:$0xff]
  %v3108 = vld [vmem:[%s10 + $0x30] sm:$0xff]
  %v3109 = vld [vmem:[%s10 + $0x38] sm:$0xff]
  %v3110 = vld [vmem:[%s10 + $0x40] sm:$0xff]
  %v3111 = vld [vmem:[%s10 + $0x48] sm:$0xff]
  %v3112 = vld [vmem:[%s10 + $0x50] sm:$0xff]
  %v3113 = vld [vmem:[%s10 + $0x58] sm:$0xff]
  %v3114 = vld [vmem:[%s10 + $0x60] sm:$0xff]
  %v3115 = vld [vmem:[%s10 + $0x68] sm:$0xff]
  %v3116 = vld [vmem:[%s10 + $0x70] sm:$0xff]
  %v3117 = vld [vmem:[%s10 + $0x78] sm:$0xff]
  %3118 = vmatprep.subr.mxu0 0.0
  %3119 = vmatpush1.msra.mxu0 %v3102
  %3120 = vmatprep.subr.mxu0 0.0
  %3121 = vmatpush1.msra.mxu0 %v3103
  %3122 = vmatprep.subr.mxu0 0.0
  %3123 = vmatpush1.msra.mxu0 %v3104
  %3124 = vmatprep.subr.mxu0 0.0
  %3125 = vmatpush1.msra.mxu0 %v3105
  %3126 = vmatprep.subr.mxu0 0.0
  %3127 = vmatpush1.msra.mxu0 %v3106
  %3128 = vmatprep.subr.mxu0 0.0
  %3129 = vmatpush1.msra.mxu0 %v3107
  %3130 = vmatprep.subr.mxu0 0.0
  %3131 = vmatpush1.msra.mxu0 %v3108
  %3132 = vmatprep.subr.mxu0 0.0
  %3133 = vmatpush1.msra.mxu0 %v3109
  %3134 = vmatprep.subr.mxu0 0.0
  %3135 = vmatpush1.msra.mxu0 %v3110
  %3136 = vmatprep.subr.mxu0 0.0
  %3137 = vmatpush1.msra.mxu0 %v3111
  %3138 = vmatprep.subr.mxu0 0.0
  %3139 = vmatpush1.msra.mxu0 %v3112
  %3140 = vmatprep.subr.mxu0 0.0
  %3141 = vmatpush1.msra.mxu0 %v3113
  %3142 = vmatprep.subr.mxu0 0.0
  %3143 = vmatpush1.msra.mxu0 %v3114
  %3144 = vmatprep.subr.mxu0 0.0
  %3145 = vmatpush1.msra.mxu0 %v3115
  %3146 = vmatprep.subr.mxu0 0.0
  %3147 = vmatpush1.msra.mxu0 %v3116
  %3148 = vmatprep.subr.mxu0 0.0
  %3149 = vmatpush1.msra.mxu0 %v3117
  %3150 = vmatprep.subr.mxu0 0.0
  %3151 = vmatpush1.msra.mxu0 0.0
  %3152 = vmatprep.subr.mxu0 0.0
  %3153 = vmatpush1.msra.mxu0 0.0
  %3154 = vmatprep.subr.mxu0 0.0
  %3155 = vmatpush1.msra.mxu0 0.0
  %3156 = vmatprep.subr.mxu0 0.0
  %3157 = vmatpush1.msra.mxu0 0.0
  %3158 = vmatprep.subr.mxu0 0.0
  %3159 = vmatpush1.msra.mxu0 0.0
  %3160 = vmatprep.subr.mxu0 0.0
  %3161 = vmatpush1.msra.mxu0 0.0
  %3162 = vmatprep.subr.mxu0 0.0
  %3163 = vmatpush1.msra.mxu0 0.0
  %3164 = vmatprep.subr.mxu0 0.0
  %3165 = vmatpush1.msra.mxu0 0.0
  %3166 = vmatprep.subr.mxu0 0.0
  %3167 = vmatpush1.msra.mxu0 0.0
  %3168 = vmatprep.subr.mxu0 0.0
  %3169 = vmatpush1.msra.mxu0 0.0
  %3170 = vmatprep.subr.mxu0 0.0
  %3171 = vmatpush1.msra.mxu0 0.0
  %3172 = vmatprep.subr.mxu0 0.0
  %3173 = vmatpush1.msra.mxu0 0.0
  %3174 = vmatprep.subr.mxu0 0.0
  %3175 = vmatpush1.msra.mxu0 0.0
  %3176 = vmatprep.subr.mxu0 0.0
  %3177 = vmatpush1.msra.mxu0 0.0
  %3178 = vmatprep.subr.mxu0 0.0
  %3179 = vmatpush1.msra.mxu0 0.0
  %3180 = vmatprep.subr.mxu0 0.0
  %3181 = vmatpush1.msra.mxu0 0.0
  %3182 = vmatprep.mubr.f32.mxu0 0.0
  %3183 = vmatmul.mubr.f32.gmra.mrb[0].mxu0 %v3101
  %v3184 = vpop.f32.mrb[0].mxu0
  %v3185 = vadd.f32 %v2281, %v3184
  %v3186 = vpop.f32.mrb[0].mxu0
  %3187 = vdwg.mxu0
  %s3188 = scalar_lea.vmem %s12, 16
  %3189 = vst [vmem:[%s3188] sm:$0xff] %v3185
  %v3190 = vld [vmem:[%s861] sm:$0xff]
  %v3191 = vld [vmem:[%s861 + $0x8] sm:$0xff]
  %v3192 = vld [vmem:[%s861 + $0x10] sm:$0xff]
  %v3193 = vld [vmem:[%s7] sm:$0xff]
  %v3194 = vld [vmem:[%s7 + $0x8] sm:$0xff]
  %v3195 = vld [vmem:[%s7 + $0x10] sm:$0xff]
  %v3196 = vld [vmem:[%s7 + $0x18] sm:$0xff]
  %v3197 = vld [vmem:[%s7 + $0x20] sm:$0xff]
  %v3198 = vld [vmem:[%s7 + $0x28] sm:$0xff]
  %v3199 = vld [vmem:[%s7 + $0x30] sm:$0xff]
  %v3200 = vld [vmem:[%s7 + $0x38] sm:$0xff]
  %v3201 = vld [vmem:[%s7 + $0x40] sm:$0xff]
  %v3202 = vld [vmem:[%s7 + $0x48] sm:$0xff]
  %v3203 = vld [vmem:[%s7 + $0x50] sm:$0xff]
  %v3204 = vld [vmem:[%s7 + $0x58] sm:$0xff]
  %v3205 = vld [vmem:[%s7 + $0x60] sm:$0xff]
  %v3206 = vld [vmem:[%s7 + $0x68] sm:$0xff]
  %v3207 = vld [vmem:[%s7 + $0x70] sm:$0xff]
  %v3208 = vld [vmem:[%s7 + $0x78] sm:$0xff]
  %v3209 = vld [vmem:[%s7 + $0x80] sm:$0xff]
  %v3210 = vld [vmem:[%s7 + $0x88] sm:$0xff]
  %v3211 = vld [vmem:[%s7 + $0x90] sm:$0xff]
  %v3212 = vld [vmem:[%s7 + $0x98] sm:$0xff]
  %v3213 = vld [vmem:[%s7 + $0xa0] sm:$0xff]
  %v3214 = vld [vmem:[%s7 + $0xa8] sm:$0xff]
  %v3215 = vld [vmem:[%s7 + $0xb0] sm:$0xff]
  %v3216 = vld [vmem:[%s7 + $0xb8] sm:$0xff]
  %v3217 = vld [vmem:[%s7 + $0xc0] sm:$0xff]
  %v3218 = vld [vmem:[%s7 + $0xc8] sm:$0xff]
  %v3219 = vld [vmem:[%s7 + $0xd0] sm:$0xff]
  %v3220 = vld [vmem:[%s7 + $0xd8] sm:$0xff]
  %v3221 = vld [vmem:[%s7 + $0xe0] sm:$0xff]
  %v3222 = vld [vmem:[%s7 + $0xe8] sm:$0xff]
  %v3223 = vld [vmem:[%s7 + $0xf0] sm:$0xff]
  %v3224 = vld [vmem:[%s7 + $0xf8] sm:$0xff]
  %v3225 = vld [vmem:[%s7 + $0x100] sm:$0xff]
  %v3226 = vld [vmem:[%s7 + $0x108] sm:$0xff]
  %v3227 = vld [vmem:[%s7 + $0x110] sm:$0xff]
  %v3228 = vld [vmem:[%s7 + $0x118] sm:$0xff]
  %v3229 = vld [vmem:[%s7 + $0x120] sm:$0xff]
  %v3230 = vld [vmem:[%s7 + $0x128] sm:$0xff]
  %v3231 = vld [vmem:[%s7 + $0x130] sm:$0xff]
  %v3232 = vld [vmem:[%s7 + $0x138] sm:$0xff]
  %v3233 = vld [vmem:[%s7 + $0x140] sm:$0xff]
  %v3234 = vld [vmem:[%s7 + $0x148] sm:$0xff]
  %v3235 = vld [vmem:[%s7 + $0x150] sm:$0xff]
  %v3236 = vld [vmem:[%s7 + $0x158] sm:$0xff]
  %v3237 = vld [vmem:[%s7 + $0x160] sm:$0xff]
  %v3238 = vld [vmem:[%s7 + $0x168] sm:$0xff]
  %v3239 = vld [vmem:[%s7 + $0x170] sm:$0xff]
  %v3240 = vld [vmem:[%s7 + $0x178] sm:$0xff]
  %3241 = vmatprep.subr.mxu0 %v3194
  %3242 = vmatpush1.msra.mxu0 %v3193
  %3243 = vmatprep.subr.mxu0 %v3197
  %3244 = vmatpush1.msra.mxu0 %v3196
  %3245 = vmatprep.subr.mxu0 %v3200
  %3246 = vmatpush1.msra.mxu0 %v3199
  %3247 = vmatprep.subr.mxu0 %v3203
  %3248 = vmatpush1.msra.mxu0 %v3202
  %3249 = vmatprep.subr.mxu0 %v3206
  %3250 = vmatpush1.msra.mxu0 %v3205
  %3251 = vmatprep.subr.mxu0 %v3209
  %3252 = vmatpush1.msra.mxu0 %v3208
  %3253 = vmatprep.subr.mxu0 %v3212
  %3254 = vmatpush1.msra.mxu0 %v3211
  %3255 = vmatprep.subr.mxu0 %v3215
  %3256 = vmatpush1.msra.mxu0 %v3214
  %3257 = vmatprep.subr.mxu0 %v3218
  %3258 = vmatpush1.msra.mxu0 %v3217
  %3259 = vmatprep.subr.mxu0 %v3221
  %3260 = vmatpush1.msra.mxu0 %v3220
  %3261 = vmatprep.subr.mxu0 %v3224
  %3262 = vmatpush1.msra.mxu0 %v3223
  %3263 = vmatprep.subr.mxu0 %v3227
  %3264 = vmatpush1.msra.mxu0 %v3226
  %3265 = vmatprep.subr.mxu0 %v3230
  %3266 = vmatpush1.msra.mxu0 %v3229
  %3267 = vmatprep.subr.mxu0 %v3233
  %3268 = vmatpush1.msra.mxu0 %v3232
  %3269 = vmatprep.subr.mxu0 %v3236
  %3270 = vmatpush1.msra.mxu0 %v3235
  %3271 = vmatprep.subr.mxu0 %v3239
  %3272 = vmatpush1.msra.mxu0 %v3238
  %3273 = vmatprep.subr.mxu0 0.0
  %3274 = vmatpush1.msra.mxu0 0.0
  %3275 = vmatprep.subr.mxu0 0.0
  %3276 = vmatpush1.msra.mxu0 0.0
  %3277 = vmatprep.subr.mxu0 0.0
  %3278 = vmatpush1.msra.mxu0 0.0
  %3279 = vmatprep.subr.mxu0 0.0
  %3280 = vmatpush1.msra.mxu0 0.0
  %3281 = vmatprep.subr.mxu0 0.0
  %3282 = vmatpush1.msra.mxu0 0.0
  %3283 = vmatprep.subr.mxu0 0.0
  %3284 = vmatpush1.msra.mxu0 0.0
  %3285 = vmatprep.subr.mxu0 0.0
  %3286 = vmatpush1.msra.mxu0 0.0
  %3287 = vmatprep.subr.mxu0 0.0
  %3288 = vmatpush1.msra.mxu0 0.0
  %3289 = vmatprep.subr.mxu0 0.0
  %3290 = vmatpush1.msra.mxu0 0.0
  %3291 = vmatprep.subr.mxu0 0.0
  %3292 = vmatpush1.msra.mxu0 0.0
  %3293 = vmatprep.subr.mxu0 0.0
  %3294 = vmatpush1.msra.mxu0 0.0
  %3295 = vmatprep.subr.mxu0 0.0
  %3296 = vmatpush1.msra.mxu0 0.0
  %3297 = vmatprep.subr.mxu0 0.0
  %3298 = vmatpush1.msra.mxu0 0.0
  %3299 = vmatprep.subr.mxu0 0.0
  %3300 = vmatpush1.msra.mxu0 0.0
  %3301 = vmatprep.subr.mxu0 0.0
  %3302 = vmatpush1.msra.mxu0 0.0
  %3303 = vmatprep.subr.mxu0 0.0
  %3304 = vmatpush1.msra.mxu0 0.0
  %3305 = vmatprep.mubr.f32.mxu0 0.0
  %3306 = vmatmul.mubr.f32.gmra.mrb[0].mxu0 %v3101
  %v3307 = vpop.f32.mrb[0].mxu0
  %v3308 = vadd.f32 0.0, %v3307
  %v3309 = vpop.f32.mrb[0].mxu0
  %v3310 = vadd.f32 0.0, %v3309
  %3311 = vdwg.mxu0
  %3312 = vmatprep.subr.mxu0 0.0
  %3313 = vmatpush1.msra.mxu0 %v3195
  %3314 = vmatprep.subr.mxu0 0.0
  %3315 = vmatpush1.msra.mxu0 %v3198
  %3316 = vmatprep.subr.mxu0 0.0
  %3317 = vmatpush1.msra.mxu0 %v3201
  %3318 = vmatprep.subr.mxu0 0.0
  %3319 = vmatpush1.msra.mxu0 %v3204
  %3320 = vmatprep.subr.mxu0 0.0
  %3321 = vmatpush1.msra.mxu0 %v3207
  %3322 = vmatprep.subr.mxu0 0.0
  %3323 = vmatpush1.msra.mxu0 %v3210
  %3324 = vmatprep.subr.mxu0 0.0
  %3325 = vmatpush1.msra.mxu0 %v3213
  %3326 = vmatprep.subr.mxu0 0.0
  %3327 = vmatpush1.msra.mxu0 %v3216
  %3328 = vmatprep.subr.mxu0 0.0
  %3329 = vmatpush1.msra.mxu0 %v3219
  %3330 = vmatprep.subr.mxu0 0.0
  %3331 = vmatpush1.msra.mxu0 %v3222
  %3332 = vmatprep.subr.mxu0 0.0
  %3333 = vmatpush1.msra.mxu0 %v3225
  %3334 = vmatprep.subr.mxu0 0.0
  %3335 = vmatpush1.msra.mxu0 %v3228
  %3336 = vmatprep.subr.mxu0 0.0
  %3337 = vmatpush1.msra.mxu0 %v3231
  %3338 = vmatprep.subr.mxu0 0.0
  %3339 = vmatpush1.msra.mxu0 %v3234
  %3340 = vmatprep.subr.mxu0 0.0
  %3341 = vmatpush1.msra.mxu0 %v3237
  %3342 = vmatprep.subr.mxu0 0.0
  %3343 = vmatpush1.msra.mxu0 %v3240
  %3344 = vmatprep.subr.mxu0 0.0
  %3345 = vmatpush1.msra.mxu0 0.0
  %3346 = vmatprep.subr.mxu0 0.0
  %3347 = vmatpush1.msra.mxu0 0.0
  %3348 = vmatprep.subr.mxu0 0.0
  %3349 = vmatpush1.msra.mxu0 0.0
  %3350 = vmatprep.subr.mxu0 0.0
  %3351 = vmatpush1.msra.mxu0 0.0
  %3352 = vmatprep.subr.mxu0 0.0
  %3353 = vmatpush1.msra.mxu0 0.0
  %3354 = vmatprep.subr.mxu0 0.0
  %3355 = vmatpush1.msra.mxu0 0.0
  %3356 = vmatprep.subr.mxu0 0.0
  %3357 = vmatpush1.msra.mxu0 0.0
  %3358 = vmatprep.subr.mxu0 0.0
  %3359 = vmatpush1.msra.mxu0 0.0
  %3360 = vmatprep.subr.mxu0 0.0
  %3361 = vmatpush1.msra.mxu0 0.0
  %3362 = vmatprep.subr.mxu0 0.0
  %3363 = vmatpush1.msra.mxu0 0.0
  %3364 = vmatprep.subr.mxu0 0.0
  %3365 = vmatpush1.msra.mxu0 0.0
  %3366 = vmatprep.subr.mxu0 0.0
  %3367 = vmatpush1.msra.mxu0 0.0
  %3368 = vmatprep.subr.mxu0 0.0
  %3369 = vmatpush1.msra.mxu0 0.0
  %3370 = vmatprep.subr.mxu0 0.0
  %3371 = vmatpush1.msra.mxu0 0.0
  %3372 = vmatprep.subr.mxu0 0.0
  %3373 = vmatpush1.msra.mxu0 0.0
  %3374 = vmatprep.subr.mxu0 0.0
  %3375 = vmatpush1.msra.mxu0 0.0
  %3376 = vmatprep.mubr.f32.mxu0 0.0
  %3377 = vmatmul.mubr.f32.gmra.mrb[0].mxu0 %v3101
  %v3378 = vpop.f32.mrb[0].mxu0
  %v3379 = vadd.f32 0.0, %v3378
  %v3380 = vpop.f32.mrb[0].mxu0
  %3381 = vdwg.mxu0
  %v3382 = vadd.f32 %v3190, %v3308
  %v3383 = vxor.u32 %v3382, 2147483648
  %v3384 = vmul.f32 %v3383, 1.442695
  %v3385 = vpow.pop %v3384
  %v3386 = vadd.f32 %v3385, 1.0
  %v3387 = vrcp.pop %v3386
  %v3388 = vmul.f32 1.0, %v3387
  %v3389 = vadd.f32 %v3191, %v3310
  %v3390 = vxor.u32 %v3389, 2147483648
  %v3391 = vmul.f32 %v3390, 1.442695
  %v3392 = vpow.pop %v3391
  %v3393 = vadd.f32 %v3392, 1.0
  %v3394 = vrcp.pop %v3393
  %v3395 = vmul.f32 1.0, %v3394
  %v3396 = vadd.f32 %v3379, %v2274
  %v3397 = vmul.f32 %v3388, %v3396
  %v3398 = vadd.f32 %v3192, %v3397
  %v3399 = vtanh.pop %v3398
  %v3400 = vsub.f32 1.0, %v3395
  %v3401 = vmul.f32 %v3400, %v3399
  %v3402 = vmul.f32 %v3395, %v3101
  %v3403 = vadd.f32 %v3401, %v3402
  %v3404 = vld [vmem:[%s10] sm:$0xff]
  %v3405 = vld [vmem:[%s10 + $0x8] sm:$0xff]
  %v3406 = vld [vmem:[%s10 + $0x10] sm:$0xff]
  %v3407 = vld [vmem:[%s10 + $0x18] sm:$0xff]
  %v3408 = vld [vmem:[%s10 + $0x20] sm:$0xff]
  %v3409 = vld [vmem:[%s10 + $0x28] sm:$0xff]
  %v3410 = vld [vmem:[%s10 + $0x30] sm:$0xff]
  %v3411 = vld [vmem:[%s10 + $0x38] sm:$0xff]
  %v3412 = vld [vmem:[%s10 + $0x40] sm:$0xff]
  %v3413 = vld [vmem:[%s10 + $0x48] sm:$0xff]
  %v3414 = vld [vmem:[%s10 + $0x50] sm:$0xff]
  %v3415 = vld [vmem:[%s10 + $0x58] sm:$0xff]
  %v3416 = vld [vmem:[%s10 + $0x60] sm:$0xff]
  %v3417 = vld [vmem:[%s10 + $0x68] sm:$0xff]
  %v3418 = vld [vmem:[%s10 + $0x70] sm:$0xff]
  %v3419 = vld [vmem:[%s10 + $0x78] sm:$0xff]
  %3420 = vmatprep.subr.mxu0 0.0
  %3421 = vmatpush1.msra.mxu0 %v3404
  %3422 = vmatprep.subr.mxu0 0.0
  %3423 = vmatpush1.msra.mxu0 %v3405
  %3424 = vmatprep.subr.mxu0 0.0
  %3425 = vmatpush1.msra.mxu0 %v3406
  %3426 = vmatprep.subr.mxu0 0.0
  %3427 = vmatpush1.msra.mxu0 %v3407
  %3428 = vmatprep.subr.mxu0 0.0
  %3429 = vmatpush1.msra.mxu0 %v3408
  %3430 = vmatprep.subr.mxu0 0.0
  %3431 = vmatpush1.msra.mxu0 %v3409
  %3432 = vmatprep.subr.mxu0 0.0
  %3433 = vmatpush1.msra.mxu0 %v3410
  %3434 = vmatprep.subr.mxu0 0.0
  %3435 = vmatpush1.msra.mxu0 %v3411
  %3436 = vmatprep.subr.mxu0 0.0
  %3437 = vmatpush1.msra.mxu0 %v3412
  %3438 = vmatprep.subr.mxu0 0.0
  %3439 = vmatpush1.msra.mxu0 %v3413
  %3440 = vmatprep.subr.mxu0 0.0
  %3441 = vmatpush1.msra.mxu0 %v3414
  %3442 = vmatprep.subr.mxu0 0.0
  %3443 = vmatpush1.msra.mxu0 %v3415
  %3444 = vmatprep.subr.mxu0 0.0
  %3445 = vmatpush1.msra.mxu0 %v3416
  %3446 = vmatprep.subr.mxu0 0.0
  %3447 = vmatpush1.msra.mxu0 %v3417
  %3448 = vmatprep.subr.mxu0 0.0
  %3449 = vmatpush1.msra.mxu0 %v3418
  %3450 = vmatprep.subr.mxu0 0.0
  %3451 = vmatpush1.msra.mxu0 %v3419
  %3452 = vmatprep.subr.mxu0 0.0
  %3453 = vmatpush1.msra.mxu0 0.0
  %3454 = vmatprep.subr.mxu0 0.0
  %3455 = vmatpush1.msra.mxu0 0.0
  %3456 = vmatprep.subr.mxu0 0.0
  %3457 = vmatpush1.msra.mxu0 0.0
  %3458 = vmatprep.subr.mxu0 0.0
  %3459 = vmatpush1.msra.mxu0 0.0
  %3460 = vmatprep.subr.mxu0 0.0
  %3461 = vmatpush1.msra.mxu0 0.0
  %3462 = vmatprep.subr.mxu0 0.0
  %3463 = vmatpush1.msra.mxu0 0.0
  %3464 = vmatprep.subr.mxu0 0.0
  %3465 = vmatpush1.msra.mxu0 0.0
  %3466 = vmatprep.subr.mxu0 0.0
  %3467 = vmatpush1.msra.mxu0 0.0
  %3468 = vmatprep.subr.mxu0 0.0
  %3469 = vmatpush1.msra.mxu0 0.0
  %3470 = vmatprep.subr.mxu0 0.0
  %3471 = vmatpush1.msra.mxu0 0.0
  %3472 = vmatprep.subr.mxu0 0.0
  %3473 = vmatpush1.msra.mxu0 0.0
  %3474 = vmatprep.subr.mxu0 0.0
  %3475 = vmatpush1.msra.mxu0 0.0
  %3476 = vmatprep.subr.mxu0 0.0
  %3477 = vmatpush1.msra.mxu0 0.0
  %3478 = vmatprep.subr.mxu0 0.0
  %3479 = vmatpush1.msra.mxu0 0.0
  %3480 = vmatprep.subr.mxu0 0.0
  %3481 = vmatpush1.msra.mxu0 0.0
  %3482 = vmatprep.subr.mxu0 0.0
  %3483 = vmatpush1.msra.mxu0 0.0
  %3484 = vmatprep.mubr.f32.mxu0 0.0
  %3485 = vmatmul.mubr.f32.gmra.mrb[0].mxu0 %v3403
  %v3486 = vpop.f32.mrb[0].mxu0
  %v3487 = vadd.f32 %v2281, %v3486
  %v3488 = vpop.f32.mrb[0].mxu0
  %3489 = vdwg.mxu0
  %s3490 = scalar_lea.vmem %s12, 24
  %3491 = vst [vmem:[%s3490] sm:$0xff] %v3487
  %v3492 = vld [vmem:[%s1080] sm:$0xff]
  %v3493 = vld [vmem:[%s1080 + $0x8] sm:$0xff]
  %v3494 = vld [vmem:[%s1080 + $0x10] sm:$0xff]
  %v3495 = vld [vmem:[%s7] sm:$0xff]
  %v3496 = vld [vmem:[%s7 + $0x8] sm:$0xff]
  %v3497 = vld [vmem:[%s7 + $0x10] sm:$0xff]
  %v3498 = vld [vmem:[%s7 + $0x18] sm:$0xff]
  %v3499 = vld [vmem:[%s7 + $0x20] sm:$0xff]
  %v3500 = vld [vmem:[%s7 + $0x28] sm:$0xff]
  %v3501 = vld [vmem:[%s7 + $0x30] sm:$0xff]
  %v3502 = vld [vmem:[%s7 + $0x38] sm:$0xff]
  %v3503 = vld [vmem:[%s7 + $0x40] sm:$0xff]
  %v3504 = vld [vmem:[%s7 + $0x48] sm:$0xff]
  %v3505 = vld [vmem:[%s7 + $0x50] sm:$0xff]
  %v3506 = vld [vmem:[%s7 + $0x58] sm:$0xff]
  %v3507 = vld [vmem:[%s7 + $0x60] sm:$0xff]
  %v3508 = vld [vmem:[%s7 + $0x68] sm:$0xff]
  %v3509 = vld [vmem:[%s7 + $0x70] sm:$0xff]
  %v3510 = vld [vmem:[%s7 + $0x78] sm:$0xff]
  %v3511 = vld [vmem:[%s7 + $0x80] sm:$0xff]
  %v3512 = vld [vmem:[%s7 + $0x88] sm:$0xff]
  %v3513 = vld [vmem:[%s7 + $0x90] sm:$0xff]
  %v3514 = vld [vmem:[%s7 + $0x98] sm:$0xff]
  %v3515 = vld [vmem:[%s7 + $0xa0] sm:$0xff]
  %v3516 = vld [vmem:[%s7 + $0xa8] sm:$0xff]
  %v3517 = vld [vmem:[%s7 + $0xb0] sm:$0xff]
  %v3518 = vld [vmem:[%s7 + $0xb8] sm:$0xff]
  %v3519 = vld [vmem:[%s7 + $0xc0] sm:$0xff]
  %v3520 = vld [vmem:[%s7 + $0xc8] sm:$0xff]
  %v3521 = vld [vmem:[%s7 + $0xd0] sm:$0xff]
  %v3522 = vld [vmem:[%s7 + $0xd8] sm:$0xff]
  %v3523 = vld [vmem:[%s7 + $0xe0] sm:$0xff]
  %v3524 = vld [vmem:[%s7 + $0xe8] sm:$0xff]
  %v3525 = vld [vmem:[%s7 + $0xf0] sm:$0xff]
  %v3526 = vld [vmem:[%s7 + $0xf8] sm:$0xff]
  %v3527 = vld [vmem:[%s7 + $0x100] sm:$0xff]
  %v3528 = vld [vmem:[%s7 + $0x108] sm:$0xff]
  %v3529 = vld [vmem:[%s7 + $0x110] sm:$0xff]
  %v3530 = vld [vmem:[%s7 + $0x118] sm:$0xff]
  %v3531 = vld [vmem:[%s7 + $0x120] sm:$0xff]
  %v3532 = vld [vmem:[%s7 + $0x128] sm:$0xff]
  %v3533 = vld [vmem:[%s7 + $0x130] sm:$0xff]
  %v3534 = vld [vmem:[%s7 + $0x138] sm:$0xff]
  %v3535 = vld [vmem:[%s7 + $0x140] sm:$0xff]
  %v3536 = vld [vmem:[%s7 + $0x148] sm:$0xff]
  %v3537 = vld [vmem:[%s7 + $0x150] sm:$0xff]
  %v3538 = vld [vmem:[%s7 + $0x158] sm:$0xff]
  %v3539 = vld [vmem:[%s7 + $0x160] sm:$0xff]
  %v3540 = vld [vmem:[%s7 + $0x168] sm:$0xff]
  %v3541 = vld [vmem:[%s7 + $0x170] sm:$0xff]
  %v3542 = vld [vmem:[%s7 + $0x178] sm:$0xff]
  %3543 = vmatprep.subr.mxu0 %v3496
  %3544 = vmatpush1.msra.mxu0 %v3495
  %3545 = vmatprep.subr.mxu0 %v3499
  %3546 = vmatpush1.msra.mxu0 %v3498
  %3547 = vmatprep.subr.mxu0 %v3502
  %3548 = vmatpush1.msra.mxu0 %v3501
  %3549 = vmatprep.subr.mxu0 %v3505
  %3550 = vmatpush1.msra.mxu0 %v3504
  %3551 = vmatprep.subr.mxu0 %v3508
  %3552 = vmatpush1.msra.mxu0 %v3507
  %3553 = vmatprep.subr.mxu0 %v3511
  %3554 = vmatpush1.msra.mxu0 %v3510
  %3555 = vmatprep.subr.mxu0 %v3514
  %3556 = vmatpush1.msra.mxu0 %v3513
  %3557 = vmatprep.subr.mxu0 %v3517
  %3558 = vmatpush1.msra.mxu0 %v3516
  %3559 = vmatprep.subr.mxu0 %v3520
  %3560 = vmatpush1.msra.mxu0 %v3519
  %3561 = vmatprep.subr.mxu0 %v3523
  %3562 = vmatpush1.msra.mxu0 %v3522
  %3563 = vmatprep.subr.mxu0 %v3526
  %3564 = vmatpush1.msra.mxu0 %v3525
  %3565 = vmatprep.subr.mxu0 %v3529
  %3566 = vmatpush1.msra.mxu0 %v3528
  %3567 = vmatprep.subr.mxu0 %v3532
  %3568 = vmatpush1.msra.mxu0 %v3531
  %3569 = vmatprep.subr.mxu0 %v3535
  %3570 = vmatpush1.msra.mxu0 %v3534
  %3571 = vmatprep.subr.mxu0 %v3538
  %3572 = vmatpush1.msra.mxu0 %v3537
  %3573 = vmatprep.subr.mxu0 %v3541
  %3574 = vmatpush1.msra.mxu0 %v3540
  %3575 = vmatprep.subr.mxu0 0.0
  %3576 = vmatpush1.msra.mxu0 0.0
  %3577 = vmatprep.subr.mxu0 0.0
  %3578 = vmatpush1.msra.mxu0 0.0
  %3579 = vmatprep.subr.mxu0 0.0
  %3580 = vmatpush1.msra.mxu0 0.0
  %3581 = vmatprep.subr.mxu0 0.0
  %3582 = vmatpush1.msra.mxu0 0.0
  %3583 = vmatprep.subr.mxu0 0.0
  %3584 = vmatpush1.msra.mxu0 0.0
  %3585 = vmatprep.subr.mxu0 0.0
  %3586 = vmatpush1.msra.mxu0 0.0
  %3587 = vmatprep.subr.mxu0 0.0
  %3588 = vmatpush1.msra.mxu0 0.0
  %3589 = vmatprep.subr.mxu0 0.0
  %3590 = vmatpush1.msra.mxu0 0.0
  %3591 = vmatprep.subr.mxu0 0.0
  %3592 = vmatpush1.msra.mxu0 0.0
  %3593 = vmatprep.subr.mxu0 0.0
  %3594 = vmatpush1.msra.mxu0 0.0
  %3595 = vmatprep.subr.mxu0 0.0
  %3596 = vmatpush1.msra.mxu0 0.0
  %3597 = vmatprep.subr.mxu0 0.0
  %3598 = vmatpush1.msra.mxu0 0.0
  %3599 = vmatprep.subr.mxu0 0.0
  %3600 = vmatpush1.msra.mxu0 0.0
  %3601 = vmatprep.subr.mxu0 0.0
  %3602 = vmatpush1.msra.mxu0 0.0
  %3603 = vmatprep.subr.mxu0 0.0
  %3604 = vmatpush1.msra.mxu0 0.0
  %3605 = vmatprep.subr.mxu0 0.0
  %3606 = vmatpush1.msra.mxu0 0.0
  %3607 = vmatprep.mubr.f32.mxu0 0.0
  %3608 = vmatmul.mubr.f32.gmra.mrb[0].mxu0 %v3403
  %v3609 = vpop.f32.mrb[0].mxu0
  %v3610 = vadd.f32 0.0, %v3609
  %v3611 = vpop.f32.mrb[0].mxu0
  %v3612 = vadd.f32 0.0, %v3611
  %3613 = vdwg.mxu0
  %3614 = vmatprep.subr.mxu0 0.0
  %3615 = vmatpush1.msra.mxu0 %v3497
  %3616 = vmatprep.subr.mxu0 0.0
  %3617 = vmatpush1.msra.mxu0 %v3500
  %3618 = vmatprep.subr.mxu0 0.0
  %3619 = vmatpush1.msra.mxu0 %v3503
  %3620 = vmatprep.subr.mxu0 0.0
  %3621 = vmatpush1.msra.mxu0 %v3506
  %3622 = vmatprep.subr.mxu0 0.0
  %3623 = vmatpush1.msra.mxu0 %v3509
  %3624 = vmatprep.subr.mxu0 0.0
  %3625 = vmatpush1.msra.mxu0 %v3512
  %3626 = vmatprep.subr.mxu0 0.0
  %3627 = vmatpush1.msra.mxu0 %v3515
  %3628 = vmatprep.subr.mxu0 0.0
  %3629 = vmatpush1.msra.mxu0 %v3518
  %3630 = vmatprep.subr.mxu0 0.0
  %3631 = vmatpush1.msra.mxu0 %v3521
  %3632 = vmatprep.subr.mxu0 0.0
  %3633 = vmatpush1.msra.mxu0 %v3524
  %3634 = vmatprep.subr.mxu0 0.0
  %3635 = vmatpush1.msra.mxu0 %v3527
  %3636 = vmatprep.subr.mxu0 0.0
  %3637 = vmatpush1.msra.mxu0 %v3530
  %3638 = vmatprep.subr.mxu0 0.0
  %3639 = vmatpush1.msra.mxu0 %v3533
  %3640 = vmatprep.subr.mxu0 0.0
  %3641 = vmatpush1.msra.mxu0 %v3536
  %3642 = vmatprep.subr.mxu0 0.0
  %3643 = vmatpush1.msra.mxu0 %v3539
  %3644 = vmatprep.subr.mxu0 0.0
  %3645 = vmatpush1.msra.mxu0 %v3542
  %3646 = vmatprep.subr.mxu0 0.0
  %3647 = vmatpush1.msra.mxu0 0.0
  %3648 = vmatprep.subr.mxu0 0.0
  %3649 = vmatpush1.msra.mxu0 0.0
  %3650 = vmatprep.subr.mxu0 0.0
  %3651 = vmatpush1.msra.mxu0 0.0
  %3652 = vmatprep.subr.mxu0 0.0
  %3653 = vmatpush1.msra.mxu0 0.0
  %3654 = vmatprep.subr.mxu0 0.0
  %3655 = vmatpush1.msra.mxu0 0.0
  %3656 = vmatprep.subr.mxu0 0.0
  %3657 = vmatpush1.msra.mxu0 0.0
  %3658 = vmatprep.subr.mxu0 0.0
  %3659 = vmatpush1.msra.mxu0 0.0
  %3660 = vmatprep.subr.mxu0 0.0
  %3661 = vmatpush1.msra.mxu0 0.0
  %3662 = vmatprep.subr.mxu0 0.0
  %3663 = vmatpush1.msra.mxu0 0.0
  %3664 = vmatprep.subr.mxu0 0.0
  %3665 = vmatpush1.msra.mxu0 0.0
  %3666 = vmatprep.subr.mxu0 0.0
  %3667 = vmatpush1.msra.mxu0 0.0
  %3668 = vmatprep.subr.mxu0 0.0
  %3669 = vmatpush1.msra.mxu0 0.0
  %3670 = vmatprep.subr.mxu0 0.0
  %3671 = vmatpush1.msra.mxu0 0.0
  %3672 = vmatprep.subr.mxu0 0.0
  %3673 = vmatpush1.msra.mxu0 0.0
  %3674 = vmatprep.subr.mxu0 0.0
  %3675 = vmatpush1.msra.mxu0 0.0
  %3676 = vmatprep.subr.mxu0 0.0
  %3677 = vmatpush1.msra.mxu0 0.0
  %3678 = vmatprep.mubr.f32.mxu0 0.0
  %3679 = vmatmul.mubr.f32.gmra.mrb[0].mxu0 %v3403
  %v3680 = vpop.f32.mrb[0].mxu0
  %v3681 = vadd.f32 0.0, %v3680
  %v3682 = vpop.f32.mrb[0].mxu0
  %3683 = vdwg.mxu0
  %v3684 = vadd.f32 %v3492, %v3610
  %v3685 = vxor.u32 %v3684, 2147483648
  %v3686 = vmul.f32 %v3685, 1.442695
  %v3687 = vpow.pop %v3686
  %v3688 = vadd.f32 %v3687, 1.0
  %v3689 = vrcp.pop %v3688
  %v3690 = vmul.f32 1.0, %v3689
  %v3691 = vadd.f32 %v3493, %v3612
  %v3692 = vxor.u32 %v3691, 2147483648
  %v3693 = vmul.f32 %v3692, 1.442695
  %v3694 = vpow.pop %v3693
  %v3695 = vadd.f32 %v3694, 1.0
  %v3696 = vrcp.pop %v3695
  %v3697 = vmul.f32 1.0, %v3696
  %v3698 = vadd.f32 %v3681, %v2274
  %v3699 = vmul.f32 %v3690, %v3698
  %v3700 = vadd.f32 %v3494, %v3699
  %v3701 = vtanh.pop %v3700
  %v3702 = vsub.f32 1.0, %v3697
  %v3703 = vmul.f32 %v3702, %v3701
  %v3704 = vmul.f32 %v3697, %v3403
  %v3705 = vadd.f32 %v3703, %v3704
  %v3706 = vld [vmem:[%s10] sm:$0xff]
  %v3707 = vld [vmem:[%s10 + $0x8] sm:$0xff]
  %v3708 = vld [vmem:[%s10 + $0x10] sm:$0xff]
  %v3709 = vld [vmem:[%s10 + $0x18] sm:$0xff]
  %v3710 = vld [vmem:[%s10 + $0x20] sm:$0xff]
  %v3711 = vld [vmem:[%s10 + $0x28] sm:$0xff]
  %v3712 = vld [vmem:[%s10 + $0x30] sm:$0xff]
  %v3713 = vld [vmem:[%s10 + $0x38] sm:$0xff]
  %v3714 = vld [vmem:[%s10 + $0x40] sm:$0xff]
  %v3715 = vld [vmem:[%s10 + $0x48] sm:$0xff]
  %v3716 = vld [vmem:[%s10 + $0x50] sm:$0xff]
  %v3717 = vld [vmem:[%s10 + $0x58] sm:$0xff]
  %v3718 = vld [vmem:[%s10 + $0x60] sm:$0xff]
  %v3719 = vld [vmem:[%s10 + $0x68] sm:$0xff]
  %v3720 = vld [vmem:[%s10 + $0x70] sm:$0xff]
  %v3721 = vld [vmem:[%s10 + $0x78] sm:$0xff]
  %3722 = vmatprep.subr.mxu0 0.0
  %3723 = vmatpush1.msra.mxu0 %v3706
  %3724 = vmatprep.subr.mxu0 0.0
  %3725 = vmatpush1.msra.mxu0 %v3707
  %3726 = vmatprep.subr.mxu0 0.0
  %3727 = vmatpush1.msra.mxu0 %v3708
  %3728 = vmatprep.subr.mxu0 0.0
  %3729 = vmatpush1.msra.mxu0 %v3709
  %3730 = vmatprep.subr.mxu0 0.0
  %3731 = vmatpush1.msra.mxu0 %v3710
  %3732 = vmatprep.subr.mxu0 0.0
  %3733 = vmatpush1.msra.mxu0 %v3711
  %3734 = vmatprep.subr.mxu0 0.0
  %3735 = vmatpush1.msra.mxu0 %v3712
  %3736 = vmatprep.subr.mxu0 0.0
  %3737 = vmatpush1.msra.mxu0 %v3713
  %3738 = vmatprep.subr.mxu0 0.0
  %3739 = vmatpush1.msra.mxu0 %v3714
  %3740 = vmatprep.subr.mxu0 0.0
  %3741 = vmatpush1.msra.mxu0 %v3715
  %3742 = vmatprep.subr.mxu0 0.0
  %3743 = vmatpush1.msra.mxu0 %v3716
  %3744 = vmatprep.subr.mxu0 0.0
  %3745 = vmatpush1.msra.mxu0 %v3717
  %3746 = vmatprep.subr.mxu0 0.0
  %3747 = vmatpush1.msra.mxu0 %v3718
  %3748 = vmatprep.subr.mxu0 0.0
  %3749 = vmatpush1.msra.mxu0 %v3719
  %3750 = vmatprep.subr.mxu0 0.0
  %3751 = vmatpush1.msra.mxu0 %v3720
  %3752 = vmatprep.subr.mxu0 0.0
  %3753 = vmatpush1.msra.mxu0 %v3721
  %3754 = vmatprep.subr.mxu0 0.0
  %3755 = vmatpush1.msra.mxu0 0.0
  %3756 = vmatprep.subr.mxu0 0.0
  %3757 = vmatpush1.msra.mxu0 0.0
  %3758 = vmatprep.subr.mxu0 0.0
  %3759 = vmatpush1.msra.mxu0 0.0
  %3760 = vmatprep.subr.mxu0 0.0
  %3761 = vmatpush1.msra.mxu0 0.0
  %3762 = vmatprep.subr.mxu0 0.0
  %3763 = vmatpush1.msra.mxu0 0.0
  %3764 = vmatprep.subr.mxu0 0.0
  %3765 = vmatpush1.msra.mxu0 0.0
  %3766 = vmatprep.subr.mxu0 0.0
  %3767 = vmatpush1.msra.mxu0 0.0
  %3768 = vmatprep.subr.mxu0 0.0
  %3769 = vmatpush1.msra.mxu0 0.0
  %3770 = vmatprep.subr.mxu0 0.0
  %3771 = vmatpush1.msra.mxu0 0.0
  %3772 = vmatprep.subr.mxu0 0.0
  %3773 = vmatpush1.msra.mxu0 0.0
  %3774 = vmatprep.subr.mxu0 0.0
  %3775 = vmatpush1.msra.mxu0 0.0
  %3776 = vmatprep.subr.mxu0 0.0
  %3777 = vmatpush1.msra.mxu0 0.0
  %3778 = vmatprep.subr.mxu0 0.0
  %3779 = vmatpush1.msra.mxu0 0.0
  %3780 = vmatprep.subr.mxu0 0.0
  %3781 = vmatpush1.msra.mxu0 0.0
  %3782 = vmatprep.subr.mxu0 0.0
  %3783 = vmatpush1.msra.mxu0 0.0
  %3784 = vmatprep.subr.mxu0 0.0
  %3785 = vmatpush1.msra.mxu0 0.0
  %3786 = vmatprep.mubr.f32.mxu0 0.0
  %3787 = vmatmul.mubr.f32.gmra.mrb[0].mxu0 %v3705
  %v3788 = vpop.f32.mrb[0].mxu0
  %v3789 = vadd.f32 %v2281, %v3788
  %v3790 = vpop.f32.mrb[0].mxu0
  %3791 = vdwg.mxu0
  %s3792 = scalar_lea.vmem %s12, 32
  %3793 = vst [vmem:[%s3792] sm:$0xff] %v3789
  %v3794 = vld [vmem:[%s1299] sm:$0xff]
  %v3795 = vld [vmem:[%s1299 + $0x8] sm:$0xff]
  %v3796 = vld [vmem:[%s1299 + $0x10] sm:$0xff]
  %v3797 = vld [vmem:[%s7] sm:$0xff]
  %v3798 = vld [vmem:[%s7 + $0x8] sm:$0xff]
  %v3799 = vld [vmem:[%s7 + $0x10] sm:$0xff]
  %v3800 = vld [vmem:[%s7 + $0x18] sm:$0xff]
  %v3801 = vld [vmem:[%s7 + $0x20] sm:$0xff]
  %v3802 = vld [vmem:[%s7 + $0x28] sm:$0xff]
  %v3803 = vld [vmem:[%s7 + $0x30] sm:$0xff]
  %v3804 = vld [vmem:[%s7 + $0x38] sm:$0xff]
  %v3805 = vld [vmem:[%s7 + $0x40] sm:$0xff]
  %v3806 = vld [vmem:[%s7 + $0x48] sm:$0xff]
  %v3807 = vld [vmem:[%s7 + $0x50] sm:$0xff]
  %v3808 = vld [vmem:[%s7 + $0x58] sm:$0xff]
  %v3809 = vld [vmem:[%s7 + $0x60] sm:$0xff]
  %v3810 = vld [vmem:[%s7 + $0x68] sm:$0xff]
  %v3811 = vld [vmem:[%s7 + $0x70] sm:$0xff]
  %v3812 = vld [vmem:[%s7 + $0x78] sm:$0xff]
  %v3813 = vld [vmem:[%s7 + $0x80] sm:$0xff]
  %v3814 = vld [vmem:[%s7 + $0x88] sm:$0xff]
  %v3815 = vld [vmem:[%s7 + $0x90] sm:$0xff]
  %v3816 = vld [vmem:[%s7 + $0x98] sm:$0xff]
  %v3817 = vld [vmem:[%s7 + $0xa0] sm:$0xff]
  %v3818 = vld [vmem:[%s7 + $0xa8] sm:$0xff]
  %v3819 = vld [vmem:[%s7 + $0xb0] sm:$0xff]
  %v3820 = vld [vmem:[%s7 + $0xb8] sm:$0xff]
  %v3821 = vld [vmem:[%s7 + $0xc0] sm:$0xff]
  %v3822 = vld [vmem:[%s7 + $0xc8] sm:$0xff]
  %v3823 = vld [vmem:[%s7 + $0xd0] sm:$0xff]
  %v3824 = vld [vmem:[%s7 + $0xd8] sm:$0xff]
  %v3825 = vld [vmem:[%s7 + $0xe0] sm:$0xff]
  %v3826 = vld [vmem:[%s7 + $0xe8] sm:$0xff]
  %v3827 = vld [vmem:[%s7 + $0xf0] sm:$0xff]
  %v3828 = vld [vmem:[%s7 + $0xf8] sm:$0xff]
  %v3829 = vld [vmem:[%s7 + $0x100] sm:$0xff]
  %v3830 = vld [vmem:[%s7 + $0x108] sm:$0xff]
  %v3831 = vld [vmem:[%s7 + $0x110] sm:$0xff]
  %v3832 = vld [vmem:[%s7 + $0x118] sm:$0xff]
  %v3833 = vld [vmem:[%s7 + $0x120] sm:$0xff]
  %v3834 = vld [vmem:[%s7 + $0x128] sm:$0xff]
  %v3835 = vld [vmem:[%s7 + $0x130] sm:$0xff]
  %v3836 = vld [vmem:[%s7 + $0x138] sm:$0xff]
  %v3837 = vld [vmem:[%s7 + $0x140] sm:$0xff]
  %v3838 = vld [vmem:[%s7 + $0x148] sm:$0xff]
  %v3839 = vld [vmem:[%s7 + $0x150] sm:$0xff]
  %v3840 = vld [vmem:[%s7 + $0x158] sm:$0xff]
  %v3841 = vld [vmem:[%s7 + $0x160] sm:$0xff]
  %v3842 = vld [vmem:[%s7 + $0x168] sm:$0xff]
  %v3843 = vld [vmem:[%s7 + $0x170] sm:$0xff]
  %v3844 = vld [vmem:[%s7 + $0x178] sm:$0xff]
  %3845 = vmatprep.subr.mxu0 %v3798
  %3846 = vmatpush1.msra.mxu0 %v3797
  %3847 = vmatprep.subr.mxu0 %v3801
  %3848 = vmatpush1.msra.mxu0 %v3800
  %3849 = vmatprep.subr.mxu0 %v3804
  %3850 = vmatpush1.msra.mxu0 %v3803
  %3851 = vmatprep.subr.mxu0 %v3807
  %3852 = vmatpush1.msra.mxu0 %v3806
  %3853 = vmatprep.subr.mxu0 %v3810
  %3854 = vmatpush1.msra.mxu0 %v3809
  %3855 = vmatprep.subr.mxu0 %v3813
  %3856 = vmatpush1.msra.mxu0 %v3812
  %3857 = vmatprep.subr.mxu0 %v3816
  %3858 = vmatpush1.msra.mxu0 %v3815
  %3859 = vmatprep.subr.mxu0 %v3819
  %3860 = vmatpush1.msra.mxu0 %v3818
  %3861 = vmatprep.subr.mxu0 %v3822
  %3862 = vmatpush1.msra.mxu0 %v3821
  %3863 = vmatprep.subr.mxu0 %v3825
  %3864 = vmatpush1.msra.mxu0 %v3824
  %3865 = vmatprep.subr.mxu0 %v3828
  %3866 = vmatpush1.msra.mxu0 %v3827
  %3867 = vmatprep.subr.mxu0 %v3831
  %3868 = vmatpush1.msra.mxu0 %v3830
  %3869 = vmatprep.subr.mxu0 %v3834
  %3870 = vmatpush1.msra.mxu0 %v3833
  %3871 = vmatprep.subr.mxu0 %v3837
  %3872 = vmatpush1.msra.mxu0 %v3836
  %3873 = vmatprep.subr.mxu0 %v3840
  %3874 = vmatpush1.msra.mxu0 %v3839
  %3875 = vmatprep.subr.mxu0 %v3843
  %3876 = vmatpush1.msra.mxu0 %v3842
  %3877 = vmatprep.subr.mxu0 0.0
  %3878 = vmatpush1.msra.mxu0 0.0
  %3879 = vmatprep.subr.mxu0 0.0
  %3880 = vmatpush1.msra.mxu0 0.0
  %3881 = vmatprep.subr.mxu0 0.0
  %3882 = vmatpush1.msra.mxu0 0.0
  %3883 = vmatprep.subr.mxu0 0.0
  %3884 = vmatpush1.msra.mxu0 0.0
  %3885 = vmatprep.subr.mxu0 0.0
  %3886 = vmatpush1.msra.mxu0 0.0
  %3887 = vmatprep.subr.mxu0 0.0
  %3888 = vmatpush1.msra.mxu0 0.0
  %3889 = vmatprep.subr.mxu0 0.0
  %3890 = vmatpush1.msra.mxu0 0.0
  %3891 = vmatprep.subr.mxu0 0.0
  %3892 = vmatpush1.msra.mxu0 0.0
  %3893 = vmatprep.subr.mxu0 0.0
  %3894 = vmatpush1.msra.mxu0 0.0
  %3895 = vmatprep.subr.mxu0 0.0
  %3896 = vmatpush1.msra.mxu0 0.0
  %3897 = vmatprep.subr.mxu0 0.0
  %3898 = vmatpush1.msra.mxu0 0.0
  %3899 = vmatprep.subr.mxu0 0.0
  %3900 = vmatpush1.msra.mxu0 0.0
  %3901 = vmatprep.subr.mxu0 0.0
  %3902 = vmatpush1.msra.mxu0 0.0
  %3903 = vmatprep.subr.mxu0 0.0
  %3904 = vmatpush1.msra.mxu0 0.0
  %3905 = vmatprep.subr.mxu0 0.0
  %3906 = vmatpush1.msra.mxu0 0.0
  %3907 = vmatprep.subr.mxu0 0.0
  %3908 = vmatpush1.msra.mxu0 0.0
  %3909 = vmatprep.mubr.f32.mxu0 0.0
  %3910 = vmatmul.mubr.f32.gmra.mrb[0].mxu0 %v3705
  %v3911 = vpop.f32.mrb[0].mxu0
  %v3912 = vadd.f32 0.0, %v3911
  %v3913 = vpop.f32.mrb[0].mxu0
  %v3914 = vadd.f32 0.0, %v3913
  %3915 = vdwg.mxu0
  %3916 = vmatprep.subr.mxu0 0.0
  %3917 = vmatpush1.msra.mxu0 %v3799
  %3918 = vmatprep.subr.mxu0 0.0
  %3919 = vmatpush1.msra.mxu0 %v3802
  %3920 = vmatprep.subr.mxu0 0.0
  %3921 = vmatpush1.msra.mxu0 %v3805
  %3922 = vmatprep.subr.mxu0 0.0
  %3923 = vmatpush1.msra.mxu0 %v3808
  %3924 = vmatprep.subr.mxu0 0.0
  %3925 = vmatpush1.msra.mxu0 %v3811
  %3926 = vmatprep.subr.mxu0 0.0
  %3927 = vmatpush1.msra.mxu0 %v3814
  %3928 = vmatprep.subr.mxu0 0.0
  %3929 = vmatpush1.msra.mxu0 %v3817
  %3930 = vmatprep.subr.mxu0 0.0
  %3931 = vmatpush1.msra.mxu0 %v3820
  %3932 = vmatprep.subr.mxu0 0.0
  %3933 = vmatpush1.msra.mxu0 %v3823
  %3934 = vmatprep.subr.mxu0 0.0
  %3935 = vmatpush1.msra.mxu0 %v3826
  %3936 = vmatprep.subr.mxu0 0.0
  %3937 = vmatpush1.msra.mxu0 %v3829
  %3938 = vmatprep.subr.mxu0 0.0
  %3939 = vmatpush1.msra.mxu0 %v3832
  %3940 = vmatprep.subr.mxu0 0.0
  %3941 = vmatpush1.msra.mxu0 %v3835
  %3942 = vmatprep.subr.mxu0 0.0
  %3943 = vmatpush1.msra.mxu0 %v3838
  %3944 = vmatprep.subr.mxu0 0.0
  %3945 = vmatpush1.msra.mxu0 %v3841
  %3946 = vmatprep.subr.mxu0 0.0
  %3947 = vmatpush1.msra.mxu0 %v3844
  %3948 = vmatprep.subr.mxu0 0.0
  %3949 = vmatpush1.msra.mxu0 0.0
  %3950 = vmatprep.subr.mxu0 0.0
  %3951 = vmatpush1.msra.mxu0 0.0
  %3952 = vmatprep.subr.mxu0 0.0
  %3953 = vmatpush1.msra.mxu0 0.0
  %3954 = vmatprep.subr.mxu0 0.0
  %3955 = vmatpush1.msra.mxu0 0.0
  %3956 = vmatprep.subr.mxu0 0.0
  %3957 = vmatpush1.msra.mxu0 0.0
  %3958 = vmatprep.subr.mxu0 0.0
  %3959 = vmatpush1.msra.mxu0 0.0
  %3960 = vmatprep.subr.mxu0 0.0
  %3961 = vmatpush1.msra.mxu0 0.0
  %3962 = vmatprep.subr.mxu0 0.0
  %3963 = vmatpush1.msra.mxu0 0.0
  %3964 = vmatprep.subr.mxu0 0.0
  %3965 = vmatpush1.msra.mxu0 0.0
  %3966 = vmatprep.subr.mxu0 0.0
  %3967 = vmatpush1.msra.mxu0 0.0
  %3968 = vmatprep.subr.mxu0 0.0
  %3969 = vmatpush1.msra.mxu0 0.0
  %3970 = vmatprep.subr.mxu0 0.0
  %3971 = vmatpush1.msra.mxu0 0.0
  %3972 = vmatprep.subr.mxu0 0.0
  %3973 = vmatpush1.msra.mxu0 0.0
  %3974 = vmatprep.subr.mxu0 0.0
  %3975 = vmatpush1.msra.mxu0 0.0
  %3976 = vmatprep.subr.mxu0 0.0
  %3977 = vmatpush1.msra.mxu0 0.0
  %3978 = vmatprep.subr.mxu0 0.0
  %3979 = vmatpush1.msra.mxu0 0.0
  %3980 = vmatprep.mubr.f32.mxu0 0.0
  %3981 = vmatmul.mubr.f32.gmra.mrb[0].mxu0 %v3705
  %v3982 = vpop.f32.mrb[0].mxu0
  %v3983 = vadd.f32 0.0, %v3982
  %v3984 = vpop.f32.mrb[0].mxu0
  %3985 = vdwg.mxu0
  %v3986 = vadd.f32 %v3794, %v3912
  %v3987 = vxor.u32 %v3986, 2147483648
  %v3988 = vmul.f32 %v3987, 1.442695
  %v3989 = vpow.pop %v3988
  %v3990 = vadd.f32 %v3989, 1.0
  %v3991 = vrcp.pop %v3990
  %v3992 = vmul.f32 1.0, %v3991
  %v3993 = vadd.f32 %v3795, %v3914
  %v3994 = vxor.u32 %v3993, 2147483648
  %v3995 = vmul.f32 %v3994, 1.442695
  %v3996 = vpow.pop %v3995
  %v3997 = vadd.f32 %v3996, 1.0
  %v3998 = vrcp.pop %v3997
  %v3999 = vmul.f32 1.0, %v3998
  %v4000 = vadd.f32 %v3983, %v2274
  %v4001 = vmul.f32 %v3992, %v4000
  %v4002 = vadd.f32 %v3796, %v4001
  %v4003 = vtanh.pop %v4002
  %v4004 = vsub.f32 1.0, %v3999
  %v4005 = vmul.f32 %v4004, %v4003
  %v4006 = vmul.f32 %v3999, %v3705
  %v4007 = vadd.f32 %v4005, %v4006
  %v4008 = vld [vmem:[%s10] sm:$0xff]
  %v4009 = vld [vmem:[%s10 + $0x8] sm:$0xff]
  %v4010 = vld [vmem:[%s10 + $0x10] sm:$0xff]
  %v4011 = vld [vmem:[%s10 + $0x18] sm:$0xff]
  %v4012 = vld [vmem:[%s10 + $0x20] sm:$0xff]
  %v4013 = vld [vmem:[%s10 + $0x28] sm:$0xff]
  %v4014 = vld [vmem:[%s10 + $0x30] sm:$0xff]
  %v4015 = vld [vmem:[%s10 + $0x38] sm:$0xff]
  %v4016 = vld [vmem:[%s10 + $0x40] sm:$0xff]
  %v4017 = vld [vmem:[%s10 + $0x48] sm:$0xff]
  %v4018 = vld [vmem:[%s10 + $0x50] sm:$0xff]
  %v4019 = vld [vmem:[%s10 + $0x58] sm:$0xff]
  %v4020 = vld [vmem:[%s10 + $0x60] sm:$0xff]
  %v4021 = vld [vmem:[%s10 + $0x68] sm:$0xff]
  %v4022 = vld [vmem:[%s10 + $0x70] sm:$0xff]
  %v4023 = vld [vmem:[%s10 + $0x78] sm:$0xff]
  %4024 = vmatprep.subr.mxu0 0.0
  %4025 = vmatpush1.msra.mxu0 %v4008
  %4026 = vmatprep.subr.mxu0 0.0
  %4027 = vmatpush1.msra.mxu0 %v4009
  %4028 = vmatprep.subr.mxu0 0.0
  %4029 = vmatpush1.msra.mxu0 %v4010
  %4030 = vmatprep.subr.mxu0 0.0
  %4031 = vmatpush1.msra.mxu0 %v4011
  %4032 = vmatprep.subr.mxu0 0.0
  %4033 = vmatpush1.msra.mxu0 %v4012
  %4034 = vmatprep.subr.mxu0 0.0
  %4035 = vmatpush1.msra.mxu0 %v4013
  %4036 = vmatprep.subr.mxu0 0.0
  %4037 = vmatpush1.msra.mxu0 %v4014
  %4038 = vmatprep.subr.mxu0 0.0
  %4039 = vmatpush1.msra.mxu0 %v4015
  %4040 = vmatprep.subr.mxu0 0.0
  %4041 = vmatpush1.msra.mxu0 %v4016
  %4042 = vmatprep.subr.mxu0 0.0
  %4043 = vmatpush1.msra.mxu0 %v4017
  %4044 = vmatprep.subr.mxu0 0.0
  %4045 = vmatpush1.msra.mxu0 %v4018
  %4046 = vmatprep.subr.mxu0 0.0
  %4047 = vmatpush1.msra.mxu0 %v4019
  %4048 = vmatprep.subr.mxu0 0.0
  %4049 = vmatpush1.msra.mxu0 %v4020
  %4050 = vmatprep.subr.mxu0 0.0
  %4051 = vmatpush1.msra.mxu0 %v4021
  %4052 = vmatprep.subr.mxu0 0.0
  %4053 = vmatpush1.msra.mxu0 %v4022
  %4054 = vmatprep.subr.mxu0 0.0
  %4055 = vmatpush1.msra.mxu0 %v4023
  %4056 = vmatprep.subr.mxu0 0.0
  %4057 = vmatpush1.msra.mxu0 0.0
  %4058 = vmatprep.subr.mxu0 0.0
  %4059 = vmatpush1.msra.mxu0 0.0
  %4060 = vmatprep.subr.mxu0 0.0
  %4061 = vmatpush1.msra.mxu0 0.0
  %4062 = vmatprep.subr.mxu0 0.0
  %4063 = vmatpush1.msra.mxu0 0.0
  %4064 = vmatprep.subr.mxu0 0.0
  %4065 = vmatpush1.msra.mxu0 0.0
  %4066 = vmatprep.subr.mxu0 0.0
  %4067 = vmatpush1.msra.mxu0 0.0
  %4068 = vmatprep.subr.mxu0 0.0
  %4069 = vmatpush1.msra.mxu0 0.0
  %4070 = vmatprep.subr.mxu0 0.0
  %4071 = vmatpush1.msra.mxu0 0.0
  %4072 = vmatprep.subr.mxu0 0.0
  %4073 = vmatpush1.msra.mxu0 0.0
  %4074 = vmatprep.subr.mxu0 0.0
  %4075 = vmatpush1.msra.mxu0 0.0
  %4076 = vmatprep.subr.mxu0 0.0
  %4077 = vmatpush1.msra.mxu0 0.0
  %4078 = vmatprep.subr.mxu0 0.0
  %4079 = vmatpush1.msra.mxu0 0.0
  %4080 = vmatprep.subr.mxu0 0.0
  %4081 = vmatpush1.msra.mxu0 0.0
  %4082 = vmatprep.subr.mxu0 0.0
  %4083 = vmatpush1.msra.mxu0 0.0
  %4084 = vmatprep.subr.mxu0 0.0
  %4085 = vmatpush1.msra.mxu0 0.0
  %4086 = vmatprep.subr.mxu0 0.0
  %4087 = vmatpush1.msra.mxu0 0.0
  %4088 = vmatprep.mubr.f32.mxu0 0.0
  %4089 = vmatmul.mubr.f32.gmra.mrb[0].mxu0 %v4007
  %v4090 = vpop.f32.mrb[0].mxu0
  %v4091 = vadd.f32 %v2281, %v4090
  %v4092 = vpop.f32.mrb[0].mxu0
  %4093 = vdwg.mxu0
  %s4094 = scalar_lea.vmem %s12, 40
  %4095 = vst [vmem:[%s4094] sm:$0xff] %v4091
  %v4096 = vld [vmem:[%s1518] sm:$0xff]
  %v4097 = vld [vmem:[%s1518 + $0x8] sm:$0xff]
  %v4098 = vld [vmem:[%s1518 + $0x10] sm:$0xff]
  %v4099 = vld [vmem:[%s7] sm:$0xff]
  %v4100 = vld [vmem:[%s7 + $0x8] sm:$0xff]
  %v4101 = vld [vmem:[%s7 + $0x10] sm:$0xff]
  %v4102 = vld [vmem:[%s7 + $0x18] sm:$0xff]
  %v4103 = vld [vmem:[%s7 + $0x20] sm:$0xff]
  %v4104 = vld [vmem:[%s7 + $0x28] sm:$0xff]
  %v4105 = vld [vmem:[%s7 + $0x30] sm:$0xff]
  %v4106 = vld [vmem:[%s7 + $0x38] sm:$0xff]
  %v4107 = vld [vmem:[%s7 + $0x40] sm:$0xff]
  %v4108 = vld [vmem:[%s7 + $0x48] sm:$0xff]
  %v4109 = vld [vmem:[%s7 + $0x50] sm:$0xff]
  %v4110 = vld [vmem:[%s7 + $0x58] sm:$0xff]
  %v4111 = vld [vmem:[%s7 + $0x60] sm:$0xff]
  %v4112 = vld [vmem:[%s7 + $0x68] sm:$0xff]
  %v4113 = vld [vmem:[%s7 + $0x70] sm:$0xff]
  %v4114 = vld [vmem:[%s7 + $0x78] sm:$0xff]
  %v4115 = vld [vmem:[%s7 + $0x80] sm:$0xff]
  %v4116 = vld [vmem:[%s7 + $0x88] sm:$0xff]
  %v4117 = vld [vmem:[%s7 + $0x90] sm:$0xff]
  %v4118 = vld [vmem:[%s7 + $0x98] sm:$0xff]
  %v4119 = vld [vmem:[%s7 + $0xa0] sm:$0xff]
  %v4120 = vld [vmem:[%s7 + $0xa8] sm:$0xff]
  %v4121 = vld [vmem:[%s7 + $0xb0] sm:$0xff]
  %v4122 = vld [vmem:[%s7 + $0xb8] sm:$0xff]
  %v4123 = vld [vmem:[%s7 + $0xc0] sm:$0xff]
  %v4124 = vld [vmem:[%s7 + $0xc8] sm:$0xff]
  %v4125 = vld [vmem:[%s7 + $0xd0] sm:$0xff]
  %v4126 = vld [vmem:[%s7 + $0xd8] sm:$0xff]
  %v4127 = vld [vmem:[%s7 + $0xe0] sm:$0xff]
  %v4128 = vld [vmem:[%s7 + $0xe8] sm:$0xff]
  %v4129 = vld [vmem:[%s7 + $0xf0] sm:$0xff]
  %v4130 = vld [vmem:[%s7 + $0xf8] sm:$0xff]
  %v4131 = vld [vmem:[%s7 + $0x100] sm:$0xff]
  %v4132 = vld [vmem:[%s7 + $0x108] sm:$0xff]
  %v4133 = vld [vmem:[%s7 + $0x110] sm:$0xff]
  %v4134 = vld [vmem:[%s7 + $0x118] sm:$0xff]
  %v4135 = vld [vmem:[%s7 + $0x120] sm:$0xff]
  %v4136 = vld [vmem:[%s7 + $0x128] sm:$0xff]
  %v4137 = vld [vmem:[%s7 + $0x130] sm:$0xff]
  %v4138 = vld [vmem:[%s7 + $0x138] sm:$0xff]
  %v4139 = vld [vmem:[%s7 + $0x140] sm:$0xff]
  %v4140 = vld [vmem:[%s7 + $0x148] sm:$0xff]
  %v4141 = vld [vmem:[%s7 + $0x150] sm:$0xff]
  %v4142 = vld [vmem:[%s7 + $0x158] sm:$0xff]
  %v4143 = vld [vmem:[%s7 + $0x160] sm:$0xff]
  %v4144 = vld [vmem:[%s7 + $0x168] sm:$0xff]
  %v4145 = vld [vmem:[%s7 + $0x170] sm:$0xff]
  %v4146 = vld [vmem:[%s7 + $0x178] sm:$0xff]
  %4147 = vmatprep.subr.mxu0 %v4100
  %4148 = vmatpush1.msra.mxu0 %v4099
  %4149 = vmatprep.subr.mxu0 %v4103
  %4150 = vmatpush1.msra.mxu0 %v4102
  %4151 = vmatprep.subr.mxu0 %v4106
  %4152 = vmatpush1.msra.mxu0 %v4105
  %4153 = vmatprep.subr.mxu0 %v4109
  %4154 = vmatpush1.msra.mxu0 %v4108
  %4155 = vmatprep.subr.mxu0 %v4112
  %4156 = vmatpush1.msra.mxu0 %v4111
  %4157 = vmatprep.subr.mxu0 %v4115
  %4158 = vmatpush1.msra.mxu0 %v4114
  %4159 = vmatprep.subr.mxu0 %v4118
  %4160 = vmatpush1.msra.mxu0 %v4117
  %4161 = vmatprep.subr.mxu0 %v4121
  %4162 = vmatpush1.msra.mxu0 %v4120
  %4163 = vmatprep.subr.mxu0 %v4124
  %4164 = vmatpush1.msra.mxu0 %v4123
  %4165 = vmatprep.subr.mxu0 %v4127
  %4166 = vmatpush1.msra.mxu0 %v4126
  %4167 = vmatprep.subr.mxu0 %v4130
  %4168 = vmatpush1.msra.mxu0 %v4129
  %4169 = vmatprep.subr.mxu0 %v4133
  %4170 = vmatpush1.msra.mxu0 %v4132
  %4171 = vmatprep.subr.mxu0 %v4136
  %4172 = vmatpush1.msra.mxu0 %v4135
  %4173 = vmatprep.subr.mxu0 %v4139
  %4174 = vmatpush1.msra.mxu0 %v4138
  %4175 = vmatprep.subr.mxu0 %v4142
  %4176 = vmatpush1.msra.mxu0 %v4141
  %4177 = vmatprep.subr.mxu0 %v4145
  %4178 = vmatpush1.msra.mxu0 %v4144
  %4179 = vmatprep.subr.mxu0 0.0
  %4180 = vmatpush1.msra.mxu0 0.0
  %4181 = vmatprep.subr.mxu0 0.0
  %4182 = vmatpush1.msra.mxu0 0.0
  %4183 = vmatprep.subr.mxu0 0.0
  %4184 = vmatpush1.msra.mxu0 0.0
  %4185 = vmatprep.subr.mxu0 0.0
  %4186 = vmatpush1.msra.mxu0 0.0
  %4187 = vmatprep.subr.mxu0 0.0
  %4188 = vmatpush1.msra.mxu0 0.0
  %4189 = vmatprep.subr.mxu0 0.0
  %4190 = vmatpush1.msra.mxu0 0.0
  %4191 = vmatprep.subr.mxu0 0.0
  %4192 = vmatpush1.msra.mxu0 0.0
  %4193 = vmatprep.subr.mxu0 0.0
  %4194 = vmatpush1.msra.mxu0 0.0
  %4195 = vmatprep.subr.mxu0 0.0
  %4196 = vmatpush1.msra.mxu0 0.0
  %4197 = vmatprep.subr.mxu0 0.0
  %4198 = vmatpush1.msra.mxu0 0.0
  %4199 = vmatprep.subr.mxu0 0.0
  %4200 = vmatpush1.msra.mxu0 0.0
  %4201 = vmatprep.subr.mxu0 0.0
  %4202 = vmatpush1.msra.mxu0 0.0
  %4203 = vmatprep.subr.mxu0 0.0
  %4204 = vmatpush1.msra.mxu0 0.0
  %4205 = vmatprep.subr.mxu0 0.0
  %4206 = vmatpush1.msra.mxu0 0.0
  %4207 = vmatprep.subr.mxu0 0.0
  %4208 = vmatpush1.msra.mxu0 0.0
  %4209 = vmatprep.subr.mxu0 0.0
  %4210 = vmatpush1.msra.mxu0 0.0
  %4211 = vmatprep.mubr.f32.mxu0 0.0
  %4212 = vmatmul.mubr.f32.gmra.mrb[0].mxu0 %v4007
  %v4213 = vpop.f32.mrb[0].mxu0
  %v4214 = vadd.f32 0.0, %v4213
  %v4215 = vpop.f32.mrb[0].mxu0
  %v4216 = vadd.f32 0.0, %v4215
  %4217 = vdwg.mxu0
  %4218 = vmatprep.subr.mxu0 0.0
  %4219 = vmatpush1.msra.mxu0 %v4101
  %4220 = vmatprep.subr.mxu0 0.0
  %4221 = vmatpush1.msra.mxu0 %v4104
  %4222 = vmatprep.subr.mxu0 0.0
  %4223 = vmatpush1.msra.mxu0 %v4107
  %4224 = vmatprep.subr.mxu0 0.0
  %4225 = vmatpush1.msra.mxu0 %v4110
  %4226 = vmatprep.subr.mxu0 0.0
  %4227 = vmatpush1.msra.mxu0 %v4113
  %4228 = vmatprep.subr.mxu0 0.0
  %4229 = vmatpush1.msra.mxu0 %v4116
  %4230 = vmatprep.subr.mxu0 0.0
  %4231 = vmatpush1.msra.mxu0 %v4119
  %4232 = vmatprep.subr.mxu0 0.0
  %4233 = vmatpush1.msra.mxu0 %v4122
  %4234 = vmatprep.subr.mxu0 0.0
  %4235 = vmatpush1.msra.mxu0 %v4125
  %4236 = vmatprep.subr.mxu0 0.0
  %4237 = vmatpush1.msra.mxu0 %v4128
  %4238 = vmatprep.subr.mxu0 0.0
  %4239 = vmatpush1.msra.mxu0 %v4131
  %4240 = vmatprep.subr.mxu0 0.0
  %4241 = vmatpush1.msra.mxu0 %v4134
  %4242 = vmatprep.subr.mxu0 0.0
  %4243 = vmatpush1.msra.mxu0 %v4137
  %4244 = vmatprep.subr.mxu0 0.0
  %4245 = vmatpush1.msra.mxu0 %v4140
  %4246 = vmatprep.subr.mxu0 0.0
  %4247 = vmatpush1.msra.mxu0 %v4143
  %4248 = vmatprep.subr.mxu0 0.0
  %4249 = vmatpush1.msra.mxu0 %v4146
  %4250 = vmatprep.subr.mxu0 0.0
  %4251 = vmatpush1.msra.mxu0 0.0
  %4252 = vmatprep.subr.mxu0 0.0
  %4253 = vmatpush1.msra.mxu0 0.0
  %4254 = vmatprep.subr.mxu0 0.0
  %4255 = vmatpush1.msra.mxu0 0.0
  %4256 = vmatprep.subr.mxu0 0.0
  %4257 = vmatpush1.msra.mxu0 0.0
  %4258 = vmatprep.subr.mxu0 0.0
  %4259 = vmatpush1.msra.mxu0 0.0
  %4260 = vmatprep.subr.mxu0 0.0
  %4261 = vmatpush1.msra.mxu0 0.0
  %4262 = vmatprep.subr.mxu0 0.0
  %4263 = vmatpush1.msra.mxu0 0.0
  %4264 = vmatprep.subr.mxu0 0.0
  %4265 = vmatpush1.msra.mxu0 0.0
  %4266 = vmatprep.subr.mxu0 0.0
  %4267 = vmatpush1.msra.mxu0 0.0
  %4268 = vmatprep.subr.mxu0 0.0
  %4269 = vmatpush1.msra.mxu0 0.0
  %4270 = vmatprep.subr.mxu0 0.0
  %4271 = vmatpush1.msra.mxu0 0.0
  %4272 = vmatprep.subr.mxu0 0.0
  %4273 = vmatpush1.msra.mxu0 0.0
  %4274 = vmatprep.subr.mxu0 0.0
  %4275 = vmatpush1.msra.mxu0 0.0
  %4276 = vmatprep.subr.mxu0 0.0
  %4277 = vmatpush1.msra.mxu0 0.0
  %4278 = vmatprep.subr.mxu0 0.0
  %4279 = vmatpush1.msra.mxu0 0.0
  %4280 = vmatprep.subr.mxu0 0.0
  %4281 = vmatpush1.msra.mxu0 0.0
  %4282 = vmatprep.mubr.f32.mxu0 0.0
  %4283 = vmatmul.mubr.f32.gmra.mrb[0].mxu0 %v4007
  %v4284 = vpop.f32.mrb[0].mxu0
  %v4285 = vadd.f32 0.0, %v4284
  %v4286 = vpop.f32.mrb[0].mxu0
  %4287 = vdwg.mxu0
  %v4288 = vadd.f32 %v4096, %v4214
  %v4289 = vxor.u32 %v4288, 2147483648
  %v4290 = vmul.f32 %v4289, 1.442695
  %v4291 = vpow.pop %v4290
  %v4292 = vadd.f32 %v4291, 1.0
  %v4293 = vrcp.pop %v4292
  %v4294 = vmul.f32 1.0, %v4293
  %v4295 = vadd.f32 %v4097, %v4216
  %v4296 = vxor.u32 %v4295, 2147483648
  %v4297 = vmul.f32 %v4296, 1.442695
  %v4298 = vpow.pop %v4297
  %v4299 = vadd.f32 %v4298, 1.0
  %v4300 = vrcp.pop %v4299
  %v4301 = vmul.f32 1.0, %v4300
  %v4302 = vadd.f32 %v4285, %v2274
  %v4303 = vmul.f32 %v4294, %v4302
  %v4304 = vadd.f32 %v4098, %v4303
  %v4305 = vtanh.pop %v4304
  %v4306 = vsub.f32 1.0, %v4301
  %v4307 = vmul.f32 %v4306, %v4305
  %v4308 = vmul.f32 %v4301, %v4007
  %v4309 = vadd.f32 %v4307, %v4308
  %v4310 = vld [vmem:[%s10] sm:$0xff]
  %v4311 = vld [vmem:[%s10 + $0x8] sm:$0xff]
  %v4312 = vld [vmem:[%s10 + $0x10] sm:$0xff]
  %v4313 = vld [vmem:[%s10 + $0x18] sm:$0xff]
  %v4314 = vld [vmem:[%s10 + $0x20] sm:$0xff]
  %v4315 = vld [vmem:[%s10 + $0x28] sm:$0xff]
  %v4316 = vld [vmem:[%s10 + $0x30] sm:$0xff]
  %v4317 = vld [vmem:[%s10 + $0x38] sm:$0xff]
  %v4318 = vld [vmem:[%s10 + $0x40] sm:$0xff]
  %v4319 = vld [vmem:[%s10 + $0x48] sm:$0xff]
  %v4320 = vld [vmem:[%s10 + $0x50] sm:$0xff]
  %v4321 = vld [vmem:[%s10 + $0x58] sm:$0xff]
  %v4322 = vld [vmem:[%s10 + $0x60] sm:$0xff]
  %v4323 = vld [vmem:[%s10 + $0x68] sm:$0xff]
  %v4324 = vld [vmem:[%s10 + $0x70] sm:$0xff]
  %v4325 = vld [vmem:[%s10 + $0x78] sm:$0xff]
  %4326 = vmatprep.subr.mxu0 0.0
  %4327 = vmatpush1.msra.mxu0 %v4310
  %4328 = vmatprep.subr.mxu0 0.0
  %4329 = vmatpush1.msra.mxu0 %v4311
  %4330 = vmatprep.subr.mxu0 0.0
  %4331 = vmatpush1.msra.mxu0 %v4312
  %4332 = vmatprep.subr.mxu0 0.0
  %4333 = vmatpush1.msra.mxu0 %v4313
  %4334 = vmatprep.subr.mxu0 0.0
  %4335 = vmatpush1.msra.mxu0 %v4314
  %4336 = vmatprep.subr.mxu0 0.0
  %4337 = vmatpush1.msra.mxu0 %v4315
  %4338 = vmatprep.subr.mxu0 0.0
  %4339 = vmatpush1.msra.mxu0 %v4316
  %4340 = vmatprep.subr.mxu0 0.0
  %4341 = vmatpush1.msra.mxu0 %v4317
  %4342 = vmatprep.subr.mxu0 0.0
  %4343 = vmatpush1.msra.mxu0 %v4318
  %4344 = vmatprep.subr.mxu0 0.0
  %4345 = vmatpush1.msra.mxu0 %v4319
  %4346 = vmatprep.subr.mxu0 0.0
  %4347 = vmatpush1.msra.mxu0 %v4320
  %4348 = vmatprep.subr.mxu0 0.0
  %4349 = vmatpush1.msra.mxu0 %v4321
  %4350 = vmatprep.subr.mxu0 0.0
  %4351 = vmatpush1.msra.mxu0 %v4322
  %4352 = vmatprep.subr.mxu0 0.0
  %4353 = vmatpush1.msra.mxu0 %v4323
  %4354 = vmatprep.subr.mxu0 0.0
  %4355 = vmatpush1.msra.mxu0 %v4324
  %4356 = vmatprep.subr.mxu0 0.0
  %4357 = vmatpush1.msra.mxu0 %v4325
  %4358 = vmatprep.subr.mxu0 0.0
  %4359 = vmatpush1.msra.mxu0 0.0
  %4360 = vmatprep.subr.mxu0 0.0
  %4361 = vmatpush1.msra.mxu0 0.0
  %4362 = vmatprep.subr.mxu0 0.0
  %4363 = vmatpush1.msra.mxu0 0.0
  %4364 = vmatprep.subr.mxu0 0.0
  %4365 = vmatpush1.msra.mxu0 0.0
  %4366 = vmatprep.subr.mxu0 0.0
  %4367 = vmatpush1.msra.mxu0 0.0
  %4368 = vmatprep.subr.mxu0 0.0
  %4369 = vmatpush1.msra.mxu0 0.0
  %4370 = vmatprep.subr.mxu0 0.0
  %4371 = vmatpush1.msra.mxu0 0.0
  %4372 = vmatprep.subr.mxu0 0.0
  %4373 = vmatpush1.msra.mxu0 0.0
  %4374 = vmatprep.subr.mxu0 0.0
  %4375 = vmatpush1.msra.mxu0 0.0
  %4376 = vmatprep.subr.mxu0 0.0
  %4377 = vmatpush1.msra.mxu0 0.0
  %4378 = vmatprep.subr.mxu0 0.0
  %4379 = vmatpush1.msra.mxu0 0.0
  %4380 = vmatprep.subr.mxu0 0.0
  %4381 = vmatpush1.msra.mxu0 0.0
  %4382 = vmatprep.subr.mxu0 0.0
  %4383 = vmatpush1.msra.mxu0 0.0
  %4384 = vmatprep.subr.mxu0 0.0
  %4385 = vmatpush1.msra.mxu0 0.0
  %4386 = vmatprep.subr.mxu0 0.0
  %4387 = vmatpush1.msra.mxu0 0.0
  %4388 = vmatprep.subr.mxu0 0.0
  %4389 = vmatpush1.msra.mxu0 0.0
  %4390 = vmatprep.mubr.f32.mxu0 0.0
  %4391 = vmatmul.mubr.f32.gmra.mrb[0].mxu0 %v4309
  %v4392 = vpop.f32.mrb[0].mxu0
  %v4393 = vadd.f32 %v2281, %v4392
  %v4394 = vpop.f32.mrb[0].mxu0
  %4395 = vdwg.mxu0
  %s4396 = scalar_lea.vmem %s12, 48
  %4397 = vst [vmem:[%s4396] sm:$0xff] %v4393
  %v4398 = vld [vmem:[%s1737] sm:$0xff]
  %v4399 = vld [vmem:[%s1737 + $0x8] sm:$0xff]
  %v4400 = vld [vmem:[%s1737 + $0x10] sm:$0xff]
  %v4401 = vld [vmem:[%s7] sm:$0xff]
  %v4402 = vld [vmem:[%s7 + $0x8] sm:$0xff]
  %v4403 = vld [vmem:[%s7 + $0x10] sm:$0xff]
  %v4404 = vld [vmem:[%s7 + $0x18] sm:$0xff]
  %v4405 = vld [vmem:[%s7 + $0x20] sm:$0xff]
  %v4406 = vld [vmem:[%s7 + $0x28] sm:$0xff]
  %v4407 = vld [vmem:[%s7 + $0x30] sm:$0xff]
  %v4408 = vld [vmem:[%s7 + $0x38] sm:$0xff]
  %v4409 = vld [vmem:[%s7 + $0x40] sm:$0xff]
  %v4410 = vld [vmem:[%s7 + $0x48] sm:$0xff]
  %v4411 = vld [vmem:[%s7 + $0x50] sm:$0xff]
  %v4412 = vld [vmem:[%s7 + $0x58] sm:$0xff]
  %v4413 = vld [vmem:[%s7 + $0x60] sm:$0xff]
  %v4414 = vld [vmem:[%s7 + $0x68] sm:$0xff]
  %v4415 = vld [vmem:[%s7 + $0x70] sm:$0xff]
  %v4416 = vld [vmem:[%s7 + $0x78] sm:$0xff]
  %v4417 = vld [vmem:[%s7 + $0x80] sm:$0xff]
  %v4418 = vld [vmem:[%s7 + $0x88] sm:$0xff]
  %v4419 = vld [vmem:[%s7 + $0x90] sm:$0xff]
  %v4420 = vld [vmem:[%s7 + $0x98] sm:$0xff]
  %v4421 = vld [vmem:[%s7 + $0xa0] sm:$0xff]
  %v4422 = vld [vmem:[%s7 + $0xa8] sm:$0xff]
  %v4423 = vld [vmem:[%s7 + $0xb0] sm:$0xff]
  %v4424 = vld [vmem:[%s7 + $0xb8] sm:$0xff]
  %v4425 = vld [vmem:[%s7 + $0xc0] sm:$0xff]
  %v4426 = vld [vmem:[%s7 + $0xc8] sm:$0xff]
  %v4427 = vld [vmem:[%s7 + $0xd0] sm:$0xff]
  %v4428 = vld [vmem:[%s7 + $0xd8] sm:$0xff]
  %v4429 = vld [vmem:[%s7 + $0xe0] sm:$0xff]
  %v4430 = vld [vmem:[%s7 + $0xe8] sm:$0xff]
  %v4431 = vld [vmem:[%s7 + $0xf0] sm:$0xff]
  %v4432 = vld [vmem:[%s7 + $0xf8] sm:$0xff]
  %v4433 = vld [vmem:[%s7 + $0x100] sm:$0xff]
  %v4434 = vld [vmem:[%s7 + $0x108] sm:$0xff]
  %v4435 = vld [vmem:[%s7 + $0x110] sm:$0xff]
  %v4436 = vld [vmem:[%s7 + $0x118] sm:$0xff]
  %v4437 = vld [vmem:[%s7 + $0x120] sm:$0xff]
  %v4438 = vld [vmem:[%s7 + $0x128] sm:$0xff]
  %v4439 = vld [vmem:[%s7 + $0x130] sm:$0xff]
  %v4440 = vld [vmem:[%s7 + $0x138] sm:$0xff]
  %v4441 = vld [vmem:[%s7 + $0x140] sm:$0xff]
  %v4442 = vld [vmem:[%s7 + $0x148] sm:$0xff]
  %v4443 = vld [vmem:[%s7 + $0x150] sm:$0xff]
  %v4444 = vld [vmem:[%s7 + $0x158] sm:$0xff]
  %v4445 = vld [vmem:[%s7 + $0x160] sm:$0xff]
  %v4446 = vld [vmem:[%s7 + $0x168] sm:$0xff]
  %v4447 = vld [vmem:[%s7 + $0x170] sm:$0xff]
  %v4448 = vld [vmem:[%s7 + $0x178] sm:$0xff]
  %4449 = vmatprep.subr.mxu0 %v4402
  %4450 = vmatpush1.msra.mxu0 %v4401
  %4451 = vmatprep.subr.mxu0 %v4405
  %4452 = vmatpush1.msra.mxu0 %v4404
  %4453 = vmatprep.subr.mxu0 %v4408
  %4454 = vmatpush1.msra.mxu0 %v4407
  %4455 = vmatprep.subr.mxu0 %v4411
  %4456 = vmatpush1.msra.mxu0 %v4410
  %4457 = vmatprep.subr.mxu0 %v4414
  %4458 = vmatpush1.msra.mxu0 %v4413
  %4459 = vmatprep.subr.mxu0 %v4417
  %4460 = vmatpush1.msra.mxu0 %v4416
  %4461 = vmatprep.subr.mxu0 %v4420
  %4462 = vmatpush1.msra.mxu0 %v4419
  %4463 = vmatprep.subr.mxu0 %v4423
  %4464 = vmatpush1.msra.mxu0 %v4422
  %4465 = vmatprep.subr.mxu0 %v4426
  %4466 = vmatpush1.msra.mxu0 %v4425
  %4467 = vmatprep.subr.mxu0 %v4429
  %4468 = vmatpush1.msra.mxu0 %v4428
  %4469 = vmatprep.subr.mxu0 %v4432
  %4470 = vmatpush1.msra.mxu0 %v4431
  %4471 = vmatprep.subr.mxu0 %v4435
  %4472 = vmatpush1.msra.mxu0 %v4434
  %4473 = vmatprep.subr.mxu0 %v4438
  %4474 = vmatpush1.msra.mxu0 %v4437
  %4475 = vmatprep.subr.mxu0 %v4441
  %4476 = vmatpush1.msra.mxu0 %v4440
  %4477 = vmatprep.subr.mxu0 %v4444
  %4478 = vmatpush1.msra.mxu0 %v4443
  %4479 = vmatprep.subr.mxu0 %v4447
  %4480 = vmatpush1.msra.mxu0 %v4446
  %4481 = vmatprep.subr.mxu0 0.0
  %4482 = vmatpush1.msra.mxu0 0.0
  %4483 = vmatprep.subr.mxu0 0.0
  %4484 = vmatpush1.msra.mxu0 0.0
  %4485 = vmatprep.subr.mxu0 0.0
  %4486 = vmatpush1.msra.mxu0 0.0
  %4487 = vmatprep.subr.mxu0 0.0
  %4488 = vmatpush1.msra.mxu0 0.0
  %4489 = vmatprep.subr.mxu0 0.0
  %4490 = vmatpush1.msra.mxu0 0.0
  %4491 = vmatprep.subr.mxu0 0.0
  %4492 = vmatpush1.msra.mxu0 0.0
  %4493 = vmatprep.subr.mxu0 0.0
  %4494 = vmatpush1.msra.mxu0 0.0
  %4495 = vmatprep.subr.mxu0 0.0
  %4496 = vmatpush1.msra.mxu0 0.0
  %4497 = vmatprep.subr.mxu0 0.0
  %4498 = vmatpush1.msra.mxu0 0.0
  %4499 = vmatprep.subr.mxu0 0.0
  %4500 = vmatpush1.msra.mxu0 0.0
  %4501 = vmatprep.subr.mxu0 0.0
  %4502 = vmatpush1.msra.mxu0 0.0
  %4503 = vmatprep.subr.mxu0 0.0
  %4504 = vmatpush1.msra.mxu0 0.0
  %4505 = vmatprep.subr.mxu0 0.0
  %4506 = vmatpush1.msra.mxu0 0.0
  %4507 = vmatprep.subr.mxu0 0.0
  %4508 = vmatpush1.msra.mxu0 0.0
  %4509 = vmatprep.subr.mxu0 0.0
  %4510 = vmatpush1.msra.mxu0 0.0
  %4511 = vmatprep.subr.mxu0 0.0
  %4512 = vmatpush1.msra.mxu0 0.0
  %4513 = vmatprep.mubr.f32.mxu0 0.0
  %4514 = vmatmul.mubr.f32.gmra.mrb[0].mxu0 %v4309
  %v4515 = vpop.f32.mrb[0].mxu0
  %v4516 = vadd.f32 0.0, %v4515
  %v4517 = vpop.f32.mrb[0].mxu0
  %v4518 = vadd.f32 0.0, %v4517
  %4519 = vdwg.mxu0
  %4520 = vmatprep.subr.mxu0 0.0
  %4521 = vmatpush1.msra.mxu0 %v4403
  %4522 = vmatprep.subr.mxu0 0.0
  %4523 = vmatpush1.msra.mxu0 %v4406
  %4524 = vmatprep.subr.mxu0 0.0
  %4525 = vmatpush1.msra.mxu0 %v4409
  %4526 = vmatprep.subr.mxu0 0.0
  %4527 = vmatpush1.msra.mxu0 %v4412
  %4528 = vmatprep.subr.mxu0 0.0
  %4529 = vmatpush1.msra.mxu0 %v4415
  %4530 = vmatprep.subr.mxu0 0.0
  %4531 = vmatpush1.msra.mxu0 %v4418
  %4532 = vmatprep.subr.mxu0 0.0
  %4533 = vmatpush1.msra.mxu0 %v4421
  %4534 = vmatprep.subr.mxu0 0.0
  %4535 = vmatpush1.msra.mxu0 %v4424
  %4536 = vmatprep.subr.mxu0 0.0
  %4537 = vmatpush1.msra.mxu0 %v4427
  %4538 = vmatprep.subr.mxu0 0.0
  %4539 = vmatpush1.msra.mxu0 %v4430
  %4540 = vmatprep.subr.mxu0 0.0
  %4541 = vmatpush1.msra.mxu0 %v4433
  %4542 = vmatprep.subr.mxu0 0.0
  %4543 = vmatpush1.msra.mxu0 %v4436
  %4544 = vmatprep.subr.mxu0 0.0
  %4545 = vmatpush1.msra.mxu0 %v4439
  %4546 = vmatprep.subr.mxu0 0.0
  %4547 = vmatpush1.msra.mxu0 %v4442
  %4548 = vmatprep.subr.mxu0 0.0
  %4549 = vmatpush1.msra.mxu0 %v4445
  %4550 = vmatprep.subr.mxu0 0.0
  %4551 = vmatpush1.msra.mxu0 %v4448
  %4552 = vmatprep.subr.mxu0 0.0
  %4553 = vmatpush1.msra.mxu0 0.0
  %4554 = vmatprep.subr.mxu0 0.0
  %4555 = vmatpush1.msra.mxu0 0.0
  %4556 = vmatprep.subr.mxu0 0.0
  %4557 = vmatpush1.msra.mxu0 0.0
  %4558 = vmatprep.subr.mxu0 0.0
  %4559 = vmatpush1.msra.mxu0 0.0
  %4560 = vmatprep.subr.mxu0 0.0
  %4561 = vmatpush1.msra.mxu0 0.0
  %4562 = vmatprep.subr.mxu0 0.0
  %4563 = vmatpush1.msra.mxu0 0.0
  %4564 = vmatprep.subr.mxu0 0.0
  %4565 = vmatpush1.msra.mxu0 0.0
  %4566 = vmatprep.subr.mxu0 0.0
  %4567 = vmatpush1.msra.mxu0 0.0
  %4568 = vmatprep.subr.mxu0 0.0
  %4569 = vmatpush1.msra.mxu0 0.0
  %4570 = vmatprep.subr.mxu0 0.0
  %4571 = vmatpush1.msra.mxu0 0.0
  %4572 = vmatprep.subr.mxu0 0.0
  %4573 = vmatpush1.msra.mxu0 0.0
  %4574 = vmatprep.subr.mxu0 0.0
  %4575 = vmatpush1.msra.mxu0 0.0
  %4576 = vmatprep.subr.mxu0 0.0
  %4577 = vmatpush1.msra.mxu0 0.0
  %4578 = vmatprep.subr.mxu0 0.0
  %4579 = vmatpush1.msra.mxu0 0.0
  %4580 = vmatprep.subr.mxu0 0.0
  %4581 = vmatpush1.msra.mxu0 0.0
  %4582 = vmatprep.subr.mxu0 0.0
  %4583 = vmatpush1.msra.mxu0 0.0
  %4584 = vmatprep.mubr.f32.mxu0 0.0
  %4585 = vmatmul.mubr.f32.gmra.mrb[0].mxu0 %v4309
  %v4586 = vpop.f32.mrb[0].mxu0
  %v4587 = vadd.f32 0.0, %v4586
  %v4588 = vpop.f32.mrb[0].mxu0
  %4589 = vdwg.mxu0
  %v4590 = vadd.f32 %v4398, %v4516
  %v4591 = vxor.u32 %v4590, 2147483648
  %v4592 = vmul.f32 %v4591, 1.442695
  %v4593 = vpow.pop %v4592
  %v4594 = vadd.f32 %v4593, 1.0
  %v4595 = vrcp.pop %v4594
  %v4596 = vmul.f32 1.0, %v4595
  %v4597 = vadd.f32 %v4399, %v4518
  %v4598 = vxor.u32 %v4597, 2147483648
  %v4599 = vmul.f32 %v4598, 1.442695
  %v4600 = vpow.pop %v4599
  %v4601 = vadd.f32 %v4600, 1.0
  %v4602 = vrcp.pop %v4601
  %v4603 = vmul.f32 1.0, %v4602
  %v4604 = vadd.f32 %v4587, %v2274
  %v4605 = vmul.f32 %v4596, %v4604
  %v4606 = vadd.f32 %v4400, %v4605
  %v4607 = vtanh.pop %v4606
  %v4608 = vsub.f32 1.0, %v4603
  %v4609 = vmul.f32 %v4608, %v4607
  %v4610 = vmul.f32 %v4603, %v4309
  %v4611 = vadd.f32 %v4609, %v4610
  %v4612 = vld [vmem:[%s10] sm:$0xff]
  %v4613 = vld [vmem:[%s10 + $0x8] sm:$0xff]
  %v4614 = vld [vmem:[%s10 + $0x10] sm:$0xff]
  %v4615 = vld [vmem:[%s10 + $0x18] sm:$0xff]
  %v4616 = vld [vmem:[%s10 + $0x20] sm:$0xff]
  %v4617 = vld [vmem:[%s10 + $0x28] sm:$0xff]
  %v4618 = vld [vmem:[%s10 + $0x30] sm:$0xff]
  %v4619 = vld [vmem:[%s10 + $0x38] sm:$0xff]
  %v4620 = vld [vmem:[%s10 + $0x40] sm:$0xff]
  %v4621 = vld [vmem:[%s10 + $0x48] sm:$0xff]
  %v4622 = vld [vmem:[%s10 + $0x50] sm:$0xff]
  %v4623 = vld [vmem:[%s10 + $0x58] sm:$0xff]
  %v4624 = vld [vmem:[%s10 + $0x60] sm:$0xff]
  %v4625 = vld [vmem:[%s10 + $0x68] sm:$0xff]
  %v4626 = vld [vmem:[%s10 + $0x70] sm:$0xff]
  %v4627 = vld [vmem:[%s10 + $0x78] sm:$0xff]
  %4628 = vmatprep.subr.mxu0 0.0
  %4629 = vmatpush1.msra.mxu0 %v4612
  %4630 = vmatprep.subr.mxu0 0.0
  %4631 = vmatpush1.msra.mxu0 %v4613
  %4632 = vmatprep.subr.mxu0 0.0
  %4633 = vmatpush1.msra.mxu0 %v4614
  %4634 = vmatprep.subr.mxu0 0.0
  %4635 = vmatpush1.msra.mxu0 %v4615
  %4636 = vmatprep.subr.mxu0 0.0
  %4637 = vmatpush1.msra.mxu0 %v4616
  %4638 = vmatprep.subr.mxu0 0.0
  %4639 = vmatpush1.msra.mxu0 %v4617
  %4640 = vmatprep.subr.mxu0 0.0
  %4641 = vmatpush1.msra.mxu0 %v4618
  %4642 = vmatprep.subr.mxu0 0.0
  %4643 = vmatpush1.msra.mxu0 %v4619
  %4644 = vmatprep.subr.mxu0 0.0
  %4645 = vmatpush1.msra.mxu0 %v4620
  %4646 = vmatprep.subr.mxu0 0.0
  %4647 = vmatpush1.msra.mxu0 %v4621
  %4648 = vmatprep.subr.mxu0 0.0
  %4649 = vmatpush1.msra.mxu0 %v4622
  %4650 = vmatprep.subr.mxu0 0.0
  %4651 = vmatpush1.msra.mxu0 %v4623
  %4652 = vmatprep.subr.mxu0 0.0
  %4653 = vmatpush1.msra.mxu0 %v4624
  %4654 = vmatprep.subr.mxu0 0.0
  %4655 = vmatpush1.msra.mxu0 %v4625
  %4656 = vmatprep.subr.mxu0 0.0
  %4657 = vmatpush1.msra.mxu0 %v4626
  %4658 = vmatprep.subr.mxu0 0.0
  %4659 = vmatpush1.msra.mxu0 %v4627
  %4660 = vmatprep.subr.mxu0 0.0
  %4661 = vmatpush1.msra.mxu0 0.0
  %4662 = vmatprep.subr.mxu0 0.0
  %4663 = vmatpush1.msra.mxu0 0.0
  %4664 = vmatprep.subr.mxu0 0.0
  %4665 = vmatpush1.msra.mxu0 0.0
  %4666 = vmatprep.subr.mxu0 0.0
  %4667 = vmatpush1.msra.mxu0 0.0
  %4668 = vmatprep.subr.mxu0 0.0
  %4669 = vmatpush1.msra.mxu0 0.0
  %4670 = vmatprep.subr.mxu0 0.0
  %4671 = vmatpush1.msra.mxu0 0.0
  %4672 = vmatprep.subr.mxu0 0.0
  %4673 = vmatpush1.msra.mxu0 0.0
  %4674 = vmatprep.subr.mxu0 0.0
  %4675 = vmatpush1.msra.mxu0 0.0
  %4676 = vmatprep.subr.mxu0 0.0
  %4677 = vmatpush1.msra.mxu0 0.0
  %4678 = vmatprep.subr.mxu0 0.0
  %4679 = vmatpush1.msra.mxu0 0.0
  %4680 = vmatprep.subr.mxu0 0.0
  %4681 = vmatpush1.msra.mxu0 0.0
  %4682 = vmatprep.subr.mxu0 0.0
  %4683 = vmatpush1.msra.mxu0 0.0
  %4684 = vmatprep.subr.mxu0 0.0
  %4685 = vmatpush1.msra.mxu0 0.0
  %4686 = vmatprep.subr.mxu0 0.0
  %4687 = vmatpush1.msra.mxu0 0.0
  %4688 = vmatprep.subr.mxu0 0.0
  %4689 = vmatpush1.msra.mxu0 0.0
  %4690 = vmatprep.subr.mxu0 0.0
  %4691 = vmatpush1.msra.mxu0 0.0
  %4692 = vmatprep.mubr.f32.mxu0 0.0
  %4693 = vmatmul.mubr.f32.gmra.mrb[0].mxu0 %v4611
  %v4694 = vpop.f32.mrb[0].mxu0
  %v4695 = vadd.f32 %v2281, %v4694
  %v4696 = vpop.f32.mrb[0].mxu0
  %4697 = vdwg.mxu0
  %s4698 = scalar_lea.vmem %s12, 56
  %4699 = vst [vmem:[%s4698] sm:$0xff] %v4695
  // Predicated region
  $region50: #{decoder_rnn_forward.1} parent=0 // pred_check
    _
  $region51: #{decoder_rnn_forward.1} parent=0 // pred_check_branch
    %4701 = sbr.rel (0) target = $region53
  $region52: #{decoder_rnn_forward.1} parent=0 // pred_region
    _
  $region53: #{decoder_rnn_forward.1} parent=0 // pred_fallthru
    _
  // Predicated region
  $region54: #{decoder_rnn_forward.1} parent=0 // pred_check
    _
  $region55: #{decoder_rnn_forward.1} parent=0 // pred_check_branch
    %4703 = sbr.rel (0) target = $region57
  $region56: #{decoder_rnn_forward.1} parent=0 // pred_region
    _
  $region57: #{decoder_rnn_forward.1} parent=0 // pred_fallthru
    _

</llo_original>
